<compile_context>
chip_gen: v7x
topology: tpu7x:2x2x1
jax: 0.10.0
libtpu: 0.0.40
codegen_flags: <defaults>
</compile_context>

<pallas_src>
import jax
import jax.numpy as jnp
import numpy as np
from jax import lax
from jax.experimental import pallas as pl
from jax.experimental.pallas import tpu as pltpu


# ----------------------------------------------------------------------------- params
def _xavier_uniform(key, fan_in, fan_out, gain):
    limit = gain * (6.0 / (fan_in + fan_out)) ** 0.5
    # stored as [D_in, D_out] (transposed vs. torch nn.Linear) so y = x @ W + b
    return jax.random.uniform(key, (fan_in, fan_out), jnp.float32, -limit, limit)


def _bias_default(key, fan_in, fan_out):
    # torch nn.Linear default bias init: U(-1/sqrt(fan_in), 1/sqrt(fan_in))
    bound = 1.0 / (fan_in ** 0.5)
    return jax.random.uniform(key, (1, fan_out), jnp.float32, -bound, bound)


# ----------------------------------------------------------------------------- kernel
def ode_rk4_kernel(x_ref, w_ref, b_ref, out_ref):
    """RK4 (torchdiffeq 'rk4' = 3/8 rule) trajectory, fully resident in VMEM.

    Block shapes: x (TB, 128), W (128, 128), b (1, 128), out (T, TB, 128).
    """
    T = out_ref.shape[0]
    dt = 1.0 / max(T - 1, 1)          # guard num_frames == 1 (loop is empty then)

    w = w_ref[...]
    # Hoist the bias broadcast out of the loop: JAX does not CSE
    # broadcast_in_dim, so inlining would emit one broadcast per deriv call.
    b = jnp.broadcast_to(b_ref[...], x_ref.shape)

    def f(y):
        # ODEFunc.forward: tanh(Linear(100, 100)(y)); padded lanes stay exactly 0.
        return jnp.tanh(jnp.dot(y, w, preferred_element_type=jnp.float32) + b)

    def rk4_step(y):
        # torchdiffeq fixed-grid 'rk4' step == rk4_alt_step_func (3/8 rule)
        k1 = f(y)
        k2 = f(y + dt * k1 * (1.0 / 3.0))
        k3 = f(y + dt * (k2 - k1 * (1.0 / 3.0)))
        k4 = f(y + dt * (k1 - k2 + k3))
        return y + dt * (k1 + 3.0 * (k2 + k3) + k4) * 0.125

    y = x_ref[...]
    # odeint returns the initial state at t[0].
    out_ref[0, :, :] = y

    if T - 1 <= 32:
        # Small static trip count -> full unroll (4 dependent MXU matmuls/step,
        # static first-axis stores).
        for t in range(T - 1):
            y = rk4_step(y)
            out_ref[t + 1, :, :] = y
    else:
        # Large num_frames: keep the loop visible so trace/compile time and
        # vreg live ranges stay bounded; dynamic first-axis store is cheap.
        def body(t, y):
            y = rk4_step(y)
            out_ref[t + 1, :, :] = y
            return y

        lax.fori_loop(0, T - 1, body, y)


# ----------------------------------------------------------------------------- wrapper
def temporal_generator_ode(x, w, b, num_frames):
    """TemporalGeneratorODE.forward (linear=False): x [B, D] -> [B, num_frames, D]."""
    # TODO(synk): optional `linear=True` pre-MLP (4x Linear+LeakyReLU) not implemented;
    # the module's default construction uses linear=False.
    B, D = x.shape
    D_pad = 128 * pl.cdiv(D, 128)      # lane-dense feature dim (100 -> 128)

    if B <= 256:
        B_pad = 8 * pl.cdiv(B, 8)      # f32 sublane minimum
        TB = B_pad                     # single batch tile
    else:
        TB = 256                       # large batches: tile + parallel grid
        B_pad = TB * pl.cdiv(B, TB)

    # Zero padding is numerically exact: padded lanes/rows of W and b are 0,
    # so padded lanes of tanh(y @ W + b) are 0 and padded lanes of y stay 0.
    x_p = jnp.zeros((B_pad, D_pad), jnp.float32).at[:B, :D].set(x.astype(jnp.float32))
    w_p = jnp.zeros((D_pad, D_pad), jnp.float32).at[:D, :D].set(w.astype(jnp.float32))
    b_p = jnp.zeros((1, D_pad), jnp.float32).at[:, :D].set(b.astype(jnp.float32))

    traj = pl.pallas_call(
        ode_rk4_kernel,
        out_shape=jax.ShapeDtypeStruct((num_frames, B_pad, D_pad), jnp.float32),
        grid=(B_pad // TB,),
        in_specs=[
            pl.BlockSpec((TB, D_pad), lambda i: (i, 0)),       # x: tiled over batch
            pl.BlockSpec((D_pad, D_pad), lambda i: (0, 0)),    # W: resident
            pl.BlockSpec((1, D_pad), lambda i: (0, 0)),        # b: resident
        ],
        out_specs=pl.BlockSpec((num_frames, TB, D_pad), lambda i: (0, i, 0)),
        compiler_params=pltpu.CompilerParams(
            dimension_semantics=("parallel",)),                # megacore / v7x 2 TCs
    )(x_p, w_p, b_p)

    # torch: odeint(...) is [T, B, D]; .transpose(0, 1) -> [B, T, D]; drop padding.
    return jnp.transpose(traj, (1, 0, 2))[:B, :, :D]


# ----------------------------------------------------------------------------- reference
def _ref_forward(x, w, b, num_frames):
    """Pure-JAX reference of the same forward (3/8-rule RK4)."""
    dt = 1.0 / max(num_frames - 1, 1)

    def f(y):
        return jnp.tanh(
            jnp.dot(y, w, precision=jax.lax.Precision.HIGHEST) + b)

    ys = [x]
    y = x
    for _ in range(num_frames - 1):
        k1 = f(y)
        k2 = f(y + dt * k1 / 3.0)
        k3 = f(y + dt * (k2 - k1 / 3.0))
        k4 = f(y + dt * (k1 - k2 + k3))
        y = y + dt * (k1 + 3.0 * (k2 + k3) + k4) / 8.0
        ys.append(y)
    return jnp.transpose(jnp.stack(ys, axis=0), (1, 0, 2))


# ----------------------------------------------------------------------------- main
if __name__ == "__main__":
    B, D, T = 4, 100, 16               # batch, dim (=100 by construction), num_frames
    gain = 2.0 ** 0.5

    key = jax.random.PRNGKey(0)
    kx, kw, kb = jax.random.split(key, 3)

    x = jax.random.normal(kx, (B, D), jnp.float32)
    w = _xavier_uniform(kw, D, D, gain)        # ODEFunc.fn[0], xavier(gain=sqrt(2))
    b = _bias_default(kb, D, D)

    out = temporal_generator_ode(x, w, b, T)
    out = jax.block_until_ready(out)
    assert out.shape == (B, T, D) and out.dtype == jnp.float32

    ref = jax.block_until_ready(_ref_forward(x, w, b, T))
    assert np.allclose(np.asarray(out), np.asarray(ref), rtol=2e-2, atol=2e-2), (
        "pallas kernel diverges from pure-JAX RK4 reference")

    print("KERNEL_OK")
</pallas_src>

<mosaic_0001>
module attributes {stable_mosaic.version = 11 : i64} {
  func.func @ode_rk4_kernel(%arg0: i32, %arg1: memref<8x128xf32, #tpu.memory_space<vmem>>, %arg2: memref<128x128xf32, #tpu.memory_space<vmem>>, %arg3: memref<1x128xf32, #tpu.memory_space<vmem>>, %arg4: memref<16x8x128xf32, #tpu.memory_space<vmem>>) attributes {dimension_semantics = [#tpu.dimension_semantics<parallel>], iteration_bounds = array<i64: 1>, scalar_prefetch = 0 : i64, scratch_operands = 0 : i64, tpu.core_type = #tpu.core_type<tc>, window_params = [{transform_indices = @transform_0, window_bounds = array<i64: 8, 128>}, {pipeline_mode = #tpu.pipeline_mode<synchronous>, transform_indices = @transform_1, window_bounds = array<i64: 128, 128>}, {pipeline_mode = #tpu.pipeline_mode<synchronous>, transform_indices = @transform_2, window_bounds = array<i64: 1, 128>}, {transform_indices = @transform_3, window_bounds = array<i64: 16, 8, 128>}]} {
    %c0 = arith.constant 0 : index
    %c0_0 = arith.constant 0 : index
    %0 = vector.load %arg2[%c0, %c0_0] : memref<128x128xf32, #tpu.memory_space<vmem>>, vector<128x128xf32>
    %c0_1 = arith.constant 0 : index
    %c0_2 = arith.constant 0 : index
    %1 = vector.load %arg3[%c0_1, %c0_2] : memref<1x128xf32, #tpu.memory_space<vmem>>, vector<1x128xf32>
    %2 = vector.shape_cast %1 : vector<1x128xf32> to vector<1x128xf32>
    %3 = vector.broadcast %2 : vector<1x128xf32> to vector<8x128xf32>
    %c0_3 = arith.constant 0 : index
    %c0_4 = arith.constant 0 : index
    %4 = vector.load %arg1[%c0_3, %c0_4] : memref<8x128xf32, #tpu.memory_space<vmem>>, vector<8x128xf32>
    %c0_5 = arith.constant 0 : index
    %c0_6 = arith.constant 0 : index
    %c0_7 = arith.constant 0 : index
    %5 = vector.load %arg4[%c0_5, %c0_6, %c0_7] : memref<16x8x128xf32, #tpu.memory_space<vmem>>, vector<1x8x128xf32>
    %6 = vector.shape_cast %5 : vector<1x8x128xf32> to vector<8x128xf32>
    %7 = vector.shape_cast %4 : vector<8x128xf32> to vector<1x8x128xf32>
    tpu.vector_store %arg4[%c0_5, %c0_6, %c0_7], %7 {strides = array<i32>} : memref<16x8x128xf32, #tpu.memory_space<vmem>>, vector<1x8x128xf32>,
    %cst = arith.constant dense<0.000000e+00> : vector<8x128xf32>
    %8 = tpu.matmul %4, %0, %cst {dimension_numbers = #tpu.dot_dimension_numbers<[1], [0], [0], [1], [0, 0, 1, 1], [], []>} : vector<8x128xf32>, vector<128x128xf32>, vector<8x128xf32> -> vector<8x128xf32>
    %9 = arith.addf %8, %3 : vector<8x128xf32>
    %10 = math.tanh %9 : vector<8x128xf32>
    %cst_8 = arith.constant 0.0666666701 : f32
    %11 = vector.broadcast %cst_8 : f32 to vector<8x128xf32>
    %12 = arith.mulf %11, %10 : vector<8x128xf32>
    %cst_9 = arith.constant 0.333333343 : f32
    %13 = vector.broadcast %cst_9 : f32 to vector<8x128xf32>
    %14 = arith.mulf %12, %13 : vector<8x128xf32>
    %15 = arith.addf %4, %14 : vector<8x128xf32>
    %cst_10 = arith.constant dense<0.000000e+00> : vector<8x128xf32>
    %16 = tpu.matmul %15, %0, %cst_10 {dimension_numbers = #tpu.dot_dimension_numbers<[1], [0], [0], [1], [0, 0, 1, 1], [], []>} : vector<8x128xf32>, vector<128x128xf32>, vector<8x128xf32> -> vector<8x128xf32>
    %17 = arith.addf %16, %3 : vector<8x128xf32>
    %18 = math.tanh %17 : vector<8x128xf32>
    %cst_11 = arith.constant 0.333333343 : f32
    %19 = vector.broadcast %cst_11 : f32 to vector<8x128xf32>
    %20 = arith.mulf %10, %19 : vector<8x128xf32>
    %21 = arith.subf %18, %20 : vector<8x128xf32>
    %cst_12 = arith.constant 0.0666666701 : f32
    %22 = vector.broadcast %cst_12 : f32 to vector<8x128xf32>
    %23 = arith.mulf %22, %21 : vector<8x128xf32>
    %24 = arith.addf %4, %23 : vector<8x128xf32>
    %cst_13 = arith.constant dense<0.000000e+00> : vector<8x128xf32>
    %25 = tpu.matmul %24, %0, %cst_13 {dimension_numbers = #tpu.dot_dimension_numbers<[1], [0], [0], [1], [0, 0, 1, 1], [], []>} : vector<8x128xf32>, vector<128x128xf32>, vector<8x128xf32> -> vector<8x128xf32>
    %26 = arith.addf %25, %3 : vector<8x128xf32>
    %27 = math.tanh %26 : vector<8x128xf32>
    %28 = arith.subf %10, %18 : vector<8x128xf32>
    %29 = arith.addf %28, %27 : vector<8x128xf32>
    %cst_14 = arith.constant 0.0666666701 : f32
    %30 = vector.broadcast %cst_14 : f32 to vector<8x128xf32>
    %31 = arith.mulf %30, %29 : vector<8x128xf32>
    %32 = arith.addf %4, %31 : vector<8x128xf32>
    %cst_15 = arith.constant dense<0.000000e+00> : vector<8x128xf32>
    %33 = tpu.matmul %32, %0, %cst_15 {dimension_numbers = #tpu.dot_dimension_numbers<[1], [0], [0], [1], [0, 0, 1, 1], [], []>} : vector<8x128xf32>, vector<128x128xf32>, vector<8x128xf32> -> vector<8x128xf32>
    %34 = arith.addf %33, %3 : vector<8x128xf32>
    %35 = math.tanh %34 : vector<8x128xf32>
    %36 = arith.addf %18, %27 : vector<8x128xf32>
    %cst_16 = arith.constant 3.000000e+00 : f32
    %37 = vector.broadcast %cst_16 : f32 to vector<8x128xf32>
    %38 = arith.mulf %37, %36 : vector<8x128xf32>
    %39 = arith.addf %10, %38 : vector<8x128xf32>
    %40 = arith.addf %39, %35 : vector<8x128xf32>
    %cst_17 = arith.constant 0.0666666701 : f32
    %41 = vector.broadcast %cst_17 : f32 to vector<8x128xf32>
    %42 = arith.mulf %41, %40 : vector<8x128xf32>
    %cst_18 = arith.constant 1.250000e-01 : f32
    %43 = vector.broadcast %cst_18 : f32 to vector<8x128xf32>
    %44 = arith.mulf %42, %43 : vector<8x128xf32>
    %45 = arith.addf %4, %44 : vector<8x128xf32>
    %c1 = arith.constant 1 : index
    %c0_19 = arith.constant 0 : index
    %c0_20 = arith.constant 0 : index
    %46 = vector.load %arg4[%c1, %c0_19, %c0_20] : memref<16x8x128xf32, #tpu.memory_space<vmem>>, vector<1x8x128xf32>
    %47 = vector.shape_cast %46 : vector<1x8x128xf32> to vector<8x128xf32>
    %48 = vector.shape_cast %45 : vector<8x128xf32> to vector<1x8x128xf32>
    tpu.vector_store %arg4[%c1, %c0_19, %c0_20], %48 {strides = array<i32>} : memref<16x8x128xf32, #tpu.memory_space<vmem>>, vector<1x8x128xf32>,
    %cst_21 = arith.constant dense<0.000000e+00> : vector<8x128xf32>
    %49 = tpu.matmul %45, %0, %cst_21 {dimension_numbers = #tpu.dot_dimension_numbers<[1], [0], [0], [1], [0, 0, 1, 1], [], []>} : vector<8x128xf32>, vector<128x128xf32>, vector<8x128xf32> -> vector<8x128xf32>
    %50 = arith.addf %49, %3 : vector<8x128xf32>
    %51 = math.tanh %50 : vector<8x128xf32>
    %cst_22 = arith.constant 0.0666666701 : f32
    %52 = vector.broadcast %cst_22 : f32 to vector<8x128xf32>
    %53 = arith.mulf %52, %51 : vector<8x128xf32>
    %cst_23 = arith.constant 0.333333343 : f32
    %54 = vector.broadcast %cst_23 : f32 to vector<8x128xf32>
    %55 = arith.mulf %53, %54 : vector<8x128xf32>
    %56 = arith.addf %45, %55 : vector<8x128xf32>
    %cst_24 = arith.constant dense<0.000000e+00> : vector<8x128xf32>
    %57 = tpu.matmul %56, %0, %cst_24 {dimension_numbers = #tpu.dot_dimension_numbers<[1], [0], [0], [1], [0, 0, 1, 1], [], []>} : vector<8x128xf32>, vector<128x128xf32>, vector<8x128xf32> -> vector<8x128xf32>
    %58 = arith.addf %57, %3 : vector<8x128xf32>
    %59 = math.tanh %58 : vector<8x128xf32>
    %cst_25 = arith.constant 0.333333343 : f32
    %60 = vector.broadcast %cst_25 : f32 to vector<8x128xf32>
    %61 = arith.mulf %51, %60 : vector<8x128xf32>
    %62 = arith.subf %59, %61 : vector<8x128xf32>
    %cst_26 = arith.constant 0.0666666701 : f32
    %63 = vector.broadcast %cst_26 : f32 to vector<8x128xf32>
    %64 = arith.mulf %63, %62 : vector<8x128xf32>
    %65 = arith.addf %45, %64 : vector<8x128xf32>
    %cst_27 = arith.constant dense<0.000000e+00> : vector<8x128xf32>
    %66 = tpu.matmul %65, %0, %cst_27 {dimension_numbers = #tpu.dot_dimension_numbers<[1], [0], [0], [1], [0, 0, 1, 1], [], []>} : vector<8x128xf32>, vector<128x128xf32>, vector<8x128xf32> -> vector<8x128xf32>
    %67 = arith.addf %66, %3 : vector<8x128xf32>
    %68 = math.tanh %67 : vector<8x128xf32>
    %69 = arith.subf %51, %59 : vector<8x128xf32>
    %70 = arith.addf %69, %68 : vector<8x128xf32>
    %cst_28 = arith.constant 0.0666666701 : f32
    %71 = vector.broadcast %cst_28 : f32 to vector<8x128xf32>
    %72 = arith.mulf %71, %70 : vector<8x128xf32>
    %73 = arith.addf %45, %72 : vector<8x128xf32>
    %cst_29 = arith.constant dense<0.000000e+00> : vector<8x128xf32>
    %74 = tpu.matmul %73, %0, %cst_29 {dimension_numbers = #tpu.dot_dimension_numbers<[1], [0], [0], [1], [0, 0, 1, 1], [], []>} : vector<8x128xf32>, vector<128x128xf32>, vector<8x128xf32> -> vector<8x128xf32>
    %75 = arith.addf %74, %3 : vector<8x128xf32>
    %76 = math.tanh %75 : vector<8x128xf32>
    %77 = arith.addf %59, %68 : vector<8x128xf32>
    %cst_30 = arith.constant 3.000000e+00 : f32
    %78 = vector.broadcast %cst_30 : f32 to vector<8x128xf32>
    %79 = arith.mulf %78, %77 : vector<8x128xf32>
    %80 = arith.addf %51, %79 : vector<8x128xf32>
    %81 = arith.addf %80, %76 : vector<8x128xf32>
    %cst_31 = arith.constant 0.0666666701 : f32
    %82 = vector.broadcast %cst_31 : f32 to vector<8x128xf32>
    %83 = arith.mulf %82, %81 : vector<8x128xf32>
    %cst_32 = arith.constant 1.250000e-01 : f32
    %84 = vector.broadcast %cst_32 : f32 to vector<8x128xf32>
    %85 = arith.mulf %83, %84 : vector<8x128xf32>
    %86 = arith.addf %45, %85 : vector<8x128xf32>
    %c2 = arith.constant 2 : index
    %c0_33 = arith.constant 0 : index
    %c0_34 = arith.constant 0 : index
    %87 = vector.load %arg4[%c2, %c0_33, %c0_34] : memref<16x8x128xf32, #tpu.memory_space<vmem>>, vector<1x8x128xf32>
    %88 = vector.shape_cast %87 : vector<1x8x128xf32> to vector<8x128xf32>
    %89 = vector.shape_cast %86 : vector<8x128xf32> to vector<1x8x128xf32>
    tpu.vector_store %arg4[%c2, %c0_33, %c0_34], %89 {strides = array<i32>} : memref<16x8x128xf32, #tpu.memory_space<vmem>>, vector<1x8x128xf32>,
    %cst_35 = arith.constant dense<0.000000e+00> : vector<8x128xf32>
    %90 = tpu.matmul %86, %0, %cst_35 {dimension_numbers = #tpu.dot_dimension_numbers<[1], [0], [0], [1], [0, 0, 1, 1], [], []>} : vector<8x128xf32>, vector<128x128xf32>, vector<8x128xf32> -> vector<8x128xf32>
    %91 = arith.addf %90, %3 : vector<8x128xf32>
    %92 = math.tanh %91 : vector<8x128xf32>
    %cst_36 = arith.constant 0.0666666701 : f32
    %93 = vector.broadcast %cst_36 : f32 to vector<8x128xf32>
    %94 = arith.mulf %93, %92 : vector<8x128xf32>
    %cst_37 = arith.constant 0.333333343 : f32
    %95 = vector.broadcast %cst_37 : f32 to vector<8x128xf32>
    %96 = arith.mulf %94, %95 : vector<8x128xf32>
    %97 = arith.addf %86, %96 : vector<8x128xf32>
    %cst_38 = arith.constant dense<0.000000e+00> : vector<8x128xf32>
    %98 = tpu.matmul %97, %0, %cst_38 {dimension_numbers = #tpu.dot_dimension_numbers<[1], [0], [0], [1], [0, 0, 1, 1], [], []>} : vector<8x128xf32>, vector<128x128xf32>, vector<8x128xf32> -> vector<8x128xf32>
    %99 = arith.addf %98, %3 : vector<8x128xf32>
    %100 = math.tanh %99 : vector<8x128xf32>
    %cst_39 = arith.constant 0.333333343 : f32
    %101 = vector.broadcast %cst_39 : f32 to vector<8x128xf32>
    %102 = arith.mulf %92, %101 : vector<8x128xf32>
    %103 = arith.subf %100, %102 : vector<8x128xf32>
    %cst_40 = arith.constant 0.0666666701 : f32
    %104 = vector.broadcast %cst_40 : f32 to vector<8x128xf32>
    %105 = arith.mulf %104, %103 : vector<8x128xf32>
    %106 = arith.addf %86, %105 : vector<8x128xf32>
    %cst_41 = arith.constant dense<0.000000e+00> : vector<8x128xf32>
    %107 = tpu.matmul %106, %0, %cst_41 {dimension_numbers = #tpu.dot_dimension_numbers<[1], [0], [0], [1], [0, 0, 1, 1], [], []>} : vector<8x128xf32>, vector<128x128xf32>, vector<8x128xf32> -> vector<8x128xf32>
    %108 = arith.addf %107, %3 : vector<8x128xf32>
    %109 = math.tanh %108 : vector<8x128xf32>
    %110 = arith.subf %92, %100 : vector<8x128xf32>
    %111 = arith.addf %110, %109 : vector<8x128xf32>
    %cst_42 = arith.constant 0.0666666701 : f32
    %112 = vector.broadcast %cst_42 : f32 to vector<8x128xf32>
    %113 = arith.mulf %112, %111 : vector<8x128xf32>
    %114 = arith.addf %86, %113 : vector<8x128xf32>
    %cst_43 = arith.constant dense<0.000000e+00> : vector<8x128xf32>
    %115 = tpu.matmul %114, %0, %cst_43 {dimension_numbers = #tpu.dot_dimension_numbers<[1], [0], [0], [1], [0, 0, 1, 1], [], []>} : vector<8x128xf32>, vector<128x128xf32>, vector<8x128xf32> -> vector<8x128xf32>
    %116 = arith.addf %115, %3 : vector<8x128xf32>
    %117 = math.tanh %116 : vector<8x128xf32>
    %118 = arith.addf %100, %109 : vector<8x128xf32>
    %cst_44 = arith.constant 3.000000e+00 : f32
    %119 = vector.broadcast %cst_44 : f32 to vector<8x128xf32>
    %120 = arith.mulf %119, %118 : vector<8x128xf32>
    %121 = arith.addf %92, %120 : vector<8x128xf32>
    %122 = arith.addf %121, %117 : vector<8x128xf32>
    %cst_45 = arith.constant 0.0666666701 : f32
    %123 = vector.broadcast %cst_45 : f32 to vector<8x128xf32>
    %124 = arith.mulf %123, %122 : vector<8x128xf32>
    %cst_46 = arith.constant 1.250000e-01 : f32
    %125 = vector.broadcast %cst_46 : f32 to vector<8x128xf32>
    %126 = arith.mulf %124, %125 : vector<8x128xf32>
    %127 = arith.addf %86, %126 : vector<8x128xf32>
    %c3 = arith.constant 3 : index
    %c0_47 = arith.constant 0 : index
    %c0_48 = arith.constant 0 : index
    %128 = vector.load %arg4[%c3, %c0_47, %c0_48] : memref<16x8x128xf32, #tpu.memory_space<vmem>>, vector<1x8x128xf32>
    %129 = vector.shape_cast %128 : vector<1x8x128xf32> to vector<8x128xf32>
    %130 = vector.shape_cast %127 : vector<8x128xf32> to vector<1x8x128xf32>
    tpu.vector_store %arg4[%c3, %c0_47, %c0_48], %130 {strides = array<i32>} : memref<16x8x128xf32, #tpu.memory_space<vmem>>, vector<1x8x128xf32>,
    %cst_49 = arith.constant dense<0.000000e+00> : vector<8x128xf32>
    %131 = tpu.matmul %127, %0, %cst_49 {dimension_numbers = #tpu.dot_dimension_numbers<[1], [0], [0], [1], [0, 0, 1, 1], [], []>} : vector<8x128xf32>, vector<128x128xf32>, vector<8x128xf32> -> vector<8x128xf32>
    %132 = arith.addf %131, %3 : vector<8x128xf32>
    %133 = math.tanh %132 : vector<8x128xf32>
    %cst_50 = arith.constant 0.0666666701 : f32
    %134 = vector.broadcast %cst_50 : f32 to vector<8x128xf32>
    %135 = arith.mulf %134, %133 : vector<8x128xf32>
    %cst_51 = arith.constant 0.333333343 : f32
    %136 = vector.broadcast %cst_51 : f32 to vector<8x128xf32>
    %137 = arith.mulf %135, %136 : vector<8x128xf32>
    %138 = arith.addf %127, %137 : vector<8x128xf32>
    %cst_52 = arith.constant dense<0.000000e+00> : vector<8x128xf32>
    %139 = tpu.matmul %138, %0, %cst_52 {dimension_numbers = #tpu.dot_dimension_numbers<[1], [0], [0], [1], [0, 0, 1, 1], [], []>} : vector<8x128xf32>, vector<128x128xf32>, vector<8x128xf32> -> vector<8x128xf32>
    %140 = arith.addf %139, %3 : vector<8x128xf32>
    %141 = math.tanh %140 : vector<8x128xf32>
    %cst_53 = arith.constant 0.333333343 : f32
    %142 = vector.broadcast %cst_53 : f32 to vector<8x128xf32>
    %143 = arith.mulf %133, %142 : vector<8x128xf32>
    %144 = arith.subf %141, %143 : vector<8x128xf32>
    %cst_54 = arith.constant 0.0666666701 : f32
    %145 = vector.broadcast %cst_54 : f32 to vector<8x128xf32>
    %146 = arith.mulf %145, %144 : vector<8x128xf32>
    %147 = arith.addf %127, %146 : vector<8x128xf32>
    %cst_55 = arith.constant dense<0.000000e+00> : vector<8x128xf32>
    %148 = tpu.matmul %147, %0, %cst_55 {dimension_numbers = #tpu.dot_dimension_numbers<[1], [0], [0], [1], [0, 0, 1, 1], [], []>} : vector<8x128xf32>, vector<128x128xf32>, vector<8x128xf32> -> vector<8x128xf32>
    %149 = arith.addf %148, %3 : vector<8x128xf32>
    %150 = math.tanh %149 : vector<8x128xf32>
    %151 = arith.subf %133, %141 : vector<8x128xf32>
    %152 = arith.addf %151, %150 : vector<8x128xf32>
    %cst_56 = arith.constant 0.0666666701 : f32
    %153 = vector.broadcast %cst_56 : f32 to vector<8x128xf32>
    %154 = arith.mulf %153, %152 : vector<8x128xf32>
    %155 = arith.addf %127, %154 : vector<8x128xf32>
    %cst_57 = arith.constant dense<0.000000e+00> : vector<8x128xf32>
    %156 = tpu.matmul %155, %0, %cst_57 {dimension_numbers = #tpu.dot_dimension_numbers<[1], [0], [0], [1], [0, 0, 1, 1], [], []>} : vector<8x128xf32>, vector<128x128xf32>, vector<8x128xf32> -> vector<8x128xf32>
    %157 = arith.addf %156, %3 : vector<8x128xf32>
    %158 = math.tanh %157 : vector<8x128xf32>
    %159 = arith.addf %141, %150 : vector<8x128xf32>
    %cst_58 = arith.constant 3.000000e+00 : f32
    %160 = vector.broadcast %cst_58 : f32 to vector<8x128xf32>
    %161 = arith.mulf %160, %159 : vector<8x128xf32>
    %162 = arith.addf %133, %161 : vector<8x128xf32>
    %163 = arith.addf %162, %158 : vector<8x128xf32>
    %cst_59 = arith.constant 0.0666666701 : f32
    %164 = vector.broadcast %cst_59 : f32 to vector<8x128xf32>
    %165 = arith.mulf %164, %163 : vector<8x128xf32>
    %cst_60 = arith.constant 1.250000e-01 : f32
    %166 = vector.broadcast %cst_60 : f32 to vector<8x128xf32>
    %167 = arith.mulf %165, %166 : vector<8x128xf32>
    %168 = arith.addf %127, %167 : vector<8x128xf32>
    %c4 = arith.constant 4 : index
    %c0_61 = arith.constant 0 : index
    %c0_62 = arith.constant 0 : index
    %169 = vector.load %arg4[%c4, %c0_61, %c0_62] : memref<16x8x128xf32, #tpu.memory_space<vmem>>, vector<1x8x128xf32>
    %170 = vector.shape_cast %169 : vector<1x8x128xf32> to vector<8x128xf32>
    %171 = vector.shape_cast %168 : vector<8x128xf32> to vector<1x8x128xf32>
    tpu.vector_store %arg4[%c4, %c0_61, %c0_62], %171 {strides = array<i32>} : memref<16x8x128xf32, #tpu.memory_space<vmem>>, vector<1x8x128xf32>,
    %cst_63 = arith.constant dense<0.000000e+00> : vector<8x128xf32>
    %172 = tpu.matmul %168, %0, %cst_63 {dimension_numbers = #tpu.dot_dimension_numbers<[1], [0], [0], [1], [0, 0, 1, 1], [], []>} : vector<8x128xf32>, vector<128x128xf32>, vector<8x128xf32> -> vector<8x128xf32>
    %173 = arith.addf %172, %3 : vector<8x128xf32>
    %174 = math.tanh %173 : vector<8x128xf32>
    %cst_64 = arith.constant 0.0666666701 : f32
    %175 = vector.broadcast %cst_64 : f32 to vector<8x128xf32>
    %176 = arith.mulf %175, %174 : vector<8x128xf32>
    %cst_65 = arith.constant 0.333333343 : f32
    %177 = vector.broadcast %cst_65 : f32 to vector<8x128xf32>
    %178 = arith.mulf %176, %177 : vector<8x128xf32>
    %179 = arith.addf %168, %178 : vector<8x128xf32>
    %cst_66 = arith.constant dense<0.000000e+00> : vector<8x128xf32>
    %180 = tpu.matmul %179, %0, %cst_66 {dimension_numbers = #tpu.dot_dimension_numbers<[1], [0], [0], [1], [0, 0, 1, 1], [], []>} : vector<8x128xf32>, vector<128x128xf32>, vector<8x128xf32> -> vector<8x128xf32>
    %181 = arith.addf %180, %3 : vector<8x128xf32>
    %182 = math.tanh %181 : vector<8x128xf32>
    %cst_67 = arith.constant 0.333333343 : f32
    %183 = vector.broadcast %cst_67 : f32 to vector<8x128xf32>
    %184 = arith.mulf %174, %183 : vector<8x128xf32>
    %185 = arith.subf %182, %184 : vector<8x128xf32>
    %cst_68 = arith.constant 0.0666666701 : f32
    %186 = vector.broadcast %cst_68 : f32 to vector<8x128xf32>
    %187 = arith.mulf %186, %185 : vector<8x128xf32>
    %188 = arith.addf %168, %187 : vector<8x128xf32>
    %cst_69 = arith.constant dense<0.000000e+00> : vector<8x128xf32>
    %189 = tpu.matmul %188, %0, %cst_69 {dimension_numbers = #tpu.dot_dimension_numbers<[1], [0], [0], [1], [0, 0, 1, 1], [], []>} : vector<8x128xf32>, vector<128x128xf32>, vector<8x128xf32> -> vector<8x128xf32>
    %190 = arith.addf %189, %3 : vector<8x128xf32>
    %191 = math.tanh %190 : vector<8x128xf32>
    %192 = arith.subf %174, %182 : vector<8x128xf32>
    %193 = arith.addf %192, %191 : vector<8x128xf32>
    %cst_70 = arith.constant 0.0666666701 : f32
    %194 = vector.broadcast %cst_70 : f32 to vector<8x128xf32>
    %195 = arith.mulf %194, %193 : vector<8x128xf32>
    %196 = arith.addf %168, %195 : vector<8x128xf32>
    %cst_71 = arith.constant dense<0.000000e+00> : vector<8x128xf32>
    %197 = tpu.matmul %196, %0, %cst_71 {dimension_numbers = #tpu.dot_dimension_numbers<[1], [0], [0], [1], [0, 0, 1, 1], [], []>} : vector<8x128xf32>, vector<128x128xf32>, vector<8x128xf32> -> vector<8x128xf32>
    %198 = arith.addf %197, %3 : vector<8x128xf32>
    %199 = math.tanh %198 : vector<8x128xf32>
    %200 = arith.addf %182, %191 : vector<8x128xf32>
    %cst_72 = arith.constant 3.000000e+00 : f32
    %201 = vector.broadcast %cst_72 : f32 to vector<8x128xf32>
    %202 = arith.mulf %201, %200 : vector<8x128xf32>
    %203 = arith.addf %174, %202 : vector<8x128xf32>
    %204 = arith.addf %203, %199 : vector<8x128xf32>
    %cst_73 = arith.constant 0.0666666701 : f32
    %205 = vector.broadcast %cst_73 : f32 to vector<8x128xf32>
    %206 = arith.mulf %205, %204 : vector<8x128xf32>
    %cst_74 = arith.constant 1.250000e-01 : f32
    %207 = vector.broadcast %cst_74 : f32 to vector<8x128xf32>
    %208 = arith.mulf %206, %207 : vector<8x128xf32>
    %209 = arith.addf %168, %208 : vector<8x128xf32>
    %c5 = arith.constant 5 : index
    %c0_75 = arith.constant 0 : index
    %c0_76 = arith.constant 0 : index
    %210 = vector.load %arg4[%c5, %c0_75, %c0_76] : memref<16x8x128xf32, #tpu.memory_space<vmem>>, vector<1x8x128xf32>
    %211 = vector.shape_cast %210 : vector<1x8x128xf32> to vector<8x128xf32>
    %212 = vector.shape_cast %209 : vector<8x128xf32> to vector<1x8x128xf32>
    tpu.vector_store %arg4[%c5, %c0_75, %c0_76], %212 {strides = array<i32>} : memref<16x8x128xf32, #tpu.memory_space<vmem>>, vector<1x8x128xf32>,
    %cst_77 = arith.constant dense<0.000000e+00> : vector<8x128xf32>
    %213 = tpu.matmul %209, %0, %cst_77 {dimension_numbers = #tpu.dot_dimension_numbers<[1], [0], [0], [1], [0, 0, 1, 1], [], []>} : vector<8x128xf32>, vector<128x128xf32>, vector<8x128xf32> -> vector<8x128xf32>
    %214 = arith.addf %213, %3 : vector<8x128xf32>
    %215 = math.tanh %214 : vector<8x128xf32>
    %cst_78 = arith.constant 0.0666666701 : f32
    %216 = vector.broadcast %cst_78 : f32 to vector<8x128xf32>
    %217 = arith.mulf %216, %215 : vector<8x128xf32>
    %cst_79 = arith.constant 0.333333343 : f32
    %218 = vector.broadcast %cst_79 : f32 to vector<8x128xf32>
    %219 = arith.mulf %217, %218 : vector<8x128xf32>
    %220 = arith.addf %209, %219 : vector<8x128xf32>
    %cst_80 = arith.constant dense<0.000000e+00> : vector<8x128xf32>
    %221 = tpu.matmul %220, %0, %cst_80 {dimension_numbers = #tpu.dot_dimension_numbers<[1], [0], [0], [1], [0, 0, 1, 1], [], []>} : vector<8x128xf32>, vector<128x128xf32>, vector<8x128xf32> -> vector<8x128xf32>
    %222 = arith.addf %221, %3 : vector<8x128xf32>
    %223 = math.tanh %222 : vector<8x128xf32>
    %cst_81 = arith.constant 0.333333343 : f32
    %224 = vector.broadcast %cst_81 : f32 to vector<8x128xf32>
    %225 = arith.mulf %215, %224 : vector<8x128xf32>
    %226 = arith.subf %223, %225 : vector<8x128xf32>
    %cst_82 = arith.constant 0.0666666701 : f32
    %227 = vector.broadcast %cst_82 : f32 to vector<8x128xf32>
    %228 = arith.mulf %227, %226 : vector<8x128xf32>
    %229 = arith.addf %209, %228 : vector<8x128xf32>
    %cst_83 = arith.constant dense<0.000000e+00> : vector<8x128xf32>
    %230 = tpu.matmul %229, %0, %cst_83 {dimension_numbers = #tpu.dot_dimension_numbers<[1], [0], [0], [1], [0, 0, 1, 1], [], []>} : vector<8x128xf32>, vector<128x128xf32>, vector<8x128xf32> -> vector<8x128xf32>
    %231 = arith.addf %230, %3 : vector<8x128xf32>
    %232 = math.tanh %231 : vector<8x128xf32>
    %233 = arith.subf %215, %223 : vector<8x128xf32>
    %234 = arith.addf %233, %232 : vector<8x128xf32>
    %cst_84 = arith.constant 0.0666666701 : f32
    %235 = vector.broadcast %cst_84 : f32 to vector<8x128xf32>
    %236 = arith.mulf %235, %234 : vector<8x128xf32>
    %237 = arith.addf %209, %236 : vector<8x128xf32>
    %cst_85 = arith.constant dense<0.000000e+00> : vector<8x128xf32>
    %238 = tpu.matmul %237, %0, %cst_85 {dimension_numbers = #tpu.dot_dimension_numbers<[1], [0], [0], [1], [0, 0, 1, 1], [], []>} : vector<8x128xf32>, vector<128x128xf32>, vector<8x128xf32> -> vector<8x128xf32>
    %239 = arith.addf %238, %3 : vector<8x128xf32>
    %240 = math.tanh %239 : vector<8x128xf32>
    %241 = arith.addf %223, %232 : vector<8x128xf32>
    %cst_86 = arith.constant 3.000000e+00 : f32
    %242 = vector.broadcast %cst_86 : f32 to vector<8x128xf32>
    %243 = arith.mulf %242, %241 : vector<8x128xf32>
    %244 = arith.addf %215, %243 : vector<8x128xf32>
    %245 = arith.addf %244, %240 : vector<8x128xf32>
    %cst_87 = arith.constant 0.0666666701 : f32
    %246 = vector.broadcast %cst_87 : f32 to vector<8x128xf32>
    %247 = arith.mulf %246, %245 : vector<8x128xf32>
    %cst_88 = arith.constant 1.250000e-01 : f32
    %248 = vector.broadcast %cst_88 : f32 to vector<8x128xf32>
    %249 = arith.mulf %247, %248 : vector<8x128xf32>
    %250 = arith.addf %209, %249 : vector<8x128xf32>
    %c6 = arith.constant 6 : index
    %c0_89 = arith.constant 0 : index
    %c0_90 = arith.constant 0 : index
    %251 = vector.load %arg4[%c6, %c0_89, %c0_90] : memref<16x8x128xf32, #tpu.memory_space<vmem>>, vector<1x8x128xf32>
    %252 = vector.shape_cast %251 : vector<1x8x128xf32> to vector<8x128xf32>
    %253 = vector.shape_cast %250 : vector<8x128xf32> to vector<1x8x128xf32>
    tpu.vector_store %arg4[%c6, %c0_89, %c0_90], %253 {strides = array<i32>} : memref<16x8x128xf32, #tpu.memory_space<vmem>>, vector<1x8x128xf32>,
    %cst_91 = arith.constant dense<0.000000e+00> : vector<8x128xf32>
    %254 = tpu.matmul %250, %0, %cst_91 {dimension_numbers = #tpu.dot_dimension_numbers<[1], [0], [0], [1], [0, 0, 1, 1], [], []>} : vector<8x128xf32>, vector<128x128xf32>, vector<8x128xf32> -> vector<8x128xf32>
    %255 = arith.addf %254, %3 : vector<8x128xf32>
    %256 = math.tanh %255 : vector<8x128xf32>
    %cst_92 = arith.constant 0.0666666701 : f32
    %257 = vector.broadcast %cst_92 : f32 to vector<8x128xf32>
    %258 = arith.mulf %257, %256 : vector<8x128xf32>
    %cst_93 = arith.constant 0.333333343 : f32
    %259 = vector.broadcast %cst_93 : f32 to vector<8x128xf32>
    %260 = arith.mulf %258, %259 : vector<8x128xf32>
    %261 = arith.addf %250, %260 : vector<8x128xf32>
    %cst_94 = arith.constant dense<0.000000e+00> : vector<8x128xf32>
    %262 = tpu.matmul %261, %0, %cst_94 {dimension_numbers = #tpu.dot_dimension_numbers<[1], [0], [0], [1], [0, 0, 1, 1], [], []>} : vector<8x128xf32>, vector<128x128xf32>, vector<8x128xf32> -> vector<8x128xf32>
    %263 = arith.addf %262, %3 : vector<8x128xf32>
    %264 = math.tanh %263 : vector<8x128xf32>
    %cst_95 = arith.constant 0.333333343 : f32
    %265 = vector.broadcast %cst_95 : f32 to vector<8x128xf32>
    %266 = arith.mulf %256, %265 : vector<8x128xf32>
    %267 = arith.subf %264, %266 : vector<8x128xf32>
    %cst_96 = arith.constant 0.0666666701 : f32
    %268 = vector.broadcast %cst_96 : f32 to vector<8x128xf32>
    %269 = arith.mulf %268, %267 : vector<8x128xf32>
    %270 = arith.addf %250, %269 : vector<8x128xf32>
    %cst_97 = arith.constant dense<0.000000e+00> : vector<8x128xf32>
    %271 = tpu.matmul %270, %0, %cst_97 {dimension_numbers = #tpu.dot_dimension_numbers<[1], [0], [0], [1], [0, 0, 1, 1], [], []>} : vector<8x128xf32>, vector<128x128xf32>, vector<8x128xf32> -> vector<8x128xf32>
    %272 = arith.addf %271, %3 : vector<8x128xf32>
    %273 = math.tanh %272 : vector<8x128xf32>
    %274 = arith.subf %256, %264 : vector<8x128xf32>
    %275 = arith.addf %274, %273 : vector<8x128xf32>
    %cst_98 = arith.constant 0.0666666701 : f32
    %276 = vector.broadcast %cst_98 : f32 to vector<8x128xf32>
    %277 = arith.mulf %276, %275 : vector<8x128xf32>
    %278 = arith.addf %250, %277 : vector<8x128xf32>
    %cst_99 = arith.constant dense<0.000000e+00> : vector<8x128xf32>
    %279 = tpu.matmul %278, %0, %cst_99 {dimension_numbers = #tpu.dot_dimension_numbers<[1], [0], [0], [1], [0, 0, 1, 1], [], []>} : vector<8x128xf32>, vector<128x128xf32>, vector<8x128xf32> -> vector<8x128xf32>
    %280 = arith.addf %279, %3 : vector<8x128xf32>
    %281 = math.tanh %280 : vector<8x128xf32>
    %282 = arith.addf %264, %273 : vector<8x128xf32>
    %cst_100 = arith.constant 3.000000e+00 : f32
    %283 = vector.broadcast %cst_100 : f32 to vector<8x128xf32>
    %284 = arith.mulf %283, %282 : vector<8x128xf32>
    %285 = arith.addf %256, %284 : vector<8x128xf32>
    %286 = arith.addf %285, %281 : vector<8x128xf32>
    %cst_101 = arith.constant 0.0666666701 : f32
    %287 = vector.broadcast %cst_101 : f32 to vector<8x128xf32>
    %288 = arith.mulf %287, %286 : vector<8x128xf32>
    %cst_102 = arith.constant 1.250000e-01 : f32
    %289 = vector.broadcast %cst_102 : f32 to vector<8x128xf32>
    %290 = arith.mulf %288, %289 : vector<8x128xf32>
    %291 = arith.addf %250, %290 : vector<8x128xf32>
    %c7 = arith.constant 7 : index
    %c0_103 = arith.constant 0 : index
    %c0_104 = arith.constant 0 : index
    %292 = vector.load %arg4[%c7, %c0_103, %c0_104] : memref<16x8x128xf32, #tpu.memory_space<vmem>>, vector<1x8x128xf32>
    %293 = vector.shape_cast %292 : vector<1x8x128xf32> to vector<8x128xf32>
    %294 = vector.shape_cast %291 : vector<8x128xf32> to vector<1x8x128xf32>
    tpu.vector_store %arg4[%c7, %c0_103, %c0_104], %294 {strides = array<i32>} : memref<16x8x128xf32, #tpu.memory_space<vmem>>, vector<1x8x128xf32>,
    %cst_105 = arith.constant dense<0.000000e+00> : vector<8x128xf32>
    %295 = tpu.matmul %291, %0, %cst_105 {dimension_numbers = #tpu.dot_dimension_numbers<[1], [0], [0], [1], [0, 0, 1, 1], [], []>} : vector<8x128xf32>, vector<128x128xf32>, vector<8x128xf32> -> vector<8x128xf32>
    %296 = arith.addf %295, %3 : vector<8x128xf32>
    %297 = math.tanh %296 : vector<8x128xf32>
    %cst_106 = arith.constant 0.0666666701 : f32
    %298 = vector.broadcast %cst_106 : f32 to vector<8x128xf32>
    %299 = arith.mulf %298, %297 : vector<8x128xf32>
    %cst_107 = arith.constant 0.333333343 : f32
    %300 = vector.broadcast %cst_107 : f32 to vector<8x128xf32>
    %301 = arith.mulf %299, %300 : vector<8x128xf32>
    %302 = arith.addf %291, %301 : vector<8x128xf32>
    %cst_108 = arith.constant dense<0.000000e+00> : vector<8x128xf32>
    %303 = tpu.matmul %302, %0, %cst_108 {dimension_numbers = #tpu.dot_dimension_numbers<[1], [0], [0], [1], [0, 0, 1, 1], [], []>} : vector<8x128xf32>, vector<128x128xf32>, vector<8x128xf32> -> vector<8x128xf32>
    %304 = arith.addf %303, %3 : vector<8x128xf32>
    %305 = math.tanh %304 : vector<8x128xf32>
    %cst_109 = arith.constant 0.333333343 : f32
    %306 = vector.broadcast %cst_109 : f32 to vector<8x128xf32>
    %307 = arith.mulf %297, %306 : vector<8x128xf32>
    %308 = arith.subf %305, %307 : vector<8x128xf32>
    %cst_110 = arith.constant 0.0666666701 : f32
    %309 = vector.broadcast %cst_110 : f32 to vector<8x128xf32>
    %310 = arith.mulf %309, %308 : vector<8x128xf32>
    %311 = arith.addf %291, %310 : vector<8x128xf32>
    %cst_111 = arith.constant dense<0.000000e+00> : vector<8x128xf32>
    %312 = tpu.matmul %311, %0, %cst_111 {dimension_numbers = #tpu.dot_dimension_numbers<[1], [0], [0], [1], [0, 0, 1, 1], [], []>} : vector<8x128xf32>, vector<128x128xf32>, vector<8x128xf32> -> vector<8x128xf32>
    %313 = arith.addf %312, %3 : vector<8x128xf32>
    %314 = math.tanh %313 : vector<8x128xf32>
    %315 = arith.subf %297, %305 : vector<8x128xf32>
    %316 = arith.addf %315, %314 : vector<8x128xf32>
    %cst_112 = arith.constant 0.0666666701 : f32
    %317 = vector.broadcast %cst_112 : f32 to vector<8x128xf32>
    %318 = arith.mulf %317, %316 : vector<8x128xf32>
    %319 = arith.addf %291, %318 : vector<8x128xf32>
    %cst_113 = arith.constant dense<0.000000e+00> : vector<8x128xf32>
    %320 = tpu.matmul %319, %0, %cst_113 {dimension_numbers = #tpu.dot_dimension_numbers<[1], [0], [0], [1], [0, 0, 1, 1], [], []>} : vector<8x128xf32>, vector<128x128xf32>, vector<8x128xf32> -> vector<8x128xf32>
    %321 = arith.addf %320, %3 : vector<8x128xf32>
    %322 = math.tanh %321 : vector<8x128xf32>
    %323 = arith.addf %305, %314 : vector<8x128xf32>
    %cst_114 = arith.constant 3.000000e+00 : f32
    %324 = vector.broadcast %cst_114 : f32 to vector<8x128xf32>
    %325 = arith.mulf %324, %323 : vector<8x128xf32>
    %326 = arith.addf %297, %325 : vector<8x128xf32>
    %327 = arith.addf %326, %322 : vector<8x128xf32>
    %cst_115 = arith.constant 0.0666666701 : f32
    %328 = vector.broadcast %cst_115 : f32 to vector<8x128xf32>
    %329 = arith.mulf %328, %327 : vector<8x128xf32>
    %cst_116 = arith.constant 1.250000e-01 : f32
    %330 = vector.broadcast %cst_116 : f32 to vector<8x128xf32>
    %331 = arith.mulf %329, %330 : vector<8x128xf32>
    %332 = arith.addf %291, %331 : vector<8x128xf32>
    %c8 = arith.constant 8 : index
    %c0_117 = arith.constant 0 : index
    %c0_118 = arith.constant 0 : index
    %333 = vector.load %arg4[%c8, %c0_117, %c0_118] : memref<16x8x128xf32, #tpu.memory_space<vmem>>, vector<1x8x128xf32>
    %334 = vector.shape_cast %333 : vector<1x8x128xf32> to vector<8x128xf32>
    %335 = vector.shape_cast %332 : vector<8x128xf32> to vector<1x8x128xf32>
    tpu.vector_store %arg4[%c8, %c0_117, %c0_118], %335 {strides = array<i32>} : memref<16x8x128xf32, #tpu.memory_space<vmem>>, vector<1x8x128xf32>,
    %cst_119 = arith.constant dense<0.000000e+00> : vector<8x128xf32>
    %336 = tpu.matmul %332, %0, %cst_119 {dimension_numbers = #tpu.dot_dimension_numbers<[1], [0], [0], [1], [0, 0, 1, 1], [], []>} : vector<8x128xf32>, vector<128x128xf32>, vector<8x128xf32> -> vector<8x128xf32>
    %337 = arith.addf %336, %3 : vector<8x128xf32>
    %338 = math.tanh %337 : vector<8x128xf32>
    %cst_120 = arith.constant 0.0666666701 : f32
    %339 = vector.broadcast %cst_120 : f32 to vector<8x128xf32>
    %340 = arith.mulf %339, %338 : vector<8x128xf32>
    %cst_121 = arith.constant 0.333333343 : f32
    %341 = vector.broadcast %cst_121 : f32 to vector<8x128xf32>
    %342 = arith.mulf %340, %341 : vector<8x128xf32>
    %343 = arith.addf %332, %342 : vector<8x128xf32>
    %cst_122 = arith.constant dense<0.000000e+00> : vector<8x128xf32>
    %344 = tpu.matmul %343, %0, %cst_122 {dimension_numbers = #tpu.dot_dimension_numbers<[1], [0], [0], [1], [0, 0, 1, 1], [], []>} : vector<8x128xf32>, vector<128x128xf32>, vector<8x128xf32> -> vector<8x128xf32>
    %345 = arith.addf %344, %3 : vector<8x128xf32>
    %346 = math.tanh %345 : vector<8x128xf32>
    %cst_123 = arith.constant 0.333333343 : f32
    %347 = vector.broadcast %cst_123 : f32 to vector<8x128xf32>
    %348 = arith.mulf %338, %347 : vector<8x128xf32>
    %349 = arith.subf %346, %348 : vector<8x128xf32>
    %cst_124 = arith.constant 0.0666666701 : f32
    %350 = vector.broadcast %cst_124 : f32 to vector<8x128xf32>
    %351 = arith.mulf %350, %349 : vector<8x128xf32>
    %352 = arith.addf %332, %351 : vector<8x128xf32>
    %cst_125 = arith.constant dense<0.000000e+00> : vector<8x128xf32>
    %353 = tpu.matmul %352, %0, %cst_125 {dimension_numbers = #tpu.dot_dimension_numbers<[1], [0], [0], [1], [0, 0, 1, 1], [], []>} : vector<8x128xf32>, vector<128x128xf32>, vector<8x128xf32> -> vector<8x128xf32>
    %354 = arith.addf %353, %3 : vector<8x128xf32>
    %355 = math.tanh %354 : vector<8x128xf32>
    %356 = arith.subf %338, %346 : vector<8x128xf32>
    %357 = arith.addf %356, %355 : vector<8x128xf32>
    %cst_126 = arith.constant 0.0666666701 : f32
    %358 = vector.broadcast %cst_126 : f32 to vector<8x128xf32>
    %359 = arith.mulf %358, %357 : vector<8x128xf32>
    %360 = arith.addf %332, %359 : vector<8x128xf32>
    %cst_127 = arith.constant dense<0.000000e+00> : vector<8x128xf32>
    %361 = tpu.matmul %360, %0, %cst_127 {dimension_numbers = #tpu.dot_dimension_numbers<[1], [0], [0], [1], [0, 0, 1, 1], [], []>} : vector<8x128xf32>, vector<128x128xf32>, vector<8x128xf32> -> vector<8x128xf32>
    %362 = arith.addf %361, %3 : vector<8x128xf32>
    %363 = math.tanh %362 : vector<8x128xf32>
    %364 = arith.addf %346, %355 : vector<8x128xf32>
    %cst_128 = arith.constant 3.000000e+00 : f32
    %365 = vector.broadcast %cst_128 : f32 to vector<8x128xf32>
    %366 = arith.mulf %365, %364 : vector<8x128xf32>
    %367 = arith.addf %338, %366 : vector<8x128xf32>
    %368 = arith.addf %367, %363 : vector<8x128xf32>
    %cst_129 = arith.constant 0.0666666701 : f32
    %369 = vector.broadcast %cst_129 : f32 to vector<8x128xf32>
    %370 = arith.mulf %369, %368 : vector<8x128xf32>
    %cst_130 = arith.constant 1.250000e-01 : f32
    %371 = vector.broadcast %cst_130 : f32 to vector<8x128xf32>
    %372 = arith.mulf %370, %371 : vector<8x128xf32>
    %373 = arith.addf %332, %372 : vector<8x128xf32>
    %c9 = arith.constant 9 : index
    %c0_131 = arith.constant 0 : index
    %c0_132 = arith.constant 0 : index
    %374 = vector.load %arg4[%c9, %c0_131, %c0_132] : memref<16x8x128xf32, #tpu.memory_space<vmem>>, vector<1x8x128xf32>
    %375 = vector.shape_cast %374 : vector<1x8x128xf32> to vector<8x128xf32>
    %376 = vector.shape_cast %373 : vector<8x128xf32> to vector<1x8x128xf32>
    tpu.vector_store %arg4[%c9, %c0_131, %c0_132], %376 {strides = array<i32>} : memref<16x8x128xf32, #tpu.memory_space<vmem>>, vector<1x8x128xf32>,
    %cst_133 = arith.constant dense<0.000000e+00> : vector<8x128xf32>
    %377 = tpu.matmul %373, %0, %cst_133 {dimension_numbers = #tpu.dot_dimension_numbers<[1], [0], [0], [1], [0, 0, 1, 1], [], []>} : vector<8x128xf32>, vector<128x128xf32>, vector<8x128xf32> -> vector<8x128xf32>
    %378 = arith.addf %377, %3 : vector<8x128xf32>
    %379 = math.tanh %378 : vector<8x128xf32>
    %cst_134 = arith.constant 0.0666666701 : f32
    %380 = vector.broadcast %cst_134 : f32 to vector<8x128xf32>
    %381 = arith.mulf %380, %379 : vector<8x128xf32>
    %cst_135 = arith.constant 0.333333343 : f32
    %382 = vector.broadcast %cst_135 : f32 to vector<8x128xf32>
    %383 = arith.mulf %381, %382 : vector<8x128xf32>
    %384 = arith.addf %373, %383 : vector<8x128xf32>
    %cst_136 = arith.constant dense<0.000000e+00> : vector<8x128xf32>
    %385 = tpu.matmul %384, %0, %cst_136 {dimension_numbers = #tpu.dot_dimension_numbers<[1], [0], [0], [1], [0, 0, 1, 1], [], []>} : vector<8x128xf32>, vector<128x128xf32>, vector<8x128xf32> -> vector<8x128xf32>
    %386 = arith.addf %385, %3 : vector<8x128xf32>
    %387 = math.tanh %386 : vector<8x128xf32>
    %cst_137 = arith.constant 0.333333343 : f32
    %388 = vector.broadcast %cst_137 : f32 to vector<8x128xf32>
    %389 = arith.mulf %379, %388 : vector<8x128xf32>
    %390 = arith.subf %387, %389 : vector<8x128xf32>
    %cst_138 = arith.constant 0.0666666701 : f32
    %391 = vector.broadcast %cst_138 : f32 to vector<8x128xf32>
    %392 = arith.mulf %391, %390 : vector<8x128xf32>
    %393 = arith.addf %373, %392 : vector<8x128xf32>
    %cst_139 = arith.constant dense<0.000000e+00> : vector<8x128xf32>
    %394 = tpu.matmul %393, %0, %cst_139 {dimension_numbers = #tpu.dot_dimension_numbers<[1], [0], [0], [1], [0, 0, 1, 1], [], []>} : vector<8x128xf32>, vector<128x128xf32>, vector<8x128xf32> -> vector<8x128xf32>
    %395 = arith.addf %394, %3 : vector<8x128xf32>
    %396 = math.tanh %395 : vector<8x128xf32>
    %397 = arith.subf %379, %387 : vector<8x128xf32>
    %398 = arith.addf %397, %396 : vector<8x128xf32>
    %cst_140 = arith.constant 0.0666666701 : f32
    %399 = vector.broadcast %cst_140 : f32 to vector<8x128xf32>
    %400 = arith.mulf %399, %398 : vector<8x128xf32>
    %401 = arith.addf %373, %400 : vector<8x128xf32>
    %cst_141 = arith.constant dense<0.000000e+00> : vector<8x128xf32>
    %402 = tpu.matmul %401, %0, %cst_141 {dimension_numbers = #tpu.dot_dimension_numbers<[1], [0], [0], [1], [0, 0, 1, 1], [], []>} : vector<8x128xf32>, vector<128x128xf32>, vector<8x128xf32> -> vector<8x128xf32>
    %403 = arith.addf %402, %3 : vector<8x128xf32>
    %404 = math.tanh %403 : vector<8x128xf32>
    %405 = arith.addf %387, %396 : vector<8x128xf32>
    %cst_142 = arith.constant 3.000000e+00 : f32
    %406 = vector.broadcast %cst_142 : f32 to vector<8x128xf32>
    %407 = arith.mulf %406, %405 : vector<8x128xf32>
    %408 = arith.addf %379, %407 : vector<8x128xf32>
    %409 = arith.addf %408, %404 : vector<8x128xf32>
    %cst_143 = arith.constant 0.0666666701 : f32
    %410 = vector.broadcast %cst_143 : f32 to vector<8x128xf32>
    %411 = arith.mulf %410, %409 : vector<8x128xf32>
    %cst_144 = arith.constant 1.250000e-01 : f32
    %412 = vector.broadcast %cst_144 : f32 to vector<8x128xf32>
    %413 = arith.mulf %411, %412 : vector<8x128xf32>
    %414 = arith.addf %373, %413 : vector<8x128xf32>
    %c10 = arith.constant 10 : index
    %c0_145 = arith.constant 0 : index
    %c0_146 = arith.constant 0 : index
    %415 = vector.load %arg4[%c10, %c0_145, %c0_146] : memref<16x8x128xf32, #tpu.memory_space<vmem>>, vector<1x8x128xf32>
    %416 = vector.shape_cast %415 : vector<1x8x128xf32> to vector<8x128xf32>
    %417 = vector.shape_cast %414 : vector<8x128xf32> to vector<1x8x128xf32>
    tpu.vector_store %arg4[%c10, %c0_145, %c0_146], %417 {strides = array<i32>} : memref<16x8x128xf32, #tpu.memory_space<vmem>>, vector<1x8x128xf32>,
    %cst_147 = arith.constant dense<0.000000e+00> : vector<8x128xf32>
    %418 = tpu.matmul %414, %0, %cst_147 {dimension_numbers = #tpu.dot_dimension_numbers<[1], [0], [0], [1], [0, 0, 1, 1], [], []>} : vector<8x128xf32>, vector<128x128xf32>, vector<8x128xf32> -> vector<8x128xf32>
    %419 = arith.addf %418, %3 : vector<8x128xf32>
    %420 = math.tanh %419 : vector<8x128xf32>
    %cst_148 = arith.constant 0.0666666701 : f32
    %421 = vector.broadcast %cst_148 : f32 to vector<8x128xf32>
    %422 = arith.mulf %421, %420 : vector<8x128xf32>
    %cst_149 = arith.constant 0.333333343 : f32
    %423 = vector.broadcast %cst_149 : f32 to vector<8x128xf32>
    %424 = arith.mulf %422, %423 : vector<8x128xf32>
    %425 = arith.addf %414, %424 : vector<8x128xf32>
    %cst_150 = arith.constant dense<0.000000e+00> : vector<8x128xf32>
    %426 = tpu.matmul %425, %0, %cst_150 {dimension_numbers = #tpu.dot_dimension_numbers<[1], [0], [0], [1], [0, 0, 1, 1], [], []>} : vector<8x128xf32>, vector<128x128xf32>, vector<8x128xf32> -> vector<8x128xf32>
    %427 = arith.addf %426, %3 : vector<8x128xf32>
    %428 = math.tanh %427 : vector<8x128xf32>
    %cst_151 = arith.constant 0.333333343 : f32
    %429 = vector.broadcast %cst_151 : f32 to vector<8x128xf32>
    %430 = arith.mulf %420, %429 : vector<8x128xf32>
    %431 = arith.subf %428, %430 : vector<8x128xf32>
    %cst_152 = arith.constant 0.0666666701 : f32
    %432 = vector.broadcast %cst_152 : f32 to vector<8x128xf32>
    %433 = arith.mulf %432, %431 : vector<8x128xf32>
    %434 = arith.addf %414, %433 : vector<8x128xf32>
    %cst_153 = arith.constant dense<0.000000e+00> : vector<8x128xf32>
    %435 = tpu.matmul %434, %0, %cst_153 {dimension_numbers = #tpu.dot_dimension_numbers<[1], [0], [0], [1], [0, 0, 1, 1], [], []>} : vector<8x128xf32>, vector<128x128xf32>, vector<8x128xf32> -> vector<8x128xf32>
    %436 = arith.addf %435, %3 : vector<8x128xf32>
    %437 = math.tanh %436 : vector<8x128xf32>
    %438 = arith.subf %420, %428 : vector<8x128xf32>
    %439 = arith.addf %438, %437 : vector<8x128xf32>
    %cst_154 = arith.constant 0.0666666701 : f32
    %440 = vector.broadcast %cst_154 : f32 to vector<8x128xf32>
    %441 = arith.mulf %440, %439 : vector<8x128xf32>
    %442 = arith.addf %414, %441 : vector<8x128xf32>
    %cst_155 = arith.constant dense<0.000000e+00> : vector<8x128xf32>
    %443 = tpu.matmul %442, %0, %cst_155 {dimension_numbers = #tpu.dot_dimension_numbers<[1], [0], [0], [1], [0, 0, 1, 1], [], []>} : vector<8x128xf32>, vector<128x128xf32>, vector<8x128xf32> -> vector<8x128xf32>
    %444 = arith.addf %443, %3 : vector<8x128xf32>
    %445 = math.tanh %444 : vector<8x128xf32>
    %446 = arith.addf %428, %437 : vector<8x128xf32>
    %cst_156 = arith.constant 3.000000e+00 : f32
    %447 = vector.broadcast %cst_156 : f32 to vector<8x128xf32>
    %448 = arith.mulf %447, %446 : vector<8x128xf32>
    %449 = arith.addf %420, %448 : vector<8x128xf32>
    %450 = arith.addf %449, %445 : vector<8x128xf32>
    %cst_157 = arith.constant 0.0666666701 : f32
    %451 = vector.broadcast %cst_157 : f32 to vector<8x128xf32>
    %452 = arith.mulf %451, %450 : vector<8x128xf32>
    %cst_158 = arith.constant 1.250000e-01 : f32
    %453 = vector.broadcast %cst_158 : f32 to vector<8x128xf32>
    %454 = arith.mulf %452, %453 : vector<8x128xf32>
    %455 = arith.addf %414, %454 : vector<8x128xf32>
    %c11 = arith.constant 11 : index
    %c0_159 = arith.constant 0 : index
    %c0_160 = arith.constant 0 : index
    %456 = vector.load %arg4[%c11, %c0_159, %c0_160] : memref<16x8x128xf32, #tpu.memory_space<vmem>>, vector<1x8x128xf32>
    %457 = vector.shape_cast %456 : vector<1x8x128xf32> to vector<8x128xf32>
    %458 = vector.shape_cast %455 : vector<8x128xf32> to vector<1x8x128xf32>
    tpu.vector_store %arg4[%c11, %c0_159, %c0_160], %458 {strides = array<i32>} : memref<16x8x128xf32, #tpu.memory_space<vmem>>, vector<1x8x128xf32>,
    %cst_161 = arith.constant dense<0.000000e+00> : vector<8x128xf32>
    %459 = tpu.matmul %455, %0, %cst_161 {dimension_numbers = #tpu.dot_dimension_numbers<[1], [0], [0], [1], [0, 0, 1, 1], [], []>} : vector<8x128xf32>, vector<128x128xf32>, vector<8x128xf32> -> vector<8x128xf32>
    %460 = arith.addf %459, %3 : vector<8x128xf32>
    %461 = math.tanh %460 : vector<8x128xf32>
    %cst_162 = arith.constant 0.0666666701 : f32
    %462 = vector.broadcast %cst_162 : f32 to vector<8x128xf32>
    %463 = arith.mulf %462, %461 : vector<8x128xf32>
    %cst_163 = arith.constant 0.333333343 : f32
    %464 = vector.broadcast %cst_163 : f32 to vector<8x128xf32>
    %465 = arith.mulf %463, %464 : vector<8x128xf32>
    %466 = arith.addf %455, %465 : vector<8x128xf32>
    %cst_164 = arith.constant dense<0.000000e+00> : vector<8x128xf32>
    %467 = tpu.matmul %466, %0, %cst_164 {dimension_numbers = #tpu.dot_dimension_numbers<[1], [0], [0], [1], [0, 0, 1, 1], [], []>} : vector<8x128xf32>, vector<128x128xf32>, vector<8x128xf32> -> vector<8x128xf32>
    %468 = arith.addf %467, %3 : vector<8x128xf32>
    %469 = math.tanh %468 : vector<8x128xf32>
    %cst_165 = arith.constant 0.333333343 : f32
    %470 = vector.broadcast %cst_165 : f32 to vector<8x128xf32>
    %471 = arith.mulf %461, %470 : vector<8x128xf32>
    %472 = arith.subf %469, %471 : vector<8x128xf32>
    %cst_166 = arith.constant 0.0666666701 : f32
    %473 = vector.broadcast %cst_166 : f32 to vector<8x128xf32>
    %474 = arith.mulf %473, %472 : vector<8x128xf32>
    %475 = arith.addf %455, %474 : vector<8x128xf32>
    %cst_167 = arith.constant dense<0.000000e+00> : vector<8x128xf32>
    %476 = tpu.matmul %475, %0, %cst_167 {dimension_numbers = #tpu.dot_dimension_numbers<[1], [0], [0], [1], [0, 0, 1, 1], [], []>} : vector<8x128xf32>, vector<128x128xf32>, vector<8x128xf32> -> vector<8x128xf32>
    %477 = arith.addf %476, %3 : vector<8x128xf32>
    %478 = math.tanh %477 : vector<8x128xf32>
    %479 = arith.subf %461, %469 : vector<8x128xf32>
    %480 = arith.addf %479, %478 : vector<8x128xf32>
    %cst_168 = arith.constant 0.0666666701 : f32
    %481 = vector.broadcast %cst_168 : f32 to vector<8x128xf32>
    %482 = arith.mulf %481, %480 : vector<8x128xf32>
    %483 = arith.addf %455, %482 : vector<8x128xf32>
    %cst_169 = arith.constant dense<0.000000e+00> : vector<8x128xf32>
    %484 = tpu.matmul %483, %0, %cst_169 {dimension_numbers = #tpu.dot_dimension_numbers<[1], [0], [0], [1], [0, 0, 1, 1], [], []>} : vector<8x128xf32>, vector<128x128xf32>, vector<8x128xf32> -> vector<8x128xf32>
    %485 = arith.addf %484, %3 : vector<8x128xf32>
    %486 = math.tanh %485 : vector<8x128xf32>
    %487 = arith.addf %469, %478 : vector<8x128xf32>
    %cst_170 = arith.constant 3.000000e+00 : f32
    %488 = vector.broadcast %cst_170 : f32 to vector<8x128xf32>
    %489 = arith.mulf %488, %487 : vector<8x128xf32>
    %490 = arith.addf %461, %489 : vector<8x128xf32>
    %491 = arith.addf %490, %486 : vector<8x128xf32>
    %cst_171 = arith.constant 0.0666666701 : f32
    %492 = vector.broadcast %cst_171 : f32 to vector<8x128xf32>
    %493 = arith.mulf %492, %491 : vector<8x128xf32>
    %cst_172 = arith.constant 1.250000e-01 : f32
    %494 = vector.broadcast %cst_172 : f32 to vector<8x128xf32>
    %495 = arith.mulf %493, %494 : vector<8x128xf32>
    %496 = arith.addf %455, %495 : vector<8x128xf32>
    %c12 = arith.constant 12 : index
    %c0_173 = arith.constant 0 : index
    %c0_174 = arith.constant 0 : index
    %497 = vector.load %arg4[%c12, %c0_173, %c0_174] : memref<16x8x128xf32, #tpu.memory_space<vmem>>, vector<1x8x128xf32>
    %498 = vector.shape_cast %497 : vector<1x8x128xf32> to vector<8x128xf32>
    %499 = vector.shape_cast %496 : vector<8x128xf32> to vector<1x8x128xf32>
    tpu.vector_store %arg4[%c12, %c0_173, %c0_174], %499 {strides = array<i32>} : memref<16x8x128xf32, #tpu.memory_space<vmem>>, vector<1x8x128xf32>,
    %cst_175 = arith.constant dense<0.000000e+00> : vector<8x128xf32>
    %500 = tpu.matmul %496, %0, %cst_175 {dimension_numbers = #tpu.dot_dimension_numbers<[1], [0], [0], [1], [0, 0, 1, 1], [], []>} : vector<8x128xf32>, vector<128x128xf32>, vector<8x128xf32> -> vector<8x128xf32>
    %501 = arith.addf %500, %3 : vector<8x128xf32>
    %502 = math.tanh %501 : vector<8x128xf32>
    %cst_176 = arith.constant 0.0666666701 : f32
    %503 = vector.broadcast %cst_176 : f32 to vector<8x128xf32>
    %504 = arith.mulf %503, %502 : vector<8x128xf32>
    %cst_177 = arith.constant 0.333333343 : f32
    %505 = vector.broadcast %cst_177 : f32 to vector<8x128xf32>
    %506 = arith.mulf %504, %505 : vector<8x128xf32>
    %507 = arith.addf %496, %506 : vector<8x128xf32>
    %cst_178 = arith.constant dense<0.000000e+00> : vector<8x128xf32>
    %508 = tpu.matmul %507, %0, %cst_178 {dimension_numbers = #tpu.dot_dimension_numbers<[1], [0], [0], [1], [0, 0, 1, 1], [], []>} : vector<8x128xf32>, vector<128x128xf32>, vector<8x128xf32> -> vector<8x128xf32>
    %509 = arith.addf %508, %3 : vector<8x128xf32>
    %510 = math.tanh %509 : vector<8x128xf32>
    %cst_179 = arith.constant 0.333333343 : f32
    %511 = vector.broadcast %cst_179 : f32 to vector<8x128xf32>
    %512 = arith.mulf %502, %511 : vector<8x128xf32>
    %513 = arith.subf %510, %512 : vector<8x128xf32>
    %cst_180 = arith.constant 0.0666666701 : f32
    %514 = vector.broadcast %cst_180 : f32 to vector<8x128xf32>
    %515 = arith.mulf %514, %513 : vector<8x128xf32>
    %516 = arith.addf %496, %515 : vector<8x128xf32>
    %cst_181 = arith.constant dense<0.000000e+00> : vector<8x128xf32>
    %517 = tpu.matmul %516, %0, %cst_181 {dimension_numbers = #tpu.dot_dimension_numbers<[1], [0], [0], [1], [0, 0, 1, 1], [], []>} : vector<8x128xf32>, vector<128x128xf32>, vector<8x128xf32> -> vector<8x128xf32>
    %518 = arith.addf %517, %3 : vector<8x128xf32>
    %519 = math.tanh %518 : vector<8x128xf32>
    %520 = arith.subf %502, %510 : vector<8x128xf32>
    %521 = arith.addf %520, %519 : vector<8x128xf32>
    %cst_182 = arith.constant 0.0666666701 : f32
    %522 = vector.broadcast %cst_182 : f32 to vector<8x128xf32>
    %523 = arith.mulf %522, %521 : vector<8x128xf32>
    %524 = arith.addf %496, %523 : vector<8x128xf32>
    %cst_183 = arith.constant dense<0.000000e+00> : vector<8x128xf32>
    %525 = tpu.matmul %524, %0, %cst_183 {dimension_numbers = #tpu.dot_dimension_numbers<[1], [0], [0], [1], [0, 0, 1, 1], [], []>} : vector<8x128xf32>, vector<128x128xf32>, vector<8x128xf32> -> vector<8x128xf32>
    %526 = arith.addf %525, %3 : vector<8x128xf32>
    %527 = math.tanh %526 : vector<8x128xf32>
    %528 = arith.addf %510, %519 : vector<8x128xf32>
    %cst_184 = arith.constant 3.000000e+00 : f32
    %529 = vector.broadcast %cst_184 : f32 to vector<8x128xf32>
    %530 = arith.mulf %529, %528 : vector<8x128xf32>
    %531 = arith.addf %502, %530 : vector<8x128xf32>
    %532 = arith.addf %531, %527 : vector<8x128xf32>
    %cst_185 = arith.constant 0.0666666701 : f32
    %533 = vector.broadcast %cst_185 : f32 to vector<8x128xf32>
    %534 = arith.mulf %533, %532 : vector<8x128xf32>
    %cst_186 = arith.constant 1.250000e-01 : f32
    %535 = vector.broadcast %cst_186 : f32 to vector<8x128xf32>
    %536 = arith.mulf %534, %535 : vector<8x128xf32>
    %537 = arith.addf %496, %536 : vector<8x128xf32>
    %c13 = arith.constant 13 : index
    %c0_187 = arith.constant 0 : index
    %c0_188 = arith.constant 0 : index
    %538 = vector.load %arg4[%c13, %c0_187, %c0_188] : memref<16x8x128xf32, #tpu.memory_space<vmem>>, vector<1x8x128xf32>
    %539 = vector.shape_cast %538 : vector<1x8x128xf32> to vector<8x128xf32>
    %540 = vector.shape_cast %537 : vector<8x128xf32> to vector<1x8x128xf32>
    tpu.vector_store %arg4[%c13, %c0_187, %c0_188], %540 {strides = array<i32>} : memref<16x8x128xf32, #tpu.memory_space<vmem>>, vector<1x8x128xf32>,
    %cst_189 = arith.constant dense<0.000000e+00> : vector<8x128xf32>
    %541 = tpu.matmul %537, %0, %cst_189 {dimension_numbers = #tpu.dot_dimension_numbers<[1], [0], [0], [1], [0, 0, 1, 1], [], []>} : vector<8x128xf32>, vector<128x128xf32>, vector<8x128xf32> -> vector<8x128xf32>
    %542 = arith.addf %541, %3 : vector<8x128xf32>
    %543 = math.tanh %542 : vector<8x128xf32>
    %cst_190 = arith.constant 0.0666666701 : f32
    %544 = vector.broadcast %cst_190 : f32 to vector<8x128xf32>
    %545 = arith.mulf %544, %543 : vector<8x128xf32>
    %cst_191 = arith.constant 0.333333343 : f32
    %546 = vector.broadcast %cst_191 : f32 to vector<8x128xf32>
    %547 = arith.mulf %545, %546 : vector<8x128xf32>
    %548 = arith.addf %537, %547 : vector<8x128xf32>
    %cst_192 = arith.constant dense<0.000000e+00> : vector<8x128xf32>
    %549 = tpu.matmul %548, %0, %cst_192 {dimension_numbers = #tpu.dot_dimension_numbers<[1], [0], [0], [1], [0, 0, 1, 1], [], []>} : vector<8x128xf32>, vector<128x128xf32>, vector<8x128xf32> -> vector<8x128xf32>
    %550 = arith.addf %549, %3 : vector<8x128xf32>
    %551 = math.tanh %550 : vector<8x128xf32>
    %cst_193 = arith.constant 0.333333343 : f32
    %552 = vector.broadcast %cst_193 : f32 to vector<8x128xf32>
    %553 = arith.mulf %543, %552 : vector<8x128xf32>
    %554 = arith.subf %551, %553 : vector<8x128xf32>
    %cst_194 = arith.constant 0.0666666701 : f32
    %555 = vector.broadcast %cst_194 : f32 to vector<8x128xf32>
    %556 = arith.mulf %555, %554 : vector<8x128xf32>
    %557 = arith.addf %537, %556 : vector<8x128xf32>
    %cst_195 = arith.constant dense<0.000000e+00> : vector<8x128xf32>
    %558 = tpu.matmul %557, %0, %cst_195 {dimension_numbers = #tpu.dot_dimension_numbers<[1], [0], [0], [1], [0, 0, 1, 1], [], []>} : vector<8x128xf32>, vector<128x128xf32>, vector<8x128xf32> -> vector<8x128xf32>
    %559 = arith.addf %558, %3 : vector<8x128xf32>
    %560 = math.tanh %559 : vector<8x128xf32>
    %561 = arith.subf %543, %551 : vector<8x128xf32>
    %562 = arith.addf %561, %560 : vector<8x128xf32>
    %cst_196 = arith.constant 0.0666666701 : f32
    %563 = vector.broadcast %cst_196 : f32 to vector<8x128xf32>
    %564 = arith.mulf %563, %562 : vector<8x128xf32>
    %565 = arith.addf %537, %564 : vector<8x128xf32>
    %cst_197 = arith.constant dense<0.000000e+00> : vector<8x128xf32>
    %566 = tpu.matmul %565, %0, %cst_197 {dimension_numbers = #tpu.dot_dimension_numbers<[1], [0], [0], [1], [0, 0, 1, 1], [], []>} : vector<8x128xf32>, vector<128x128xf32>, vector<8x128xf32> -> vector<8x128xf32>
    %567 = arith.addf %566, %3 : vector<8x128xf32>
    %568 = math.tanh %567 : vector<8x128xf32>
    %569 = arith.addf %551, %560 : vector<8x128xf32>
    %cst_198 = arith.constant 3.000000e+00 : f32
    %570 = vector.broadcast %cst_198 : f32 to vector<8x128xf32>
    %571 = arith.mulf %570, %569 : vector<8x128xf32>
    %572 = arith.addf %543, %571 : vector<8x128xf32>
    %573 = arith.addf %572, %568 : vector<8x128xf32>
    %cst_199 = arith.constant 0.0666666701 : f32
    %574 = vector.broadcast %cst_199 : f32 to vector<8x128xf32>
    %575 = arith.mulf %574, %573 : vector<8x128xf32>
    %cst_200 = arith.constant 1.250000e-01 : f32
    %576 = vector.broadcast %cst_200 : f32 to vector<8x128xf32>
    %577 = arith.mulf %575, %576 : vector<8x128xf32>
    %578 = arith.addf %537, %577 : vector<8x128xf32>
    %c14 = arith.constant 14 : index
    %c0_201 = arith.constant 0 : index
    %c0_202 = arith.constant 0 : index
    %579 = vector.load %arg4[%c14, %c0_201, %c0_202] : memref<16x8x128xf32, #tpu.memory_space<vmem>>, vector<1x8x128xf32>
    %580 = vector.shape_cast %579 : vector<1x8x128xf32> to vector<8x128xf32>
    %581 = vector.shape_cast %578 : vector<8x128xf32> to vector<1x8x128xf32>
    tpu.vector_store %arg4[%c14, %c0_201, %c0_202], %581 {strides = array<i32>} : memref<16x8x128xf32, #tpu.memory_space<vmem>>, vector<1x8x128xf32>,
    %cst_203 = arith.constant dense<0.000000e+00> : vector<8x128xf32>
    %582 = tpu.matmul %578, %0, %cst_203 {dimension_numbers = #tpu.dot_dimension_numbers<[1], [0], [0], [1], [0, 0, 1, 1], [], []>} : vector<8x128xf32>, vector<128x128xf32>, vector<8x128xf32> -> vector<8x128xf32>
    %583 = arith.addf %582, %3 : vector<8x128xf32>
    %584 = math.tanh %583 : vector<8x128xf32>
    %cst_204 = arith.constant 0.0666666701 : f32
    %585 = vector.broadcast %cst_204 : f32 to vector<8x128xf32>
    %586 = arith.mulf %585, %584 : vector<8x128xf32>
    %cst_205 = arith.constant 0.333333343 : f32
    %587 = vector.broadcast %cst_205 : f32 to vector<8x128xf32>
    %588 = arith.mulf %586, %587 : vector<8x128xf32>
    %589 = arith.addf %578, %588 : vector<8x128xf32>
    %cst_206 = arith.constant dense<0.000000e+00> : vector<8x128xf32>
    %590 = tpu.matmul %589, %0, %cst_206 {dimension_numbers = #tpu.dot_dimension_numbers<[1], [0], [0], [1], [0, 0, 1, 1], [], []>} : vector<8x128xf32>, vector<128x128xf32>, vector<8x128xf32> -> vector<8x128xf32>
    %591 = arith.addf %590, %3 : vector<8x128xf32>
    %592 = math.tanh %591 : vector<8x128xf32>
    %cst_207 = arith.constant 0.333333343 : f32
    %593 = vector.broadcast %cst_207 : f32 to vector<8x128xf32>
    %594 = arith.mulf %584, %593 : vector<8x128xf32>
    %595 = arith.subf %592, %594 : vector<8x128xf32>
    %cst_208 = arith.constant 0.0666666701 : f32
    %596 = vector.broadcast %cst_208 : f32 to vector<8x128xf32>
    %597 = arith.mulf %596, %595 : vector<8x128xf32>
    %598 = arith.addf %578, %597 : vector<8x128xf32>
    %cst_209 = arith.constant dense<0.000000e+00> : vector<8x128xf32>
    %599 = tpu.matmul %598, %0, %cst_209 {dimension_numbers = #tpu.dot_dimension_numbers<[1], [0], [0], [1], [0, 0, 1, 1], [], []>} : vector<8x128xf32>, vector<128x128xf32>, vector<8x128xf32> -> vector<8x128xf32>
    %600 = arith.addf %599, %3 : vector<8x128xf32>
    %601 = math.tanh %600 : vector<8x128xf32>
    %602 = arith.subf %584, %592 : vector<8x128xf32>
    %603 = arith.addf %602, %601 : vector<8x128xf32>
    %cst_210 = arith.constant 0.0666666701 : f32
    %604 = vector.broadcast %cst_210 : f32 to vector<8x128xf32>
    %605 = arith.mulf %604, %603 : vector<8x128xf32>
    %606 = arith.addf %578, %605 : vector<8x128xf32>
    %cst_211 = arith.constant dense<0.000000e+00> : vector<8x128xf32>
    %607 = tpu.matmul %606, %0, %cst_211 {dimension_numbers = #tpu.dot_dimension_numbers<[1], [0], [0], [1], [0, 0, 1, 1], [], []>} : vector<8x128xf32>, vector<128x128xf32>, vector<8x128xf32> -> vector<8x128xf32>
    %608 = arith.addf %607, %3 : vector<8x128xf32>
    %609 = math.tanh %608 : vector<8x128xf32>
    %610 = arith.addf %592, %601 : vector<8x128xf32>
    %cst_212 = arith.constant 3.000000e+00 : f32
    %611 = vector.broadcast %cst_212 : f32 to vector<8x128xf32>
    %612 = arith.mulf %611, %610 : vector<8x128xf32>
    %613 = arith.addf %584, %612 : vector<8x128xf32>
    %614 = arith.addf %613, %609 : vector<8x128xf32>
    %cst_213 = arith.constant 0.0666666701 : f32
    %615 = vector.broadcast %cst_213 : f32 to vector<8x128xf32>
    %616 = arith.mulf %615, %614 : vector<8x128xf32>
    %cst_214 = arith.constant 1.250000e-01 : f32
    %617 = vector.broadcast %cst_214 : f32 to vector<8x128xf32>
    %618 = arith.mulf %616, %617 : vector<8x128xf32>
    %619 = arith.addf %578, %618 : vector<8x128xf32>
    %c15 = arith.constant 15 : index
    %c0_215 = arith.constant 0 : index
    %c0_216 = arith.constant 0 : index
    %620 = vector.load %arg4[%c15, %c0_215, %c0_216] : memref<16x8x128xf32, #tpu.memory_space<vmem>>, vector<1x8x128xf32>
    %621 = vector.shape_cast %620 : vector<1x8x128xf32> to vector<8x128xf32>
    %622 = vector.shape_cast %619 : vector<8x128xf32> to vector<1x8x128xf32>
    tpu.vector_store %arg4[%c15, %c0_215, %c0_216], %622 {strides = array<i32>} : memref<16x8x128xf32, #tpu.memory_space<vmem>>, vector<1x8x128xf32>,
    return
  }
  func.func @transform_0(%arg0: i32) -> (i32, i32) {
    %c0_i32 = arith.constant 0 : i32
    %c0_i32_0 = arith.constant 0 : i32
    return %arg0, %c0_i32 : i32, i32
  }
  func.func @transform_1(%arg0: i32) -> (i32, i32) {
    %c0_i32 = arith.constant 0 : i32
    %c0_i32_0 = arith.constant 0 : i32
    %c0_i32_1 = arith.constant 0 : i32
    return %c0_i32, %c0_i32_0 : i32, i32
  }
  func.func @transform_2(%arg0: i32) -> (i32, i32) {
    %c0_i32 = arith.constant 0 : i32
    %c0_i32_0 = arith.constant 0 : i32
    %c0_i32_1 = arith.constant 0 : i32
    return %c0_i32, %c0_i32_0 : i32, i32
  }
  func.func @transform_3(%arg0: i32) -> (i32, i32, i32) {
    %c0_i32 = arith.constant 0 : i32
    %c0_i32_0 = arith.constant 0 : i32
    %c0_i32_1 = arith.constant 0 : i32
    return %c0_i32, %arg0, %c0_i32_0 : i32, i32, i32
  }
}

</mosaic_0001>

<llo_original>
// kernel: tpu_custom_call.1
$region0: #{tpu_custom_call.1}
  #allocation0 [shape = 'u32[]', space=smem, size = 0x4, offset = 0x4, fixed_abs, tag = 'smem constant byte address 0x4 - core index']
  #allocation1 [shape = 'u32[144,128]{1,0:T(1,128)}', space=vmem, size = 0x12000, scoped, tag = 'internal scratch']
  %s0 = inlined_call_operand.hbm [shape: f32[8,128], index: 0, kind: input, shape index: {}]
  %s1 = inlined_call_operand.hbm [shape: f32[128,128], index: 1, kind: input, shape index: {}]
  %s2 = inlined_call_operand.vmem [shape: f32[1,128], index: 2, kind: input, shape index: {}]
  %s3 = inlined_call_operand.hbm [shape: f32[16,8,128], index: 3, kind: output, shape index: {}]
  %s4 = sld [smem:[#allocation0]]
  $region30: #{tpu_custom_call.1} parent=0
    _
  %s6 = ssub.s32 1, %s4
  %s7 = scalar_select 0, %s6, %s4
  $region1: #{tpu_custom_call.1} parent=0
    #allocation2 [shape = 'u8[4096]{0}', space=vmem, size = 0x1000, scoped, tag = 'input window, operand 0, single buffered']
    #allocation3 [shape = 's32[1]{0}', space=sflag, size = 0x4, scoped, tag = 'scoped memory for tpu_custom_call.1']
    #allocation4 [shape = 's32[1]{0}', space=sflag, size = 0x4, scoped, tag = 'scoped memory for tpu_custom_call.1']
    #allocation5 [shape = 'u8[65536]{0}', space=vmem, size = 0x10000, scoped, tag = 'input window, operand 1, single buffered']
    #allocation6 [shape = 's32[1]{0}', space=sflag, size = 0x4, scoped, tag = 'scoped memory for tpu_custom_call.1']
    #allocation7 [shape = 'u8[65536]{0}', space=vmem, size = 0x10000, scoped, tag = 'output window, operand 0, single buffered']
    %8 = vsyncpa [#allocation3], 0
    %9 = vsyncpa [#allocation6], 0
    %10 = vsyncpa [#allocation4], 0
    // Predicated region
    $region2: #{tpu_custom_call.1} parent=1 // pred_check
      _
    $region3: #{tpu_custom_call.1} parent=1 // pred_check_branch
      %12 = sbr.rel (0) target = $region5
    $region4: #{tpu_custom_call.1} parent=1 // pred_region
      %s14 = ssub.s32 128, 128
      %15 = vsyncadd [#allocation3], %s14
      %s17 = sshll.u32 [#allocation2], 4
      %s18 = int_to_ptr.vmem [resolvable:$true] %s17
      %20 = dma.hbm_to_vmem [thread:$0]  %s0, 128, %s18, [#allocation3]
    $region5: #{tpu_custom_call.1} parent=1 // pred_fallthru
      _
    // Predicated region
    $region6: #{tpu_custom_call.1} parent=1 // pred_check
      _
    $region7: #{tpu_custom_call.1} parent=1 // pred_check_branch
      %22 = sbr.rel (0) target = $region9
    $region8: #{tpu_custom_call.1} parent=1 // pred_region
      %s24 = ssub.s32 2048, 2048
      %25 = vsyncadd [#allocation6], %s24
      %s26 = sshll.u32 [#allocation5], 4
      %s27 = int_to_ptr.vmem [resolvable:$true] %s26
      %32 = dma.hbm_to_vmem [thread:$0]  %s1, 2048, %s27, [#allocation6], 128, 128, 8
    $region9: #{tpu_custom_call.1} parent=1 // pred_fallthru
      _
    // Predicated region
    $region10: #{tpu_custom_call.1} parent=1 // pred_check
      _
    $region11: #{tpu_custom_call.1} parent=1 // pred_check_branch
      %34 = sbr.rel (0) target = $region13
    $region12: #{tpu_custom_call.1} parent=1 // pred_region
      _
    $region13: #{tpu_custom_call.1} parent=1 // pred_fallthru
      _
    // Predicated region
    $region14: #{tpu_custom_call.1} parent=1 // pred_check
      _
    $region15: #{tpu_custom_call.1} parent=1 // pred_check_branch
      %36 = sbr.rel (0) target = $region17
    $region16: #{tpu_custom_call.1} parent=1 // pred_region
      %37 = dma.done [#allocation3], 128
    $region17: #{tpu_custom_call.1} parent=1 // pred_fallthru
      _
    // Predicated region
    $region18: #{tpu_custom_call.1} parent=1 // pred_check
      _
    $region19: #{tpu_custom_call.1} parent=1 // pred_check_branch
      %39 = sbr.rel (0) target = $region21
    $region20: #{tpu_custom_call.1} parent=1 // pred_region
      %40 = dma.done [#allocation6], 2048
    $region21: #{tpu_custom_call.1} parent=1 // pred_fallthru
      _
    %v41 = vld [vmem:[#allocation5] sm:$0xff]
    %v42 = vld [vmem:[#allocation5 + $0x8] sm:$0xff]
    %v43 = vld [vmem:[#allocation5 + $0x10] sm:$0xff]
    %v44 = vld [vmem:[#allocation5 + $0x18] sm:$0xff]
    %v45 = vld [vmem:[#allocation5 + $0x20] sm:$0xff]
    %v46 = vld [vmem:[#allocation5 + $0x28] sm:$0xff]
    %v47 = vld [vmem:[#allocation5 + $0x30] sm:$0xff]
    %v48 = vld [vmem:[#allocation5 + $0x38] sm:$0xff]
    %v49 = vld [vmem:[#allocation5 + $0x40] sm:$0xff]
    %v50 = vld [vmem:[#allocation5 + $0x48] sm:$0xff]
    %v51 = vld [vmem:[#allocation5 + $0x50] sm:$0xff]
    %v52 = vld [vmem:[#allocation5 + $0x58] sm:$0xff]
    %v53 = vld [vmem:[#allocation5 + $0x60] sm:$0xff]
    %v54 = vld [vmem:[#allocation5 + $0x68] sm:$0xff]
    %v55 = vld [vmem:[#allocation5 + $0x70] sm:$0xff]
    %v56 = vld [vmem:[#allocation5 + $0x78] sm:$0xff]
    %v57 = vld [vmem:[%s2] sm:$0x1]
    %v59 = vlaneseq
    %v60 = vshrl.u32 %v59, 7
    %v61 = vsub.s32 0, %v60
    %v62 = vrot.slane %v57, %v61
    %v64 = vld [vmem:[#allocation2] sm:$0xff]
    %65 = vst [vmem:[#allocation7] sm:$0xff] %v64
    %66 = vmatprep.subr.mxu0 0.0
    %67 = vmatpush1.msra.mxu0 %v41
    %68 = vmatprep.subr.mxu0 0.0
    %69 = vmatpush1.msra.mxu0 %v42
    %70 = vmatprep.subr.mxu0 0.0
    %71 = vmatpush1.msra.mxu0 %v43
    %72 = vmatprep.subr.mxu0 0.0
    %73 = vmatpush1.msra.mxu0 %v44
    %74 = vmatprep.subr.mxu0 0.0
    %75 = vmatpush1.msra.mxu0 %v45
    %76 = vmatprep.subr.mxu0 0.0
    %77 = vmatpush1.msra.mxu0 %v46
    %78 = vmatprep.subr.mxu0 0.0
    %79 = vmatpush1.msra.mxu0 %v47
    %80 = vmatprep.subr.mxu0 0.0
    %81 = vmatpush1.msra.mxu0 %v48
    %82 = vmatprep.subr.mxu0 0.0
    %83 = vmatpush1.msra.mxu0 %v49
    %84 = vmatprep.subr.mxu0 0.0
    %85 = vmatpush1.msra.mxu0 %v50
    %86 = vmatprep.subr.mxu0 0.0
    %87 = vmatpush1.msra.mxu0 %v51
    %88 = vmatprep.subr.mxu0 0.0
    %89 = vmatpush1.msra.mxu0 %v52
    %90 = vmatprep.subr.mxu0 0.0
    %91 = vmatpush1.msra.mxu0 %v53
    %92 = vmatprep.subr.mxu0 0.0
    %93 = vmatpush1.msra.mxu0 %v54
    %94 = vmatprep.subr.mxu0 0.0
    %95 = vmatpush1.msra.mxu0 %v55
    %96 = vmatprep.subr.mxu0 0.0
    %97 = vmatpush1.msra.mxu0 %v56
    %98 = vmatprep.subr.mxu0 0.0
    %99 = vmatpush1.msra.mxu0 0.0
    %100 = vmatprep.subr.mxu0 0.0
    %101 = vmatpush1.msra.mxu0 0.0
    %102 = vmatprep.subr.mxu0 0.0
    %103 = vmatpush1.msra.mxu0 0.0
    %104 = vmatprep.subr.mxu0 0.0
    %105 = vmatpush1.msra.mxu0 0.0
    %106 = vmatprep.subr.mxu0 0.0
    %107 = vmatpush1.msra.mxu0 0.0
    %108 = vmatprep.subr.mxu0 0.0
    %109 = vmatpush1.msra.mxu0 0.0
    %110 = vmatprep.subr.mxu0 0.0
    %111 = vmatpush1.msra.mxu0 0.0
    %112 = vmatprep.subr.mxu0 0.0
    %113 = vmatpush1.msra.mxu0 0.0
    %114 = vmatprep.subr.mxu0 0.0
    %115 = vmatpush1.msra.mxu0 0.0
    %116 = vmatprep.subr.mxu0 0.0
    %117 = vmatpush1.msra.mxu0 0.0
    %118 = vmatprep.subr.mxu0 0.0
    %119 = vmatpush1.msra.mxu0 0.0
    %120 = vmatprep.subr.mxu0 0.0
    %121 = vmatpush1.msra.mxu0 0.0
    %122 = vmatprep.subr.mxu0 0.0
    %123 = vmatpush1.msra.mxu0 0.0
    %124 = vmatprep.subr.mxu0 0.0
    %125 = vmatpush1.msra.mxu0 0.0
    %126 = vmatprep.subr.mxu0 0.0
    %127 = vmatpush1.msra.mxu0 0.0
    %128 = vmatprep.subr.mxu0 0.0
    %129 = vmatpush1.msra.mxu0 0.0
    %130 = vmatprep.mubr.f32.mxu0 0.0
    %131 = vmatmul.mubr.f32.gmra.mrb[0].mxu0 %v64
    %v132 = vpop.f32.mrb[0].mxu0
    %v133 = vadd.f32 %v62, %v132
    %v134 = vpop.f32.mrb[0].mxu0
    %135 = vdwg.mxu0
    %v136 = vtanh.pop %v133
    %v137 = vmul.f32 %v136, 0.06666667
    %v138 = vmul.f32 %v137, 0.33333334
    %v139 = vadd.f32 %v64, %v138
    %140 = vmatprep.subr.mxu0 0.0
    %141 = vmatpush1.msra.mxu0 %v41
    %142 = vmatprep.subr.mxu0 0.0
    %143 = vmatpush1.msra.mxu0 %v42
    %144 = vmatprep.subr.mxu0 0.0
    %145 = vmatpush1.msra.mxu0 %v43
    %146 = vmatprep.subr.mxu0 0.0
    %147 = vmatpush1.msra.mxu0 %v44
    %148 = vmatprep.subr.mxu0 0.0
    %149 = vmatpush1.msra.mxu0 %v45
    %150 = vmatprep.subr.mxu0 0.0
    %151 = vmatpush1.msra.mxu0 %v46
    %152 = vmatprep.subr.mxu0 0.0
    %153 = vmatpush1.msra.mxu0 %v47
    %154 = vmatprep.subr.mxu0 0.0
    %155 = vmatpush1.msra.mxu0 %v48
    %156 = vmatprep.subr.mxu0 0.0
    %157 = vmatpush1.msra.mxu0 %v49
    %158 = vmatprep.subr.mxu0 0.0
    %159 = vmatpush1.msra.mxu0 %v50
    %160 = vmatprep.subr.mxu0 0.0
    %161 = vmatpush1.msra.mxu0 %v51
    %162 = vmatprep.subr.mxu0 0.0
    %163 = vmatpush1.msra.mxu0 %v52
    %164 = vmatprep.subr.mxu0 0.0
    %165 = vmatpush1.msra.mxu0 %v53
    %166 = vmatprep.subr.mxu0 0.0
    %167 = vmatpush1.msra.mxu0 %v54
    %168 = vmatprep.subr.mxu0 0.0
    %169 = vmatpush1.msra.mxu0 %v55
    %170 = vmatprep.subr.mxu0 0.0
    %171 = vmatpush1.msra.mxu0 %v56
    %172 = vmatprep.subr.mxu0 0.0
    %173 = vmatpush1.msra.mxu0 0.0
    %174 = vmatprep.subr.mxu0 0.0
    %175 = vmatpush1.msra.mxu0 0.0
    %176 = vmatprep.subr.mxu0 0.0
    %177 = vmatpush1.msra.mxu0 0.0
    %178 = vmatprep.subr.mxu0 0.0
    %179 = vmatpush1.msra.mxu0 0.0
    %180 = vmatprep.subr.mxu0 0.0
    %181 = vmatpush1.msra.mxu0 0.0
    %182 = vmatprep.subr.mxu0 0.0
    %183 = vmatpush1.msra.mxu0 0.0
    %184 = vmatprep.subr.mxu0 0.0
    %185 = vmatpush1.msra.mxu0 0.0
    %186 = vmatprep.subr.mxu0 0.0
    %187 = vmatpush1.msra.mxu0 0.0
    %188 = vmatprep.subr.mxu0 0.0
    %189 = vmatpush1.msra.mxu0 0.0
    %190 = vmatprep.subr.mxu0 0.0
    %191 = vmatpush1.msra.mxu0 0.0
    %192 = vmatprep.subr.mxu0 0.0
    %193 = vmatpush1.msra.mxu0 0.0
    %194 = vmatprep.subr.mxu0 0.0
    %195 = vmatpush1.msra.mxu0 0.0
    %196 = vmatprep.subr.mxu0 0.0
    %197 = vmatpush1.msra.mxu0 0.0
    %198 = vmatprep.subr.mxu0 0.0
    %199 = vmatpush1.msra.mxu0 0.0
    %200 = vmatprep.subr.mxu0 0.0
    %201 = vmatpush1.msra.mxu0 0.0
    %202 = vmatprep.subr.mxu0 0.0
    %203 = vmatpush1.msra.mxu0 0.0
    %204 = vmatprep.mubr.f32.mxu0 0.0
    %205 = vmatmul.mubr.f32.gmra.mrb[0].mxu0 %v139
    %v206 = vpop.f32.mrb[0].mxu0
    %v207 = vadd.f32 %v62, %v206
    %v208 = vpop.f32.mrb[0].mxu0
    %209 = vdwg.mxu0
    %v210 = vtanh.pop %v207
    %v211 = vmul.f32 %v136, 0.33333334
    %v212 = vsub.f32 %v210, %v211
    %v213 = vmul.f32 %v212, 0.06666667
    %v214 = vadd.f32 %v64, %v213
    %215 = vmatprep.subr.mxu0 0.0
    %216 = vmatpush1.msra.mxu0 %v41
    %217 = vmatprep.subr.mxu0 0.0
    %218 = vmatpush1.msra.mxu0 %v42
    %219 = vmatprep.subr.mxu0 0.0
    %220 = vmatpush1.msra.mxu0 %v43
    %221 = vmatprep.subr.mxu0 0.0
    %222 = vmatpush1.msra.mxu0 %v44
    %223 = vmatprep.subr.mxu0 0.0
    %224 = vmatpush1.msra.mxu0 %v45
    %225 = vmatprep.subr.mxu0 0.0
    %226 = vmatpush1.msra.mxu0 %v46
    %227 = vmatprep.subr.mxu0 0.0
    %228 = vmatpush1.msra.mxu0 %v47
    %229 = vmatprep.subr.mxu0 0.0
    %230 = vmatpush1.msra.mxu0 %v48
    %231 = vmatprep.subr.mxu0 0.0
    %232 = vmatpush1.msra.mxu0 %v49
    %233 = vmatprep.subr.mxu0 0.0
    %234 = vmatpush1.msra.mxu0 %v50
    %235 = vmatprep.subr.mxu0 0.0
    %236 = vmatpush1.msra.mxu0 %v51
    %237 = vmatprep.subr.mxu0 0.0
    %238 = vmatpush1.msra.mxu0 %v52
    %239 = vmatprep.subr.mxu0 0.0
    %240 = vmatpush1.msra.mxu0 %v53
    %241 = vmatprep.subr.mxu0 0.0
    %242 = vmatpush1.msra.mxu0 %v54
    %243 = vmatprep.subr.mxu0 0.0
    %244 = vmatpush1.msra.mxu0 %v55
    %245 = vmatprep.subr.mxu0 0.0
    %246 = vmatpush1.msra.mxu0 %v56
    %247 = vmatprep.subr.mxu0 0.0
    %248 = vmatpush1.msra.mxu0 0.0
    %249 = vmatprep.subr.mxu0 0.0
    %250 = vmatpush1.msra.mxu0 0.0
    %251 = vmatprep.subr.mxu0 0.0
    %252 = vmatpush1.msra.mxu0 0.0
    %253 = vmatprep.subr.mxu0 0.0
    %254 = vmatpush1.msra.mxu0 0.0
    %255 = vmatprep.subr.mxu0 0.0
    %256 = vmatpush1.msra.mxu0 0.0
    %257 = vmatprep.subr.mxu0 0.0
    %258 = vmatpush1.msra.mxu0 0.0
    %259 = vmatprep.subr.mxu0 0.0
    %260 = vmatpush1.msra.mxu0 0.0
    %261 = vmatprep.subr.mxu0 0.0
    %262 = vmatpush1.msra.mxu0 0.0
    %263 = vmatprep.subr.mxu0 0.0
    %264 = vmatpush1.msra.mxu0 0.0
    %265 = vmatprep.subr.mxu0 0.0
    %266 = vmatpush1.msra.mxu0 0.0
    %267 = vmatprep.subr.mxu0 0.0
    %268 = vmatpush1.msra.mxu0 0.0
    %269 = vmatprep.subr.mxu0 0.0
    %270 = vmatpush1.msra.mxu0 0.0
    %271 = vmatprep.subr.mxu0 0.0
    %272 = vmatpush1.msra.mxu0 0.0
    %273 = vmatprep.subr.mxu0 0.0
    %274 = vmatpush1.msra.mxu0 0.0
    %275 = vmatprep.subr.mxu0 0.0
    %276 = vmatpush1.msra.mxu0 0.0
    %277 = vmatprep.subr.mxu0 0.0
    %278 = vmatpush1.msra.mxu0 0.0
    %279 = vmatprep.mubr.f32.mxu0 0.0
    %280 = vmatmul.mubr.f32.gmra.mrb[0].mxu0 %v214
    %v281 = vpop.f32.mrb[0].mxu0
    %v282 = vadd.f32 %v62, %v281
    %v283 = vpop.f32.mrb[0].mxu0
    %284 = vdwg.mxu0
    %v285 = vtanh.pop %v282
    %v286 = vsub.f32 %v136, %v210
    %v287 = vadd.f32 %v286, %v285
    %v288 = vmul.f32 %v287, 0.06666667
    %v289 = vadd.f32 %v64, %v288
    %290 = vmatprep.subr.mxu0 0.0
    %291 = vmatpush1.msra.mxu0 %v41
    %292 = vmatprep.subr.mxu0 0.0
    %293 = vmatpush1.msra.mxu0 %v42
    %294 = vmatprep.subr.mxu0 0.0
    %295 = vmatpush1.msra.mxu0 %v43
    %296 = vmatprep.subr.mxu0 0.0
    %297 = vmatpush1.msra.mxu0 %v44
    %298 = vmatprep.subr.mxu0 0.0
    %299 = vmatpush1.msra.mxu0 %v45
    %300 = vmatprep.subr.mxu0 0.0
    %301 = vmatpush1.msra.mxu0 %v46
    %302 = vmatprep.subr.mxu0 0.0
    %303 = vmatpush1.msra.mxu0 %v47
    %304 = vmatprep.subr.mxu0 0.0
    %305 = vmatpush1.msra.mxu0 %v48
    %306 = vmatprep.subr.mxu0 0.0
    %307 = vmatpush1.msra.mxu0 %v49
    %308 = vmatprep.subr.mxu0 0.0
    %309 = vmatpush1.msra.mxu0 %v50
    %310 = vmatprep.subr.mxu0 0.0
    %311 = vmatpush1.msra.mxu0 %v51
    %312 = vmatprep.subr.mxu0 0.0
    %313 = vmatpush1.msra.mxu0 %v52
    %314 = vmatprep.subr.mxu0 0.0
    %315 = vmatpush1.msra.mxu0 %v53
    %316 = vmatprep.subr.mxu0 0.0
    %317 = vmatpush1.msra.mxu0 %v54
    %318 = vmatprep.subr.mxu0 0.0
    %319 = vmatpush1.msra.mxu0 %v55
    %320 = vmatprep.subr.mxu0 0.0
    %321 = vmatpush1.msra.mxu0 %v56
    %322 = vmatprep.subr.mxu0 0.0
    %323 = vmatpush1.msra.mxu0 0.0
    %324 = vmatprep.subr.mxu0 0.0
    %325 = vmatpush1.msra.mxu0 0.0
    %326 = vmatprep.subr.mxu0 0.0
    %327 = vmatpush1.msra.mxu0 0.0
    %328 = vmatprep.subr.mxu0 0.0
    %329 = vmatpush1.msra.mxu0 0.0
    %330 = vmatprep.subr.mxu0 0.0
    %331 = vmatpush1.msra.mxu0 0.0
    %332 = vmatprep.subr.mxu0 0.0
    %333 = vmatpush1.msra.mxu0 0.0
    %334 = vmatprep.subr.mxu0 0.0
    %335 = vmatpush1.msra.mxu0 0.0
    %336 = vmatprep.subr.mxu0 0.0
    %337 = vmatpush1.msra.mxu0 0.0
    %338 = vmatprep.subr.mxu0 0.0
    %339 = vmatpush1.msra.mxu0 0.0
    %340 = vmatprep.subr.mxu0 0.0
    %341 = vmatpush1.msra.mxu0 0.0
    %342 = vmatprep.subr.mxu0 0.0
    %343 = vmatpush1.msra.mxu0 0.0
    %344 = vmatprep.subr.mxu0 0.0
    %345 = vmatpush1.msra.mxu0 0.0
    %346 = vmatprep.subr.mxu0 0.0
    %347 = vmatpush1.msra.mxu0 0.0
    %348 = vmatprep.subr.mxu0 0.0
    %349 = vmatpush1.msra.mxu0 0.0
    %350 = vmatprep.subr.mxu0 0.0
    %351 = vmatpush1.msra.mxu0 0.0
    %352 = vmatprep.subr.mxu0 0.0
    %353 = vmatpush1.msra.mxu0 0.0
    %354 = vmatprep.mubr.f32.mxu0 0.0
    %355 = vmatmul.mubr.f32.gmra.mrb[0].mxu0 %v289
    %v356 = vpop.f32.mrb[0].mxu0
    %v357 = vadd.f32 %v62, %v356
    %v358 = vpop.f32.mrb[0].mxu0
    %359 = vdwg.mxu0
    %v360 = vtanh.pop %v357
    %v361 = vadd.f32 %v210, %v285
    %v362 = vmul.f32 %v361, 3.0
    %v363 = vadd.f32 %v136, %v362
    %v364 = vadd.f32 %v363, %v360
    %v365 = vmul.f32 %v364, 0.06666667
    %v366 = vmul.f32 %v365, 0.125
    %v367 = vadd.f32 %v64, %v366
    %s368 = scalar_lea.vmem [#allocation7], 8
    %369 = vst [vmem:[%s368] sm:$0xff] %v367
    %370 = vmatprep.subr.mxu0 0.0
    %371 = vmatpush1.msra.mxu0 %v41
    %372 = vmatprep.subr.mxu0 0.0
    %373 = vmatpush1.msra.mxu0 %v42
    %374 = vmatprep.subr.mxu0 0.0
    %375 = vmatpush1.msra.mxu0 %v43
    %376 = vmatprep.subr.mxu0 0.0
    %377 = vmatpush1.msra.mxu0 %v44
    %378 = vmatprep.subr.mxu0 0.0
    %379 = vmatpush1.msra.mxu0 %v45
    %380 = vmatprep.subr.mxu0 0.0
    %381 = vmatpush1.msra.mxu0 %v46
    %382 = vmatprep.subr.mxu0 0.0
    %383 = vmatpush1.msra.mxu0 %v47
    %384 = vmatprep.subr.mxu0 0.0
    %385 = vmatpush1.msra.mxu0 %v48
    %386 = vmatprep.subr.mxu0 0.0
    %387 = vmatpush1.msra.mxu0 %v49
    %388 = vmatprep.subr.mxu0 0.0
    %389 = vmatpush1.msra.mxu0 %v50
    %390 = vmatprep.subr.mxu0 0.0
    %391 = vmatpush1.msra.mxu0 %v51
    %392 = vmatprep.subr.mxu0 0.0
    %393 = vmatpush1.msra.mxu0 %v52
    %394 = vmatprep.subr.mxu0 0.0
    %395 = vmatpush1.msra.mxu0 %v53
    %396 = vmatprep.subr.mxu0 0.0
    %397 = vmatpush1.msra.mxu0 %v54
    %398 = vmatprep.subr.mxu0 0.0
    %399 = vmatpush1.msra.mxu0 %v55
    %400 = vmatprep.subr.mxu0 0.0
    %401 = vmatpush1.msra.mxu0 %v56
    %402 = vmatprep.subr.mxu0 0.0
    %403 = vmatpush1.msra.mxu0 0.0
    %404 = vmatprep.subr.mxu0 0.0
    %405 = vmatpush1.msra.mxu0 0.0
    %406 = vmatprep.subr.mxu0 0.0
    %407 = vmatpush1.msra.mxu0 0.0
    %408 = vmatprep.subr.mxu0 0.0
    %409 = vmatpush1.msra.mxu0 0.0
    %410 = vmatprep.subr.mxu0 0.0
    %411 = vmatpush1.msra.mxu0 0.0
    %412 = vmatprep.subr.mxu0 0.0
    %413 = vmatpush1.msra.mxu0 0.0
    %414 = vmatprep.subr.mxu0 0.0
    %415 = vmatpush1.msra.mxu0 0.0
    %416 = vmatprep.subr.mxu0 0.0
    %417 = vmatpush1.msra.mxu0 0.0
    %418 = vmatprep.subr.mxu0 0.0
    %419 = vmatpush1.msra.mxu0 0.0
    %420 = vmatprep.subr.mxu0 0.0
    %421 = vmatpush1.msra.mxu0 0.0
    %422 = vmatprep.subr.mxu0 0.0
    %423 = vmatpush1.msra.mxu0 0.0
    %424 = vmatprep.subr.mxu0 0.0
    %425 = vmatpush1.msra.mxu0 0.0
    %426 = vmatprep.subr.mxu0 0.0
    %427 = vmatpush1.msra.mxu0 0.0
    %428 = vmatprep.subr.mxu0 0.0
    %429 = vmatpush1.msra.mxu0 0.0
    %430 = vmatprep.subr.mxu0 0.0
    %431 = vmatpush1.msra.mxu0 0.0
    %432 = vmatprep.subr.mxu0 0.0
    %433 = vmatpush1.msra.mxu0 0.0
    %434 = vmatprep.mubr.f32.mxu0 0.0
    %435 = vmatmul.mubr.f32.gmra.mrb[0].mxu0 %v367
    %v436 = vpop.f32.mrb[0].mxu0
    %v437 = vadd.f32 %v62, %v436
    %v438 = vpop.f32.mrb[0].mxu0
    %439 = vdwg.mxu0
    %v440 = vtanh.pop %v437
    %v441 = vmul.f32 %v440, 0.06666667
    %v442 = vmul.f32 %v441, 0.33333334
    %v443 = vadd.f32 %v367, %v442
    %444 = vmatprep.subr.mxu0 0.0
    %445 = vmatpush1.msra.mxu0 %v41
    %446 = vmatprep.subr.mxu0 0.0
    %447 = vmatpush1.msra.mxu0 %v42
    %448 = vmatprep.subr.mxu0 0.0
    %449 = vmatpush1.msra.mxu0 %v43
    %450 = vmatprep.subr.mxu0 0.0
    %451 = vmatpush1.msra.mxu0 %v44
    %452 = vmatprep.subr.mxu0 0.0
    %453 = vmatpush1.msra.mxu0 %v45
    %454 = vmatprep.subr.mxu0 0.0
    %455 = vmatpush1.msra.mxu0 %v46
    %456 = vmatprep.subr.mxu0 0.0
    %457 = vmatpush1.msra.mxu0 %v47
    %458 = vmatprep.subr.mxu0 0.0
    %459 = vmatpush1.msra.mxu0 %v48
    %460 = vmatprep.subr.mxu0 0.0
    %461 = vmatpush1.msra.mxu0 %v49
    %462 = vmatprep.subr.mxu0 0.0
    %463 = vmatpush1.msra.mxu0 %v50
    %464 = vmatprep.subr.mxu0 0.0
    %465 = vmatpush1.msra.mxu0 %v51
    %466 = vmatprep.subr.mxu0 0.0
    %467 = vmatpush1.msra.mxu0 %v52
    %468 = vmatprep.subr.mxu0 0.0
    %469 = vmatpush1.msra.mxu0 %v53
    %470 = vmatprep.subr.mxu0 0.0
    %471 = vmatpush1.msra.mxu0 %v54
    %472 = vmatprep.subr.mxu0 0.0
    %473 = vmatpush1.msra.mxu0 %v55
    %474 = vmatprep.subr.mxu0 0.0
    %475 = vmatpush1.msra.mxu0 %v56
    %476 = vmatprep.subr.mxu0 0.0
    %477 = vmatpush1.msra.mxu0 0.0
    %478 = vmatprep.subr.mxu0 0.0
    %479 = vmatpush1.msra.mxu0 0.0
    %480 = vmatprep.subr.mxu0 0.0
    %481 = vmatpush1.msra.mxu0 0.0
    %482 = vmatprep.subr.mxu0 0.0
    %483 = vmatpush1.msra.mxu0 0.0
    %484 = vmatprep.subr.mxu0 0.0
    %485 = vmatpush1.msra.mxu0 0.0
    %486 = vmatprep.subr.mxu0 0.0
    %487 = vmatpush1.msra.mxu0 0.0
    %488 = vmatprep.subr.mxu0 0.0
    %489 = vmatpush1.msra.mxu0 0.0
    %490 = vmatprep.subr.mxu0 0.0
    %491 = vmatpush1.msra.mxu0 0.0
    %492 = vmatprep.subr.mxu0 0.0
    %493 = vmatpush1.msra.mxu0 0.0
    %494 = vmatprep.subr.mxu0 0.0
    %495 = vmatpush1.msra.mxu0 0.0
    %496 = vmatprep.subr.mxu0 0.0
    %497 = vmatpush1.msra.mxu0 0.0
    %498 = vmatprep.subr.mxu0 0.0
    %499 = vmatpush1.msra.mxu0 0.0
    %500 = vmatprep.subr.mxu0 0.0
    %501 = vmatpush1.msra.mxu0 0.0
    %502 = vmatprep.subr.mxu0 0.0
    %503 = vmatpush1.msra.mxu0 0.0
    %504 = vmatprep.subr.mxu0 0.0
    %505 = vmatpush1.msra.mxu0 0.0
    %506 = vmatprep.subr.mxu0 0.0
    %507 = vmatpush1.msra.mxu0 0.0
    %508 = vmatprep.mubr.f32.mxu0 0.0
    %509 = vmatmul.mubr.f32.gmra.mrb[0].mxu0 %v443
    %v510 = vpop.f32.mrb[0].mxu0
    %v511 = vadd.f32 %v62, %v510
    %v512 = vpop.f32.mrb[0].mxu0
    %513 = vdwg.mxu0
    %v514 = vtanh.pop %v511
    %v515 = vmul.f32 %v440, 0.33333334
    %v516 = vsub.f32 %v514, %v515
    %v517 = vmul.f32 %v516, 0.06666667
    %v518 = vadd.f32 %v367, %v517
    %519 = vmatprep.subr.mxu0 0.0
    %520 = vmatpush1.msra.mxu0 %v41
    %521 = vmatprep.subr.mxu0 0.0
    %522 = vmatpush1.msra.mxu0 %v42
    %523 = vmatprep.subr.mxu0 0.0
    %524 = vmatpush1.msra.mxu0 %v43
    %525 = vmatprep.subr.mxu0 0.0
    %526 = vmatpush1.msra.mxu0 %v44
    %527 = vmatprep.subr.mxu0 0.0
    %528 = vmatpush1.msra.mxu0 %v45
    %529 = vmatprep.subr.mxu0 0.0
    %530 = vmatpush1.msra.mxu0 %v46
    %531 = vmatprep.subr.mxu0 0.0
    %532 = vmatpush1.msra.mxu0 %v47
    %533 = vmatprep.subr.mxu0 0.0
    %534 = vmatpush1.msra.mxu0 %v48
    %535 = vmatprep.subr.mxu0 0.0
    %536 = vmatpush1.msra.mxu0 %v49
    %537 = vmatprep.subr.mxu0 0.0
    %538 = vmatpush1.msra.mxu0 %v50
    %539 = vmatprep.subr.mxu0 0.0
    %540 = vmatpush1.msra.mxu0 %v51
    %541 = vmatprep.subr.mxu0 0.0
    %542 = vmatpush1.msra.mxu0 %v52
    %543 = vmatprep.subr.mxu0 0.0
    %544 = vmatpush1.msra.mxu0 %v53
    %545 = vmatprep.subr.mxu0 0.0
    %546 = vmatpush1.msra.mxu0 %v54
    %547 = vmatprep.subr.mxu0 0.0
    %548 = vmatpush1.msra.mxu0 %v55
    %549 = vmatprep.subr.mxu0 0.0
    %550 = vmatpush1.msra.mxu0 %v56
    %551 = vmatprep.subr.mxu0 0.0
    %552 = vmatpush1.msra.mxu0 0.0
    %553 = vmatprep.subr.mxu0 0.0
    %554 = vmatpush1.msra.mxu0 0.0
    %555 = vmatprep.subr.mxu0 0.0
    %556 = vmatpush1.msra.mxu0 0.0
    %557 = vmatprep.subr.mxu0 0.0
    %558 = vmatpush1.msra.mxu0 0.0
    %559 = vmatprep.subr.mxu0 0.0
    %560 = vmatpush1.msra.mxu0 0.0
    %561 = vmatprep.subr.mxu0 0.0
    %562 = vmatpush1.msra.mxu0 0.0
    %563 = vmatprep.subr.mxu0 0.0
    %564 = vmatpush1.msra.mxu0 0.0
    %565 = vmatprep.subr.mxu0 0.0
    %566 = vmatpush1.msra.mxu0 0.0
    %567 = vmatprep.subr.mxu0 0.0
    %568 = vmatpush1.msra.mxu0 0.0
    %569 = vmatprep.subr.mxu0 0.0
    %570 = vmatpush1.msra.mxu0 0.0
    %571 = vmatprep.subr.mxu0 0.0
    %572 = vmatpush1.msra.mxu0 0.0
    %573 = vmatprep.subr.mxu0 0.0
    %574 = vmatpush1.msra.mxu0 0.0
    %575 = vmatprep.subr.mxu0 0.0
    %576 = vmatpush1.msra.mxu0 0.0
    %577 = vmatprep.subr.mxu0 0.0
    %578 = vmatpush1.msra.mxu0 0.0
    %579 = vmatprep.subr.mxu0 0.0
    %580 = vmatpush1.msra.mxu0 0.0
    %581 = vmatprep.subr.mxu0 0.0
    %582 = vmatpush1.msra.mxu0 0.0
    %583 = vmatprep.mubr.f32.mxu0 0.0
    %584 = vmatmul.mubr.f32.gmra.mrb[0].mxu0 %v518
    %v585 = vpop.f32.mrb[0].mxu0
    %v586 = vadd.f32 %v62, %v585
    %v587 = vpop.f32.mrb[0].mxu0
    %588 = vdwg.mxu0
    %v589 = vtanh.pop %v586
    %v590 = vsub.f32 %v440, %v514
    %v591 = vadd.f32 %v590, %v589
    %v592 = vmul.f32 %v591, 0.06666667
    %v593 = vadd.f32 %v367, %v592
    %594 = vmatprep.subr.mxu0 0.0
    %595 = vmatpush1.msra.mxu0 %v41
    %596 = vmatprep.subr.mxu0 0.0
    %597 = vmatpush1.msra.mxu0 %v42
    %598 = vmatprep.subr.mxu0 0.0
    %599 = vmatpush1.msra.mxu0 %v43
    %600 = vmatprep.subr.mxu0 0.0
    %601 = vmatpush1.msra.mxu0 %v44
    %602 = vmatprep.subr.mxu0 0.0
    %603 = vmatpush1.msra.mxu0 %v45
    %604 = vmatprep.subr.mxu0 0.0
    %605 = vmatpush1.msra.mxu0 %v46
    %606 = vmatprep.subr.mxu0 0.0
    %607 = vmatpush1.msra.mxu0 %v47
    %608 = vmatprep.subr.mxu0 0.0
    %609 = vmatpush1.msra.mxu0 %v48
    %610 = vmatprep.subr.mxu0 0.0
    %611 = vmatpush1.msra.mxu0 %v49
    %612 = vmatprep.subr.mxu0 0.0
    %613 = vmatpush1.msra.mxu0 %v50
    %614 = vmatprep.subr.mxu0 0.0
    %615 = vmatpush1.msra.mxu0 %v51
    %616 = vmatprep.subr.mxu0 0.0
    %617 = vmatpush1.msra.mxu0 %v52
    %618 = vmatprep.subr.mxu0 0.0
    %619 = vmatpush1.msra.mxu0 %v53
    %620 = vmatprep.subr.mxu0 0.0
    %621 = vmatpush1.msra.mxu0 %v54
    %622 = vmatprep.subr.mxu0 0.0
    %623 = vmatpush1.msra.mxu0 %v55
    %624 = vmatprep.subr.mxu0 0.0
    %625 = vmatpush1.msra.mxu0 %v56
    %626 = vmatprep.subr.mxu0 0.0
    %627 = vmatpush1.msra.mxu0 0.0
    %628 = vmatprep.subr.mxu0 0.0
    %629 = vmatpush1.msra.mxu0 0.0
    %630 = vmatprep.subr.mxu0 0.0
    %631 = vmatpush1.msra.mxu0 0.0
    %632 = vmatprep.subr.mxu0 0.0
    %633 = vmatpush1.msra.mxu0 0.0
    %634 = vmatprep.subr.mxu0 0.0
    %635 = vmatpush1.msra.mxu0 0.0
    %636 = vmatprep.subr.mxu0 0.0
    %637 = vmatpush1.msra.mxu0 0.0
    %638 = vmatprep.subr.mxu0 0.0
    %639 = vmatpush1.msra.mxu0 0.0
    %640 = vmatprep.subr.mxu0 0.0
    %641 = vmatpush1.msra.mxu0 0.0
    %642 = vmatprep.subr.mxu0 0.0
    %643 = vmatpush1.msra.mxu0 0.0
    %644 = vmatprep.subr.mxu0 0.0
    %645 = vmatpush1.msra.mxu0 0.0
    %646 = vmatprep.subr.mxu0 0.0
    %647 = vmatpush1.msra.mxu0 0.0
    %648 = vmatprep.subr.mxu0 0.0
    %649 = vmatpush1.msra.mxu0 0.0
    %650 = vmatprep.subr.mxu0 0.0
    %651 = vmatpush1.msra.mxu0 0.0
    %652 = vmatprep.subr.mxu0 0.0
    %653 = vmatpush1.msra.mxu0 0.0
    %654 = vmatprep.subr.mxu0 0.0
    %655 = vmatpush1.msra.mxu0 0.0
    %656 = vmatprep.subr.mxu0 0.0
    %657 = vmatpush1.msra.mxu0 0.0
    %658 = vmatprep.mubr.f32.mxu0 0.0
    %659 = vmatmul.mubr.f32.gmra.mrb[0].mxu0 %v593
    %v660 = vpop.f32.mrb[0].mxu0
    %v661 = vadd.f32 %v62, %v660
    %v662 = vpop.f32.mrb[0].mxu0
    %663 = vdwg.mxu0
    %v664 = vtanh.pop %v661
    %v665 = vadd.f32 %v514, %v589
    %v666 = vmul.f32 %v665, 3.0
    %v667 = vadd.f32 %v440, %v666
    %v668 = vadd.f32 %v667, %v664
    %v669 = vmul.f32 %v668, 0.06666667
    %v670 = vmul.f32 %v669, 0.125
    %v671 = vadd.f32 %v367, %v670
    %s672 = scalar_lea.vmem [#allocation7], 16
    %673 = vst [vmem:[%s672] sm:$0xff] %v671
    %674 = vmatprep.subr.mxu0 0.0
    %675 = vmatpush1.msra.mxu0 %v41
    %676 = vmatprep.subr.mxu0 0.0
    %677 = vmatpush1.msra.mxu0 %v42
    %678 = vmatprep.subr.mxu0 0.0
    %679 = vmatpush1.msra.mxu0 %v43
    %680 = vmatprep.subr.mxu0 0.0
    %681 = vmatpush1.msra.mxu0 %v44
    %682 = vmatprep.subr.mxu0 0.0
    %683 = vmatpush1.msra.mxu0 %v45
    %684 = vmatprep.subr.mxu0 0.0
    %685 = vmatpush1.msra.mxu0 %v46
    %686 = vmatprep.subr.mxu0 0.0
    %687 = vmatpush1.msra.mxu0 %v47
    %688 = vmatprep.subr.mxu0 0.0
    %689 = vmatpush1.msra.mxu0 %v48
    %690 = vmatprep.subr.mxu0 0.0
    %691 = vmatpush1.msra.mxu0 %v49
    %692 = vmatprep.subr.mxu0 0.0
    %693 = vmatpush1.msra.mxu0 %v50
    %694 = vmatprep.subr.mxu0 0.0
    %695 = vmatpush1.msra.mxu0 %v51
    %696 = vmatprep.subr.mxu0 0.0
    %697 = vmatpush1.msra.mxu0 %v52
    %698 = vmatprep.subr.mxu0 0.0
    %699 = vmatpush1.msra.mxu0 %v53
    %700 = vmatprep.subr.mxu0 0.0
    %701 = vmatpush1.msra.mxu0 %v54
    %702 = vmatprep.subr.mxu0 0.0
    %703 = vmatpush1.msra.mxu0 %v55
    %704 = vmatprep.subr.mxu0 0.0
    %705 = vmatpush1.msra.mxu0 %v56
    %706 = vmatprep.subr.mxu0 0.0
    %707 = vmatpush1.msra.mxu0 0.0
    %708 = vmatprep.subr.mxu0 0.0
    %709 = vmatpush1.msra.mxu0 0.0
    %710 = vmatprep.subr.mxu0 0.0
    %711 = vmatpush1.msra.mxu0 0.0
    %712 = vmatprep.subr.mxu0 0.0
    %713 = vmatpush1.msra.mxu0 0.0
    %714 = vmatprep.subr.mxu0 0.0
    %715 = vmatpush1.msra.mxu0 0.0
    %716 = vmatprep.subr.mxu0 0.0
    %717 = vmatpush1.msra.mxu0 0.0
    %718 = vmatprep.subr.mxu0 0.0
    %719 = vmatpush1.msra.mxu0 0.0
    %720 = vmatprep.subr.mxu0 0.0
    %721 = vmatpush1.msra.mxu0 0.0
    %722 = vmatprep.subr.mxu0 0.0
    %723 = vmatpush1.msra.mxu0 0.0
    %724 = vmatprep.subr.mxu0 0.0
    %725 = vmatpush1.msra.mxu0 0.0
    %726 = vmatprep.subr.mxu0 0.0
    %727 = vmatpush1.msra.mxu0 0.0
    %728 = vmatprep.subr.mxu0 0.0
    %729 = vmatpush1.msra.mxu0 0.0
    %730 = vmatprep.subr.mxu0 0.0
    %731 = vmatpush1.msra.mxu0 0.0
    %732 = vmatprep.subr.mxu0 0.0
    %733 = vmatpush1.msra.mxu0 0.0
    %734 = vmatprep.subr.mxu0 0.0
    %735 = vmatpush1.msra.mxu0 0.0
    %736 = vmatprep.subr.mxu0 0.0
    %737 = vmatpush1.msra.mxu0 0.0
    %738 = vmatprep.mubr.f32.mxu0 0.0
    %739 = vmatmul.mubr.f32.gmra.mrb[0].mxu0 %v671
    %v740 = vpop.f32.mrb[0].mxu0
    %v741 = vadd.f32 %v62, %v740
    %v742 = vpop.f32.mrb[0].mxu0
    %743 = vdwg.mxu0
    %v744 = vtanh.pop %v741
    %v745 = vmul.f32 %v744, 0.06666667
    %v746 = vmul.f32 %v745, 0.33333334
    %v747 = vadd.f32 %v671, %v746
    %748 = vmatprep.subr.mxu0 0.0
    %749 = vmatpush1.msra.mxu0 %v41
    %750 = vmatprep.subr.mxu0 0.0
    %751 = vmatpush1.msra.mxu0 %v42
    %752 = vmatprep.subr.mxu0 0.0
    %753 = vmatpush1.msra.mxu0 %v43
    %754 = vmatprep.subr.mxu0 0.0
    %755 = vmatpush1.msra.mxu0 %v44
    %756 = vmatprep.subr.mxu0 0.0
    %757 = vmatpush1.msra.mxu0 %v45
    %758 = vmatprep.subr.mxu0 0.0
    %759 = vmatpush1.msra.mxu0 %v46
    %760 = vmatprep.subr.mxu0 0.0
    %761 = vmatpush1.msra.mxu0 %v47
    %762 = vmatprep.subr.mxu0 0.0
    %763 = vmatpush1.msra.mxu0 %v48
    %764 = vmatprep.subr.mxu0 0.0
    %765 = vmatpush1.msra.mxu0 %v49
    %766 = vmatprep.subr.mxu0 0.0
    %767 = vmatpush1.msra.mxu0 %v50
    %768 = vmatprep.subr.mxu0 0.0
    %769 = vmatpush1.msra.mxu0 %v51
    %770 = vmatprep.subr.mxu0 0.0
    %771 = vmatpush1.msra.mxu0 %v52
    %772 = vmatprep.subr.mxu0 0.0
    %773 = vmatpush1.msra.mxu0 %v53
    %774 = vmatprep.subr.mxu0 0.0
    %775 = vmatpush1.msra.mxu0 %v54
    %776 = vmatprep.subr.mxu0 0.0
    %777 = vmatpush1.msra.mxu0 %v55
    %778 = vmatprep.subr.mxu0 0.0
    %779 = vmatpush1.msra.mxu0 %v56
    %780 = vmatprep.subr.mxu0 0.0
    %781 = vmatpush1.msra.mxu0 0.0
    %782 = vmatprep.subr.mxu0 0.0
    %783 = vmatpush1.msra.mxu0 0.0
    %784 = vmatprep.subr.mxu0 0.0
    %785 = vmatpush1.msra.mxu0 0.0
    %786 = vmatprep.subr.mxu0 0.0
    %787 = vmatpush1.msra.mxu0 0.0
    %788 = vmatprep.subr.mxu0 0.0
    %789 = vmatpush1.msra.mxu0 0.0
    %790 = vmatprep.subr.mxu0 0.0
    %791 = vmatpush1.msra.mxu0 0.0
    %792 = vmatprep.subr.mxu0 0.0
    %793 = vmatpush1.msra.mxu0 0.0
    %794 = vmatprep.subr.mxu0 0.0
    %795 = vmatpush1.msra.mxu0 0.0
    %796 = vmatprep.subr.mxu0 0.0
    %797 = vmatpush1.msra.mxu0 0.0
    %798 = vmatprep.subr.mxu0 0.0
    %799 = vmatpush1.msra.mxu0 0.0
    %800 = vmatprep.subr.mxu0 0.0
    %801 = vmatpush1.msra.mxu0 0.0
    %802 = vmatprep.subr.mxu0 0.0
    %803 = vmatpush1.msra.mxu0 0.0
    %804 = vmatprep.subr.mxu0 0.0
    %805 = vmatpush1.msra.mxu0 0.0
    %806 = vmatprep.subr.mxu0 0.0
    %807 = vmatpush1.msra.mxu0 0.0
    %808 = vmatprep.subr.mxu0 0.0
    %809 = vmatpush1.msra.mxu0 0.0
    %810 = vmatprep.subr.mxu0 0.0
    %811 = vmatpush1.msra.mxu0 0.0
    %812 = vmatprep.mubr.f32.mxu0 0.0
    %813 = vmatmul.mubr.f32.gmra.mrb[0].mxu0 %v747
    %v814 = vpop.f32.mrb[0].mxu0
    %v815 = vadd.f32 %v62, %v814
    %v816 = vpop.f32.mrb[0].mxu0
    %817 = vdwg.mxu0
    %v818 = vtanh.pop %v815
    %v819 = vmul.f32 %v744, 0.33333334
    %v820 = vsub.f32 %v818, %v819
    %v821 = vmul.f32 %v820, 0.06666667
    %v822 = vadd.f32 %v671, %v821
    %823 = vmatprep.subr.mxu0 0.0
    %824 = vmatpush1.msra.mxu0 %v41
    %825 = vmatprep.subr.mxu0 0.0
    %826 = vmatpush1.msra.mxu0 %v42
    %827 = vmatprep.subr.mxu0 0.0
    %828 = vmatpush1.msra.mxu0 %v43
    %829 = vmatprep.subr.mxu0 0.0
    %830 = vmatpush1.msra.mxu0 %v44
    %831 = vmatprep.subr.mxu0 0.0
    %832 = vmatpush1.msra.mxu0 %v45
    %833 = vmatprep.subr.mxu0 0.0
    %834 = vmatpush1.msra.mxu0 %v46
    %835 = vmatprep.subr.mxu0 0.0
    %836 = vmatpush1.msra.mxu0 %v47
    %837 = vmatprep.subr.mxu0 0.0
    %838 = vmatpush1.msra.mxu0 %v48
    %839 = vmatprep.subr.mxu0 0.0
    %840 = vmatpush1.msra.mxu0 %v49
    %841 = vmatprep.subr.mxu0 0.0
    %842 = vmatpush1.msra.mxu0 %v50
    %843 = vmatprep.subr.mxu0 0.0
    %844 = vmatpush1.msra.mxu0 %v51
    %845 = vmatprep.subr.mxu0 0.0
    %846 = vmatpush1.msra.mxu0 %v52
    %847 = vmatprep.subr.mxu0 0.0
    %848 = vmatpush1.msra.mxu0 %v53
    %849 = vmatprep.subr.mxu0 0.0
    %850 = vmatpush1.msra.mxu0 %v54
    %851 = vmatprep.subr.mxu0 0.0
    %852 = vmatpush1.msra.mxu0 %v55
    %853 = vmatprep.subr.mxu0 0.0
    %854 = vmatpush1.msra.mxu0 %v56
    %855 = vmatprep.subr.mxu0 0.0
    %856 = vmatpush1.msra.mxu0 0.0
    %857 = vmatprep.subr.mxu0 0.0
    %858 = vmatpush1.msra.mxu0 0.0
    %859 = vmatprep.subr.mxu0 0.0
    %860 = vmatpush1.msra.mxu0 0.0
    %861 = vmatprep.subr.mxu0 0.0
    %862 = vmatpush1.msra.mxu0 0.0
    %863 = vmatprep.subr.mxu0 0.0
    %864 = vmatpush1.msra.mxu0 0.0
    %865 = vmatprep.subr.mxu0 0.0
    %866 = vmatpush1.msra.mxu0 0.0
    %867 = vmatprep.subr.mxu0 0.0
    %868 = vmatpush1.msra.mxu0 0.0
    %869 = vmatprep.subr.mxu0 0.0
    %870 = vmatpush1.msra.mxu0 0.0
    %871 = vmatprep.subr.mxu0 0.0
    %872 = vmatpush1.msra.mxu0 0.0
    %873 = vmatprep.subr.mxu0 0.0
    %874 = vmatpush1.msra.mxu0 0.0
    %875 = vmatprep.subr.mxu0 0.0
    %876 = vmatpush1.msra.mxu0 0.0
    %877 = vmatprep.subr.mxu0 0.0
    %878 = vmatpush1.msra.mxu0 0.0
    %879 = vmatprep.subr.mxu0 0.0
    %880 = vmatpush1.msra.mxu0 0.0
    %881 = vmatprep.subr.mxu0 0.0
    %882 = vmatpush1.msra.mxu0 0.0
    %883 = vmatprep.subr.mxu0 0.0
    %884 = vmatpush1.msra.mxu0 0.0
    %885 = vmatprep.subr.mxu0 0.0
    %886 = vmatpush1.msra.mxu0 0.0
    %887 = vmatprep.mubr.f32.mxu0 0.0
    %888 = vmatmul.mubr.f32.gmra.mrb[0].mxu0 %v822
    %v889 = vpop.f32.mrb[0].mxu0
    %v890 = vadd.f32 %v62, %v889
    %v891 = vpop.f32.mrb[0].mxu0
    %892 = vdwg.mxu0
    %v893 = vtanh.pop %v890
    %v894 = vsub.f32 %v744, %v818
    %v895 = vadd.f32 %v894, %v893
    %v896 = vmul.f32 %v895, 0.06666667
    %v897 = vadd.f32 %v671, %v896
    %898 = vmatprep.subr.mxu0 0.0
    %899 = vmatpush1.msra.mxu0 %v41
    %900 = vmatprep.subr.mxu0 0.0
    %901 = vmatpush1.msra.mxu0 %v42
    %902 = vmatprep.subr.mxu0 0.0
    %903 = vmatpush1.msra.mxu0 %v43
    %904 = vmatprep.subr.mxu0 0.0
    %905 = vmatpush1.msra.mxu0 %v44
    %906 = vmatprep.subr.mxu0 0.0
    %907 = vmatpush1.msra.mxu0 %v45
    %908 = vmatprep.subr.mxu0 0.0
    %909 = vmatpush1.msra.mxu0 %v46
    %910 = vmatprep.subr.mxu0 0.0
    %911 = vmatpush1.msra.mxu0 %v47
    %912 = vmatprep.subr.mxu0 0.0
    %913 = vmatpush1.msra.mxu0 %v48
    %914 = vmatprep.subr.mxu0 0.0
    %915 = vmatpush1.msra.mxu0 %v49
    %916 = vmatprep.subr.mxu0 0.0
    %917 = vmatpush1.msra.mxu0 %v50
    %918 = vmatprep.subr.mxu0 0.0
    %919 = vmatpush1.msra.mxu0 %v51
    %920 = vmatprep.subr.mxu0 0.0
    %921 = vmatpush1.msra.mxu0 %v52
    %922 = vmatprep.subr.mxu0 0.0
    %923 = vmatpush1.msra.mxu0 %v53
    %924 = vmatprep.subr.mxu0 0.0
    %925 = vmatpush1.msra.mxu0 %v54
    %926 = vmatprep.subr.mxu0 0.0
    %927 = vmatpush1.msra.mxu0 %v55
    %928 = vmatprep.subr.mxu0 0.0
    %929 = vmatpush1.msra.mxu0 %v56
    %930 = vmatprep.subr.mxu0 0.0
    %931 = vmatpush1.msra.mxu0 0.0
    %932 = vmatprep.subr.mxu0 0.0
    %933 = vmatpush1.msra.mxu0 0.0
    %934 = vmatprep.subr.mxu0 0.0
    %935 = vmatpush1.msra.mxu0 0.0
    %936 = vmatprep.subr.mxu0 0.0
    %937 = vmatpush1.msra.mxu0 0.0
    %938 = vmatprep.subr.mxu0 0.0
    %939 = vmatpush1.msra.mxu0 0.0
    %940 = vmatprep.subr.mxu0 0.0
    %941 = vmatpush1.msra.mxu0 0.0
    %942 = vmatprep.subr.mxu0 0.0
    %943 = vmatpush1.msra.mxu0 0.0
    %944 = vmatprep.subr.mxu0 0.0
    %945 = vmatpush1.msra.mxu0 0.0
    %946 = vmatprep.subr.mxu0 0.0
    %947 = vmatpush1.msra.mxu0 0.0
    %948 = vmatprep.subr.mxu0 0.0
    %949 = vmatpush1.msra.mxu0 0.0
    %950 = vmatprep.subr.mxu0 0.0
    %951 = vmatpush1.msra.mxu0 0.0
    %952 = vmatprep.subr.mxu0 0.0
    %953 = vmatpush1.msra.mxu0 0.0
    %954 = vmatprep.subr.mxu0 0.0
    %955 = vmatpush1.msra.mxu0 0.0
    %956 = vmatprep.subr.mxu0 0.0
    %957 = vmatpush1.msra.mxu0 0.0
    %958 = vmatprep.subr.mxu0 0.0
    %959 = vmatpush1.msra.mxu0 0.0
    %960 = vmatprep.subr.mxu0 0.0
    %961 = vmatpush1.msra.mxu0 0.0
    %962 = vmatprep.mubr.f32.mxu0 0.0
    %963 = vmatmul.mubr.f32.gmra.mrb[0].mxu0 %v897
    %v964 = vpop.f32.mrb[0].mxu0
    %v965 = vadd.f32 %v62, %v964
    %v966 = vpop.f32.mrb[0].mxu0
    %967 = vdwg.mxu0
    %v968 = vtanh.pop %v965
    %v969 = vadd.f32 %v818, %v893
    %v970 = vmul.f32 %v969, 3.0
    %v971 = vadd.f32 %v744, %v970
    %v972 = vadd.f32 %v971, %v968
    %v973 = vmul.f32 %v972, 0.06666667
    %v974 = vmul.f32 %v973, 0.125
    %v975 = vadd.f32 %v671, %v974
    %s976 = scalar_lea.vmem [#allocation7], 24
    %977 = vst [vmem:[%s976] sm:$0xff] %v975
    %978 = vmatprep.subr.mxu0 0.0
    %979 = vmatpush1.msra.mxu0 %v41
    %980 = vmatprep.subr.mxu0 0.0
    %981 = vmatpush1.msra.mxu0 %v42
    %982 = vmatprep.subr.mxu0 0.0
    %983 = vmatpush1.msra.mxu0 %v43
    %984 = vmatprep.subr.mxu0 0.0
    %985 = vmatpush1.msra.mxu0 %v44
    %986 = vmatprep.subr.mxu0 0.0
    %987 = vmatpush1.msra.mxu0 %v45
    %988 = vmatprep.subr.mxu0 0.0
    %989 = vmatpush1.msra.mxu0 %v46
    %990 = vmatprep.subr.mxu0 0.0
    %991 = vmatpush1.msra.mxu0 %v47
    %992 = vmatprep.subr.mxu0 0.0
    %993 = vmatpush1.msra.mxu0 %v48
    %994 = vmatprep.subr.mxu0 0.0
    %995 = vmatpush1.msra.mxu0 %v49
    %996 = vmatprep.subr.mxu0 0.0
    %997 = vmatpush1.msra.mxu0 %v50
    %998 = vmatprep.subr.mxu0 0.0
    %999 = vmatpush1.msra.mxu0 %v51
    %1000 = vmatprep.subr.mxu0 0.0
    %1001 = vmatpush1.msra.mxu0 %v52
    %1002 = vmatprep.subr.mxu0 0.0
    %1003 = vmatpush1.msra.mxu0 %v53
    %1004 = vmatprep.subr.mxu0 0.0
    %1005 = vmatpush1.msra.mxu0 %v54
    %1006 = vmatprep.subr.mxu0 0.0
    %1007 = vmatpush1.msra.mxu0 %v55
    %1008 = vmatprep.subr.mxu0 0.0
    %1009 = vmatpush1.msra.mxu0 %v56
    %1010 = vmatprep.subr.mxu0 0.0
    %1011 = vmatpush1.msra.mxu0 0.0
    %1012 = vmatprep.subr.mxu0 0.0
    %1013 = vmatpush1.msra.mxu0 0.0
    %1014 = vmatprep.subr.mxu0 0.0
    %1015 = vmatpush1.msra.mxu0 0.0
    %1016 = vmatprep.subr.mxu0 0.0
    %1017 = vmatpush1.msra.mxu0 0.0
    %1018 = vmatprep.subr.mxu0 0.0
    %1019 = vmatpush1.msra.mxu0 0.0
    %1020 = vmatprep.subr.mxu0 0.0
    %1021 = vmatpush1.msra.mxu0 0.0
    %1022 = vmatprep.subr.mxu0 0.0
    %1023 = vmatpush1.msra.mxu0 0.0
    %1024 = vmatprep.subr.mxu0 0.0
    %1025 = vmatpush1.msra.mxu0 0.0
    %1026 = vmatprep.subr.mxu0 0.0
    %1027 = vmatpush1.msra.mxu0 0.0
    %1028 = vmatprep.subr.mxu0 0.0
    %1029 = vmatpush1.msra.mxu0 0.0
    %1030 = vmatprep.subr.mxu0 0.0
    %1031 = vmatpush1.msra.mxu0 0.0
    %1032 = vmatprep.subr.mxu0 0.0
    %1033 = vmatpush1.msra.mxu0 0.0
    %1034 = vmatprep.subr.mxu0 0.0
    %1035 = vmatpush1.msra.mxu0 0.0
    %1036 = vmatprep.subr.mxu0 0.0
    %1037 = vmatpush1.msra.mxu0 0.0
    %1038 = vmatprep.subr.mxu0 0.0
    %1039 = vmatpush1.msra.mxu0 0.0
    %1040 = vmatprep.subr.mxu0 0.0
    %1041 = vmatpush1.msra.mxu0 0.0
    %1042 = vmatprep.mubr.f32.mxu0 0.0
    %1043 = vmatmul.mubr.f32.gmra.mrb[0].mxu0 %v975
    %v1044 = vpop.f32.mrb[0].mxu0
    %v1045 = vadd.f32 %v62, %v1044
    %v1046 = vpop.f32.mrb[0].mxu0
    %1047 = vdwg.mxu0
    %v1048 = vtanh.pop %v1045
    %v1049 = vmul.f32 %v1048, 0.06666667
    %v1050 = vmul.f32 %v1049, 0.33333334
    %v1051 = vadd.f32 %v975, %v1050
    %1052 = vmatprep.subr.mxu0 0.0
    %1053 = vmatpush1.msra.mxu0 %v41
    %1054 = vmatprep.subr.mxu0 0.0
    %1055 = vmatpush1.msra.mxu0 %v42
    %1056 = vmatprep.subr.mxu0 0.0
    %1057 = vmatpush1.msra.mxu0 %v43
    %1058 = vmatprep.subr.mxu0 0.0
    %1059 = vmatpush1.msra.mxu0 %v44
    %1060 = vmatprep.subr.mxu0 0.0
    %1061 = vmatpush1.msra.mxu0 %v45
    %1062 = vmatprep.subr.mxu0 0.0
    %1063 = vmatpush1.msra.mxu0 %v46
    %1064 = vmatprep.subr.mxu0 0.0
    %1065 = vmatpush1.msra.mxu0 %v47
    %1066 = vmatprep.subr.mxu0 0.0
    %1067 = vmatpush1.msra.mxu0 %v48
    %1068 = vmatprep.subr.mxu0 0.0
    %1069 = vmatpush1.msra.mxu0 %v49
    %1070 = vmatprep.subr.mxu0 0.0
    %1071 = vmatpush1.msra.mxu0 %v50
    %1072 = vmatprep.subr.mxu0 0.0
    %1073 = vmatpush1.msra.mxu0 %v51
    %1074 = vmatprep.subr.mxu0 0.0
    %1075 = vmatpush1.msra.mxu0 %v52
    %1076 = vmatprep.subr.mxu0 0.0
    %1077 = vmatpush1.msra.mxu0 %v53
    %1078 = vmatprep.subr.mxu0 0.0
    %1079 = vmatpush1.msra.mxu0 %v54
    %1080 = vmatprep.subr.mxu0 0.0
    %1081 = vmatpush1.msra.mxu0 %v55
    %1082 = vmatprep.subr.mxu0 0.0
    %1083 = vmatpush1.msra.mxu0 %v56
    %1084 = vmatprep.subr.mxu0 0.0
    %1085 = vmatpush1.msra.mxu0 0.0
    %1086 = vmatprep.subr.mxu0 0.0
    %1087 = vmatpush1.msra.mxu0 0.0
    %1088 = vmatprep.subr.mxu0 0.0
    %1089 = vmatpush1.msra.mxu0 0.0
    %1090 = vmatprep.subr.mxu0 0.0
    %1091 = vmatpush1.msra.mxu0 0.0
    %1092 = vmatprep.subr.mxu0 0.0
    %1093 = vmatpush1.msra.mxu0 0.0
    %1094 = vmatprep.subr.mxu0 0.0
    %1095 = vmatpush1.msra.mxu0 0.0
    %1096 = vmatprep.subr.mxu0 0.0
    %1097 = vmatpush1.msra.mxu0 0.0
    %1098 = vmatprep.subr.mxu0 0.0
    %1099 = vmatpush1.msra.mxu0 0.0
    %1100 = vmatprep.subr.mxu0 0.0
    %1101 = vmatpush1.msra.mxu0 0.0
    %1102 = vmatprep.subr.mxu0 0.0
    %1103 = vmatpush1.msra.mxu0 0.0
    %1104 = vmatprep.subr.mxu0 0.0
    %1105 = vmatpush1.msra.mxu0 0.0
    %1106 = vmatprep.subr.mxu0 0.0
    %1107 = vmatpush1.msra.mxu0 0.0
    %1108 = vmatprep.subr.mxu0 0.0
    %1109 = vmatpush1.msra.mxu0 0.0
    %1110 = vmatprep.subr.mxu0 0.0
    %1111 = vmatpush1.msra.mxu0 0.0
    %1112 = vmatprep.subr.mxu0 0.0
    %1113 = vmatpush1.msra.mxu0 0.0
    %1114 = vmatprep.subr.mxu0 0.0
    %1115 = vmatpush1.msra.mxu0 0.0
    %1116 = vmatprep.mubr.f32.mxu0 0.0
    %1117 = vmatmul.mubr.f32.gmra.mrb[0].mxu0 %v1051
    %v1118 = vpop.f32.mrb[0].mxu0
    %v1119 = vadd.f32 %v62, %v1118
    %v1120 = vpop.f32.mrb[0].mxu0
    %1121 = vdwg.mxu0
    %v1122 = vtanh.pop %v1119
    %v1123 = vmul.f32 %v1048, 0.33333334
    %v1124 = vsub.f32 %v1122, %v1123
    %v1125 = vmul.f32 %v1124, 0.06666667
    %v1126 = vadd.f32 %v975, %v1125
    %1127 = vmatprep.subr.mxu0 0.0
    %1128 = vmatpush1.msra.mxu0 %v41
    %1129 = vmatprep.subr.mxu0 0.0
    %1130 = vmatpush1.msra.mxu0 %v42
    %1131 = vmatprep.subr.mxu0 0.0
    %1132 = vmatpush1.msra.mxu0 %v43
    %1133 = vmatprep.subr.mxu0 0.0
    %1134 = vmatpush1.msra.mxu0 %v44
    %1135 = vmatprep.subr.mxu0 0.0
    %1136 = vmatpush1.msra.mxu0 %v45
    %1137 = vmatprep.subr.mxu0 0.0
    %1138 = vmatpush1.msra.mxu0 %v46
    %1139 = vmatprep.subr.mxu0 0.0
    %1140 = vmatpush1.msra.mxu0 %v47
    %1141 = vmatprep.subr.mxu0 0.0
    %1142 = vmatpush1.msra.mxu0 %v48
    %1143 = vmatprep.subr.mxu0 0.0
    %1144 = vmatpush1.msra.mxu0 %v49
    %1145 = vmatprep.subr.mxu0 0.0
    %1146 = vmatpush1.msra.mxu0 %v50
    %1147 = vmatprep.subr.mxu0 0.0
    %1148 = vmatpush1.msra.mxu0 %v51
    %1149 = vmatprep.subr.mxu0 0.0
    %1150 = vmatpush1.msra.mxu0 %v52
    %1151 = vmatprep.subr.mxu0 0.0
    %1152 = vmatpush1.msra.mxu0 %v53
    %1153 = vmatprep.subr.mxu0 0.0
    %1154 = vmatpush1.msra.mxu0 %v54
    %1155 = vmatprep.subr.mxu0 0.0
    %1156 = vmatpush1.msra.mxu0 %v55
    %1157 = vmatprep.subr.mxu0 0.0
    %1158 = vmatpush1.msra.mxu0 %v56
    %1159 = vmatprep.subr.mxu0 0.0
    %1160 = vmatpush1.msra.mxu0 0.0
    %1161 = vmatprep.subr.mxu0 0.0
    %1162 = vmatpush1.msra.mxu0 0.0
    %1163 = vmatprep.subr.mxu0 0.0
    %1164 = vmatpush1.msra.mxu0 0.0
    %1165 = vmatprep.subr.mxu0 0.0
    %1166 = vmatpush1.msra.mxu0 0.0
    %1167 = vmatprep.subr.mxu0 0.0
    %1168 = vmatpush1.msra.mxu0 0.0
    %1169 = vmatprep.subr.mxu0 0.0
    %1170 = vmatpush1.msra.mxu0 0.0
    %1171 = vmatprep.subr.mxu0 0.0
    %1172 = vmatpush1.msra.mxu0 0.0
    %1173 = vmatprep.subr.mxu0 0.0
    %1174 = vmatpush1.msra.mxu0 0.0
    %1175 = vmatprep.subr.mxu0 0.0
    %1176 = vmatpush1.msra.mxu0 0.0
    %1177 = vmatprep.subr.mxu0 0.0
    %1178 = vmatpush1.msra.mxu0 0.0
    %1179 = vmatprep.subr.mxu0 0.0
    %1180 = vmatpush1.msra.mxu0 0.0
    %1181 = vmatprep.subr.mxu0 0.0
    %1182 = vmatpush1.msra.mxu0 0.0
    %1183 = vmatprep.subr.mxu0 0.0
    %1184 = vmatpush1.msra.mxu0 0.0
    %1185 = vmatprep.subr.mxu0 0.0
    %1186 = vmatpush1.msra.mxu0 0.0
    %1187 = vmatprep.subr.mxu0 0.0
    %1188 = vmatpush1.msra.mxu0 0.0
    %1189 = vmatprep.subr.mxu0 0.0
    %1190 = vmatpush1.msra.mxu0 0.0
    %1191 = vmatprep.mubr.f32.mxu0 0.0
    %1192 = vmatmul.mubr.f32.gmra.mrb[0].mxu0 %v1126
    %v1193 = vpop.f32.mrb[0].mxu0
    %v1194 = vadd.f32 %v62, %v1193
    %v1195 = vpop.f32.mrb[0].mxu0
    %1196 = vdwg.mxu0
    %v1197 = vtanh.pop %v1194
    %v1198 = vsub.f32 %v1048, %v1122
    %v1199 = vadd.f32 %v1198, %v1197
    %v1200 = vmul.f32 %v1199, 0.06666667
    %v1201 = vadd.f32 %v975, %v1200
    %1202 = vmatprep.subr.mxu0 0.0
    %1203 = vmatpush1.msra.mxu0 %v41
    %1204 = vmatprep.subr.mxu0 0.0
    %1205 = vmatpush1.msra.mxu0 %v42
    %1206 = vmatprep.subr.mxu0 0.0
    %1207 = vmatpush1.msra.mxu0 %v43
    %1208 = vmatprep.subr.mxu0 0.0
    %1209 = vmatpush1.msra.mxu0 %v44
    %1210 = vmatprep.subr.mxu0 0.0
    %1211 = vmatpush1.msra.mxu0 %v45
    %1212 = vmatprep.subr.mxu0 0.0
    %1213 = vmatpush1.msra.mxu0 %v46
    %1214 = vmatprep.subr.mxu0 0.0
    %1215 = vmatpush1.msra.mxu0 %v47
    %1216 = vmatprep.subr.mxu0 0.0
    %1217 = vmatpush1.msra.mxu0 %v48
    %1218 = vmatprep.subr.mxu0 0.0
    %1219 = vmatpush1.msra.mxu0 %v49
    %1220 = vmatprep.subr.mxu0 0.0
    %1221 = vmatpush1.msra.mxu0 %v50
    %1222 = vmatprep.subr.mxu0 0.0
    %1223 = vmatpush1.msra.mxu0 %v51
    %1224 = vmatprep.subr.mxu0 0.0
    %1225 = vmatpush1.msra.mxu0 %v52
    %1226 = vmatprep.subr.mxu0 0.0
    %1227 = vmatpush1.msra.mxu0 %v53
    %1228 = vmatprep.subr.mxu0 0.0
    %1229 = vmatpush1.msra.mxu0 %v54
    %1230 = vmatprep.subr.mxu0 0.0
    %1231 = vmatpush1.msra.mxu0 %v55
    %1232 = vmatprep.subr.mxu0 0.0
    %1233 = vmatpush1.msra.mxu0 %v56
    %1234 = vmatprep.subr.mxu0 0.0
    %1235 = vmatpush1.msra.mxu0 0.0
    %1236 = vmatprep.subr.mxu0 0.0
    %1237 = vmatpush1.msra.mxu0 0.0
    %1238 = vmatprep.subr.mxu0 0.0
    %1239 = vmatpush1.msra.mxu0 0.0
    %1240 = vmatprep.subr.mxu0 0.0
    %1241 = vmatpush1.msra.mxu0 0.0
    %1242 = vmatprep.subr.mxu0 0.0
    %1243 = vmatpush1.msra.mxu0 0.0
    %1244 = vmatprep.subr.mxu0 0.0
    %1245 = vmatpush1.msra.mxu0 0.0
    %1246 = vmatprep.subr.mxu0 0.0
    %1247 = vmatpush1.msra.mxu0 0.0
    %1248 = vmatprep.subr.mxu0 0.0
    %1249 = vmatpush1.msra.mxu0 0.0
    %1250 = vmatprep.subr.mxu0 0.0
    %1251 = vmatpush1.msra.mxu0 0.0
    %1252 = vmatprep.subr.mxu0 0.0
    %1253 = vmatpush1.msra.mxu0 0.0
    %1254 = vmatprep.subr.mxu0 0.0
    %1255 = vmatpush1.msra.mxu0 0.0
    %1256 = vmatprep.subr.mxu0 0.0
    %1257 = vmatpush1.msra.mxu0 0.0
    %1258 = vmatprep.subr.mxu0 0.0
    %1259 = vmatpush1.msra.mxu0 0.0
    %1260 = vmatprep.subr.mxu0 0.0
    %1261 = vmatpush1.msra.mxu0 0.0
    %1262 = vmatprep.subr.mxu0 0.0
    %1263 = vmatpush1.msra.mxu0 0.0
    %1264 = vmatprep.subr.mxu0 0.0
    %1265 = vmatpush1.msra.mxu0 0.0
    %1266 = vmatprep.mubr.f32.mxu0 0.0
    %1267 = vmatmul.mubr.f32.gmra.mrb[0].mxu0 %v1201
    %v1268 = vpop.f32.mrb[0].mxu0
    %v1269 = vadd.f32 %v62, %v1268
    %v1270 = vpop.f32.mrb[0].mxu0
    %1271 = vdwg.mxu0
    %v1272 = vtanh.pop %v1269
    %v1273 = vadd.f32 %v1122, %v1197
    %v1274 = vmul.f32 %v1273, 3.0
    %v1275 = vadd.f32 %v1048, %v1274
    %v1276 = vadd.f32 %v1275, %v1272
    %v1277 = vmul.f32 %v1276, 0.06666667
    %v1278 = vmul.f32 %v1277, 0.125
    %v1279 = vadd.f32 %v975, %v1278
    %s1280 = scalar_lea.vmem [#allocation7], 32
    %1281 = vst [vmem:[%s1280] sm:$0xff] %v1279
    %1282 = vmatprep.subr.mxu0 0.0
    %1283 = vmatpush1.msra.mxu0 %v41
    %1284 = vmatprep.subr.mxu0 0.0
    %1285 = vmatpush1.msra.mxu0 %v42
    %1286 = vmatprep.subr.mxu0 0.0
    %1287 = vmatpush1.msra.mxu0 %v43
    %1288 = vmatprep.subr.mxu0 0.0
    %1289 = vmatpush1.msra.mxu0 %v44
    %1290 = vmatprep.subr.mxu0 0.0
    %1291 = vmatpush1.msra.mxu0 %v45
    %1292 = vmatprep.subr.mxu0 0.0
    %1293 = vmatpush1.msra.mxu0 %v46
    %1294 = vmatprep.subr.mxu0 0.0
    %1295 = vmatpush1.msra.mxu0 %v47
    %1296 = vmatprep.subr.mxu0 0.0
    %1297 = vmatpush1.msra.mxu0 %v48
    %1298 = vmatprep.subr.mxu0 0.0
    %1299 = vmatpush1.msra.mxu0 %v49
    %1300 = vmatprep.subr.mxu0 0.0
    %1301 = vmatpush1.msra.mxu0 %v50
    %1302 = vmatprep.subr.mxu0 0.0
    %1303 = vmatpush1.msra.mxu0 %v51
    %1304 = vmatprep.subr.mxu0 0.0
    %1305 = vmatpush1.msra.mxu0 %v52
    %1306 = vmatprep.subr.mxu0 0.0
    %1307 = vmatpush1.msra.mxu0 %v53
    %1308 = vmatprep.subr.mxu0 0.0
    %1309 = vmatpush1.msra.mxu0 %v54
    %1310 = vmatprep.subr.mxu0 0.0
    %1311 = vmatpush1.msra.mxu0 %v55
    %1312 = vmatprep.subr.mxu0 0.0
    %1313 = vmatpush1.msra.mxu0 %v56
    %1314 = vmatprep.subr.mxu0 0.0
    %1315 = vmatpush1.msra.mxu0 0.0
    %1316 = vmatprep.subr.mxu0 0.0
    %1317 = vmatpush1.msra.mxu0 0.0
    %1318 = vmatprep.subr.mxu0 0.0
    %1319 = vmatpush1.msra.mxu0 0.0
    %1320 = vmatprep.subr.mxu0 0.0
    %1321 = vmatpush1.msra.mxu0 0.0
    %1322 = vmatprep.subr.mxu0 0.0
    %1323 = vmatpush1.msra.mxu0 0.0
    %1324 = vmatprep.subr.mxu0 0.0
    %1325 = vmatpush1.msra.mxu0 0.0
    %1326 = vmatprep.subr.mxu0 0.0
    %1327 = vmatpush1.msra.mxu0 0.0
    %1328 = vmatprep.subr.mxu0 0.0
    %1329 = vmatpush1.msra.mxu0 0.0
    %1330 = vmatprep.subr.mxu0 0.0
    %1331 = vmatpush1.msra.mxu0 0.0
    %1332 = vmatprep.subr.mxu0 0.0
    %1333 = vmatpush1.msra.mxu0 0.0
    %1334 = vmatprep.subr.mxu0 0.0
    %1335 = vmatpush1.msra.mxu0 0.0
    %1336 = vmatprep.subr.mxu0 0.0
    %1337 = vmatpush1.msra.mxu0 0.0
    %1338 = vmatprep.subr.mxu0 0.0
    %1339 = vmatpush1.msra.mxu0 0.0
    %1340 = vmatprep.subr.mxu0 0.0
    %1341 = vmatpush1.msra.mxu0 0.0
    %1342 = vmatprep.subr.mxu0 0.0
    %1343 = vmatpush1.msra.mxu0 0.0
    %1344 = vmatprep.subr.mxu0 0.0
    %1345 = vmatpush1.msra.mxu0 0.0
    %1346 = vmatprep.mubr.f32.mxu0 0.0
    %1347 = vmatmul.mubr.f32.gmra.mrb[0].mxu0 %v1279
    %v1348 = vpop.f32.mrb[0].mxu0
    %v1349 = vadd.f32 %v62, %v1348
    %v1350 = vpop.f32.mrb[0].mxu0
    %1351 = vdwg.mxu0
    %v1352 = vtanh.pop %v1349
    %v1353 = vmul.f32 %v1352, 0.06666667
    %v1354 = vmul.f32 %v1353, 0.33333334
    %v1355 = vadd.f32 %v1279, %v1354
    %1356 = vmatprep.subr.mxu0 0.0
    %1357 = vmatpush1.msra.mxu0 %v41
    %1358 = vmatprep.subr.mxu0 0.0
    %1359 = vmatpush1.msra.mxu0 %v42
    %1360 = vmatprep.subr.mxu0 0.0
    %1361 = vmatpush1.msra.mxu0 %v43
    %1362 = vmatprep.subr.mxu0 0.0
    %1363 = vmatpush1.msra.mxu0 %v44
    %1364 = vmatprep.subr.mxu0 0.0
    %1365 = vmatpush1.msra.mxu0 %v45
    %1366 = vmatprep.subr.mxu0 0.0
    %1367 = vmatpush1.msra.mxu0 %v46
    %1368 = vmatprep.subr.mxu0 0.0
    %1369 = vmatpush1.msra.mxu0 %v47
    %1370 = vmatprep.subr.mxu0 0.0
    %1371 = vmatpush1.msra.mxu0 %v48
    %1372 = vmatprep.subr.mxu0 0.0
    %1373 = vmatpush1.msra.mxu0 %v49
    %1374 = vmatprep.subr.mxu0 0.0
    %1375 = vmatpush1.msra.mxu0 %v50
    %1376 = vmatprep.subr.mxu0 0.0
    %1377 = vmatpush1.msra.mxu0 %v51
    %1378 = vmatprep.subr.mxu0 0.0
    %1379 = vmatpush1.msra.mxu0 %v52
    %1380 = vmatprep.subr.mxu0 0.0
    %1381 = vmatpush1.msra.mxu0 %v53
    %1382 = vmatprep.subr.mxu0 0.0
    %1383 = vmatpush1.msra.mxu0 %v54
    %1384 = vmatprep.subr.mxu0 0.0
    %1385 = vmatpush1.msra.mxu0 %v55
    %1386 = vmatprep.subr.mxu0 0.0
    %1387 = vmatpush1.msra.mxu0 %v56
    %1388 = vmatprep.subr.mxu0 0.0
    %1389 = vmatpush1.msra.mxu0 0.0
    %1390 = vmatprep.subr.mxu0 0.0
    %1391 = vmatpush1.msra.mxu0 0.0
    %1392 = vmatprep.subr.mxu0 0.0
    %1393 = vmatpush1.msra.mxu0 0.0
    %1394 = vmatprep.subr.mxu0 0.0
    %1395 = vmatpush1.msra.mxu0 0.0
    %1396 = vmatprep.subr.mxu0 0.0
    %1397 = vmatpush1.msra.mxu0 0.0
    %1398 = vmatprep.subr.mxu0 0.0
    %1399 = vmatpush1.msra.mxu0 0.0
    %1400 = vmatprep.subr.mxu0 0.0
    %1401 = vmatpush1.msra.mxu0 0.0
    %1402 = vmatprep.subr.mxu0 0.0
    %1403 = vmatpush1.msra.mxu0 0.0
    %1404 = vmatprep.subr.mxu0 0.0
    %1405 = vmatpush1.msra.mxu0 0.0
    %1406 = vmatprep.subr.mxu0 0.0
    %1407 = vmatpush1.msra.mxu0 0.0
    %1408 = vmatprep.subr.mxu0 0.0
    %1409 = vmatpush1.msra.mxu0 0.0
    %1410 = vmatprep.subr.mxu0 0.0
    %1411 = vmatpush1.msra.mxu0 0.0
    %1412 = vmatprep.subr.mxu0 0.0
    %1413 = vmatpush1.msra.mxu0 0.0
    %1414 = vmatprep.subr.mxu0 0.0
    %1415 = vmatpush1.msra.mxu0 0.0
    %1416 = vmatprep.subr.mxu0 0.0
    %1417 = vmatpush1.msra.mxu0 0.0
    %1418 = vmatprep.subr.mxu0 0.0
    %1419 = vmatpush1.msra.mxu0 0.0
    %1420 = vmatprep.mubr.f32.mxu0 0.0
    %1421 = vmatmul.mubr.f32.gmra.mrb[0].mxu0 %v1355
    %v1422 = vpop.f32.mrb[0].mxu0
    %v1423 = vadd.f32 %v62, %v1422
    %v1424 = vpop.f32.mrb[0].mxu0
    %1425 = vdwg.mxu0
    %v1426 = vtanh.pop %v1423
    %v1427 = vmul.f32 %v1352, 0.33333334
    %v1428 = vsub.f32 %v1426, %v1427
    %v1429 = vmul.f32 %v1428, 0.06666667
    %v1430 = vadd.f32 %v1279, %v1429
    %1431 = vmatprep.subr.mxu0 0.0
    %1432 = vmatpush1.msra.mxu0 %v41
    %1433 = vmatprep.subr.mxu0 0.0
    %1434 = vmatpush1.msra.mxu0 %v42
    %1435 = vmatprep.subr.mxu0 0.0
    %1436 = vmatpush1.msra.mxu0 %v43
    %1437 = vmatprep.subr.mxu0 0.0
    %1438 = vmatpush1.msra.mxu0 %v44
    %1439 = vmatprep.subr.mxu0 0.0
    %1440 = vmatpush1.msra.mxu0 %v45
    %1441 = vmatprep.subr.mxu0 0.0
    %1442 = vmatpush1.msra.mxu0 %v46
    %1443 = vmatprep.subr.mxu0 0.0
    %1444 = vmatpush1.msra.mxu0 %v47
    %1445 = vmatprep.subr.mxu0 0.0
    %1446 = vmatpush1.msra.mxu0 %v48
    %1447 = vmatprep.subr.mxu0 0.0
    %1448 = vmatpush1.msra.mxu0 %v49
    %1449 = vmatprep.subr.mxu0 0.0
    %1450 = vmatpush1.msra.mxu0 %v50
    %1451 = vmatprep.subr.mxu0 0.0
    %1452 = vmatpush1.msra.mxu0 %v51
    %1453 = vmatprep.subr.mxu0 0.0
    %1454 = vmatpush1.msra.mxu0 %v52
    %1455 = vmatprep.subr.mxu0 0.0
    %1456 = vmatpush1.msra.mxu0 %v53
    %1457 = vmatprep.subr.mxu0 0.0
    %1458 = vmatpush1.msra.mxu0 %v54
    %1459 = vmatprep.subr.mxu0 0.0
    %1460 = vmatpush1.msra.mxu0 %v55
    %1461 = vmatprep.subr.mxu0 0.0
    %1462 = vmatpush1.msra.mxu0 %v56
    %1463 = vmatprep.subr.mxu0 0.0
    %1464 = vmatpush1.msra.mxu0 0.0
    %1465 = vmatprep.subr.mxu0 0.0
    %1466 = vmatpush1.msra.mxu0 0.0
    %1467 = vmatprep.subr.mxu0 0.0
    %1468 = vmatpush1.msra.mxu0 0.0
    %1469 = vmatprep.subr.mxu0 0.0
    %1470 = vmatpush1.msra.mxu0 0.0
    %1471 = vmatprep.subr.mxu0 0.0
    %1472 = vmatpush1.msra.mxu0 0.0
    %1473 = vmatprep.subr.mxu0 0.0
    %1474 = vmatpush1.msra.mxu0 0.0
    %1475 = vmatprep.subr.mxu0 0.0
    %1476 = vmatpush1.msra.mxu0 0.0
    %1477 = vmatprep.subr.mxu0 0.0
    %1478 = vmatpush1.msra.mxu0 0.0
    %1479 = vmatprep.subr.mxu0 0.0
    %1480 = vmatpush1.msra.mxu0 0.0
    %1481 = vmatprep.subr.mxu0 0.0
    %1482 = vmatpush1.msra.mxu0 0.0
    %1483 = vmatprep.subr.mxu0 0.0
    %1484 = vmatpush1.msra.mxu0 0.0
    %1485 = vmatprep.subr.mxu0 0.0
    %1486 = vmatpush1.msra.mxu0 0.0
    %1487 = vmatprep.subr.mxu0 0.0
    %1488 = vmatpush1.msra.mxu0 0.0
    %1489 = vmatprep.subr.mxu0 0.0
    %1490 = vmatpush1.msra.mxu0 0.0
    %1491 = vmatprep.subr.mxu0 0.0
    %1492 = vmatpush1.msra.mxu0 0.0
    %1493 = vmatprep.subr.mxu0 0.0
    %1494 = vmatpush1.msra.mxu0 0.0
    %1495 = vmatprep.mubr.f32.mxu0 0.0
    %1496 = vmatmul.mubr.f32.gmra.mrb[0].mxu0 %v1430
    %v1497 = vpop.f32.mrb[0].mxu0
    %v1498 = vadd.f32 %v62, %v1497
    %v1499 = vpop.f32.mrb[0].mxu0
    %1500 = vdwg.mxu0
    %v1501 = vtanh.pop %v1498
    %v1502 = vsub.f32 %v1352, %v1426
    %v1503 = vadd.f32 %v1502, %v1501
    %v1504 = vmul.f32 %v1503, 0.06666667
    %v1505 = vadd.f32 %v1279, %v1504
    %1506 = vmatprep.subr.mxu0 0.0
    %1507 = vmatpush1.msra.mxu0 %v41
    %1508 = vmatprep.subr.mxu0 0.0
    %1509 = vmatpush1.msra.mxu0 %v42
    %1510 = vmatprep.subr.mxu0 0.0
    %1511 = vmatpush1.msra.mxu0 %v43
    %1512 = vmatprep.subr.mxu0 0.0
    %1513 = vmatpush1.msra.mxu0 %v44
    %1514 = vmatprep.subr.mxu0 0.0
    %1515 = vmatpush1.msra.mxu0 %v45
    %1516 = vmatprep.subr.mxu0 0.0
    %1517 = vmatpush1.msra.mxu0 %v46
    %1518 = vmatprep.subr.mxu0 0.0
    %1519 = vmatpush1.msra.mxu0 %v47
    %1520 = vmatprep.subr.mxu0 0.0
    %1521 = vmatpush1.msra.mxu0 %v48
    %1522 = vmatprep.subr.mxu0 0.0
    %1523 = vmatpush1.msra.mxu0 %v49
    %1524 = vmatprep.subr.mxu0 0.0
    %1525 = vmatpush1.msra.mxu0 %v50
    %1526 = vmatprep.subr.mxu0 0.0
    %1527 = vmatpush1.msra.mxu0 %v51
    %1528 = vmatprep.subr.mxu0 0.0
    %1529 = vmatpush1.msra.mxu0 %v52
    %1530 = vmatprep.subr.mxu0 0.0
    %1531 = vmatpush1.msra.mxu0 %v53
    %1532 = vmatprep.subr.mxu0 0.0
    %1533 = vmatpush1.msra.mxu0 %v54
    %1534 = vmatprep.subr.mxu0 0.0
    %1535 = vmatpush1.msra.mxu0 %v55
    %1536 = vmatprep.subr.mxu0 0.0
    %1537 = vmatpush1.msra.mxu0 %v56
    %1538 = vmatprep.subr.mxu0 0.0
    %1539 = vmatpush1.msra.mxu0 0.0
    %1540 = vmatprep.subr.mxu0 0.0
    %1541 = vmatpush1.msra.mxu0 0.0
    %1542 = vmatprep.subr.mxu0 0.0
    %1543 = vmatpush1.msra.mxu0 0.0
    %1544 = vmatprep.subr.mxu0 0.0
    %1545 = vmatpush1.msra.mxu0 0.0
    %1546 = vmatprep.subr.mxu0 0.0
    %1547 = vmatpush1.msra.mxu0 0.0
    %1548 = vmatprep.subr.mxu0 0.0
    %1549 = vmatpush1.msra.mxu0 0.0
    %1550 = vmatprep.subr.mxu0 0.0
    %1551 = vmatpush1.msra.mxu0 0.0
    %1552 = vmatprep.subr.mxu0 0.0
    %1553 = vmatpush1.msra.mxu0 0.0
    %1554 = vmatprep.subr.mxu0 0.0
    %1555 = vmatpush1.msra.mxu0 0.0
    %1556 = vmatprep.subr.mxu0 0.0
    %1557 = vmatpush1.msra.mxu0 0.0
    %1558 = vmatprep.subr.mxu0 0.0
    %1559 = vmatpush1.msra.mxu0 0.0
    %1560 = vmatprep.subr.mxu0 0.0
    %1561 = vmatpush1.msra.mxu0 0.0
    %1562 = vmatprep.subr.mxu0 0.0
    %1563 = vmatpush1.msra.mxu0 0.0
    %1564 = vmatprep.subr.mxu0 0.0
    %1565 = vmatpush1.msra.mxu0 0.0
    %1566 = vmatprep.subr.mxu0 0.0
    %1567 = vmatpush1.msra.mxu0 0.0
    %1568 = vmatprep.subr.mxu0 0.0
    %1569 = vmatpush1.msra.mxu0 0.0
    %1570 = vmatprep.mubr.f32.mxu0 0.0
    %1571 = vmatmul.mubr.f32.gmra.mrb[0].mxu0 %v1505
    %v1572 = vpop.f32.mrb[0].mxu0
    %v1573 = vadd.f32 %v62, %v1572
    %v1574 = vpop.f32.mrb[0].mxu0
    %1575 = vdwg.mxu0
    %v1576 = vtanh.pop %v1573
    %v1577 = vadd.f32 %v1426, %v1501
    %v1578 = vmul.f32 %v1577, 3.0
    %v1579 = vadd.f32 %v1352, %v1578
    %v1580 = vadd.f32 %v1579, %v1576
    %v1581 = vmul.f32 %v1580, 0.06666667
    %v1582 = vmul.f32 %v1581, 0.125
    %v1583 = vadd.f32 %v1279, %v1582
    %s1584 = scalar_lea.vmem [#allocation7], 40
    %1585 = vst [vmem:[%s1584] sm:$0xff] %v1583
    %1586 = vmatprep.subr.mxu0 0.0
    %1587 = vmatpush1.msra.mxu0 %v41
    %1588 = vmatprep.subr.mxu0 0.0
    %1589 = vmatpush1.msra.mxu0 %v42
    %1590 = vmatprep.subr.mxu0 0.0
    %1591 = vmatpush1.msra.mxu0 %v43
    %1592 = vmatprep.subr.mxu0 0.0
    %1593 = vmatpush1.msra.mxu0 %v44
    %1594 = vmatprep.subr.mxu0 0.0
    %1595 = vmatpush1.msra.mxu0 %v45
    %1596 = vmatprep.subr.mxu0 0.0
    %1597 = vmatpush1.msra.mxu0 %v46
    %1598 = vmatprep.subr.mxu0 0.0
    %1599 = vmatpush1.msra.mxu0 %v47
    %1600 = vmatprep.subr.mxu0 0.0
    %1601 = vmatpush1.msra.mxu0 %v48
    %1602 = vmatprep.subr.mxu0 0.0
    %1603 = vmatpush1.msra.mxu0 %v49
    %1604 = vmatprep.subr.mxu0 0.0
    %1605 = vmatpush1.msra.mxu0 %v50
    %1606 = vmatprep.subr.mxu0 0.0
    %1607 = vmatpush1.msra.mxu0 %v51
    %1608 = vmatprep.subr.mxu0 0.0
    %1609 = vmatpush1.msra.mxu0 %v52
    %1610 = vmatprep.subr.mxu0 0.0
    %1611 = vmatpush1.msra.mxu0 %v53
    %1612 = vmatprep.subr.mxu0 0.0
    %1613 = vmatpush1.msra.mxu0 %v54
    %1614 = vmatprep.subr.mxu0 0.0
    %1615 = vmatpush1.msra.mxu0 %v55
    %1616 = vmatprep.subr.mxu0 0.0
    %1617 = vmatpush1.msra.mxu0 %v56
    %1618 = vmatprep.subr.mxu0 0.0
    %1619 = vmatpush1.msra.mxu0 0.0
    %1620 = vmatprep.subr.mxu0 0.0
    %1621 = vmatpush1.msra.mxu0 0.0
    %1622 = vmatprep.subr.mxu0 0.0
    %1623 = vmatpush1.msra.mxu0 0.0
    %1624 = vmatprep.subr.mxu0 0.0
    %1625 = vmatpush1.msra.mxu0 0.0
    %1626 = vmatprep.subr.mxu0 0.0
    %1627 = vmatpush1.msra.mxu0 0.0
    %1628 = vmatprep.subr.mxu0 0.0
    %1629 = vmatpush1.msra.mxu0 0.0
    %1630 = vmatprep.subr.mxu0 0.0
    %1631 = vmatpush1.msra.mxu0 0.0
    %1632 = vmatprep.subr.mxu0 0.0
    %1633 = vmatpush1.msra.mxu0 0.0
    %1634 = vmatprep.subr.mxu0 0.0
    %1635 = vmatpush1.msra.mxu0 0.0
    %1636 = vmatprep.subr.mxu0 0.0
    %1637 = vmatpush1.msra.mxu0 0.0
    %1638 = vmatprep.subr.mxu0 0.0
    %1639 = vmatpush1.msra.mxu0 0.0
    %1640 = vmatprep.subr.mxu0 0.0
    %1641 = vmatpush1.msra.mxu0 0.0
    %1642 = vmatprep.subr.mxu0 0.0
    %1643 = vmatpush1.msra.mxu0 0.0
    %1644 = vmatprep.subr.mxu0 0.0
    %1645 = vmatpush1.msra.mxu0 0.0
    %1646 = vmatprep.subr.mxu0 0.0
    %1647 = vmatpush1.msra.mxu0 0.0
    %1648 = vmatprep.subr.mxu0 0.0
    %1649 = vmatpush1.msra.mxu0 0.0
    %1650 = vmatprep.mubr.f32.mxu0 0.0
    %1651 = vmatmul.mubr.f32.gmra.mrb[0].mxu0 %v1583
    %v1652 = vpop.f32.mrb[0].mxu0
    %v1653 = vadd.f32 %v62, %v1652
    %v1654 = vpop.f32.mrb[0].mxu0
    %1655 = vdwg.mxu0
    %v1656 = vtanh.pop %v1653
    %v1657 = vmul.f32 %v1656, 0.06666667
    %v1658 = vmul.f32 %v1657, 0.33333334
    %v1659 = vadd.f32 %v1583, %v1658
    %1660 = vmatprep.subr.mxu0 0.0
    %1661 = vmatpush1.msra.mxu0 %v41
    %1662 = vmatprep.subr.mxu0 0.0
    %1663 = vmatpush1.msra.mxu0 %v42
    %1664 = vmatprep.subr.mxu0 0.0
    %1665 = vmatpush1.msra.mxu0 %v43
    %1666 = vmatprep.subr.mxu0 0.0
    %1667 = vmatpush1.msra.mxu0 %v44
    %1668 = vmatprep.subr.mxu0 0.0
    %1669 = vmatpush1.msra.mxu0 %v45
    %1670 = vmatprep.subr.mxu0 0.0
    %1671 = vmatpush1.msra.mxu0 %v46
    %1672 = vmatprep.subr.mxu0 0.0
    %1673 = vmatpush1.msra.mxu0 %v47
    %1674 = vmatprep.subr.mxu0 0.0
    %1675 = vmatpush1.msra.mxu0 %v48
    %1676 = vmatprep.subr.mxu0 0.0
    %1677 = vmatpush1.msra.mxu0 %v49
    %1678 = vmatprep.subr.mxu0 0.0
    %1679 = vmatpush1.msra.mxu0 %v50
    %1680 = vmatprep.subr.mxu0 0.0
    %1681 = vmatpush1.msra.mxu0 %v51
    %1682 = vmatprep.subr.mxu0 0.0
    %1683 = vmatpush1.msra.mxu0 %v52
    %1684 = vmatprep.subr.mxu0 0.0
    %1685 = vmatpush1.msra.mxu0 %v53
    %1686 = vmatprep.subr.mxu0 0.0
    %1687 = vmatpush1.msra.mxu0 %v54
    %1688 = vmatprep.subr.mxu0 0.0
    %1689 = vmatpush1.msra.mxu0 %v55
    %1690 = vmatprep.subr.mxu0 0.0
    %1691 = vmatpush1.msra.mxu0 %v56
    %1692 = vmatprep.subr.mxu0 0.0
    %1693 = vmatpush1.msra.mxu0 0.0
    %1694 = vmatprep.subr.mxu0 0.0
    %1695 = vmatpush1.msra.mxu0 0.0
    %1696 = vmatprep.subr.mxu0 0.0
    %1697 = vmatpush1.msra.mxu0 0.0
    %1698 = vmatprep.subr.mxu0 0.0
    %1699 = vmatpush1.msra.mxu0 0.0
    %1700 = vmatprep.subr.mxu0 0.0
    %1701 = vmatpush1.msra.mxu0 0.0
    %1702 = vmatprep.subr.mxu0 0.0
    %1703 = vmatpush1.msra.mxu0 0.0
    %1704 = vmatprep.subr.mxu0 0.0
    %1705 = vmatpush1.msra.mxu0 0.0
    %1706 = vmatprep.subr.mxu0 0.0
    %1707 = vmatpush1.msra.mxu0 0.0
    %1708 = vmatprep.subr.mxu0 0.0
    %1709 = vmatpush1.msra.mxu0 0.0
    %1710 = vmatprep.subr.mxu0 0.0
    %1711 = vmatpush1.msra.mxu0 0.0
    %1712 = vmatprep.subr.mxu0 0.0
    %1713 = vmatpush1.msra.mxu0 0.0
    %1714 = vmatprep.subr.mxu0 0.0
    %1715 = vmatpush1.msra.mxu0 0.0
    %1716 = vmatprep.subr.mxu0 0.0
    %1717 = vmatpush1.msra.mxu0 0.0
    %1718 = vmatprep.subr.mxu0 0.0
    %1719 = vmatpush1.msra.mxu0 0.0
    %1720 = vmatprep.subr.mxu0 0.0
    %1721 = vmatpush1.msra.mxu0 0.0
    %1722 = vmatprep.subr.mxu0 0.0
    %1723 = vmatpush1.msra.mxu0 0.0
    %1724 = vmatprep.mubr.f32.mxu0 0.0
    %1725 = vmatmul.mubr.f32.gmra.mrb[0].mxu0 %v1659
    %v1726 = vpop.f32.mrb[0].mxu0
    %v1727 = vadd.f32 %v62, %v1726
    %v1728 = vpop.f32.mrb[0].mxu0
    %1729 = vdwg.mxu0
    %v1730 = vtanh.pop %v1727
    %v1731 = vmul.f32 %v1656, 0.33333334
    %v1732 = vsub.f32 %v1730, %v1731
    %v1733 = vmul.f32 %v1732, 0.06666667
    %v1734 = vadd.f32 %v1583, %v1733
    %1735 = vmatprep.subr.mxu0 0.0
    %1736 = vmatpush1.msra.mxu0 %v41
    %1737 = vmatprep.subr.mxu0 0.0
    %1738 = vmatpush1.msra.mxu0 %v42
    %1739 = vmatprep.subr.mxu0 0.0
    %1740 = vmatpush1.msra.mxu0 %v43
    %1741 = vmatprep.subr.mxu0 0.0
    %1742 = vmatpush1.msra.mxu0 %v44
    %1743 = vmatprep.subr.mxu0 0.0
    %1744 = vmatpush1.msra.mxu0 %v45
    %1745 = vmatprep.subr.mxu0 0.0
    %1746 = vmatpush1.msra.mxu0 %v46
    %1747 = vmatprep.subr.mxu0 0.0
    %1748 = vmatpush1.msra.mxu0 %v47
    %1749 = vmatprep.subr.mxu0 0.0
    %1750 = vmatpush1.msra.mxu0 %v48
    %1751 = vmatprep.subr.mxu0 0.0
    %1752 = vmatpush1.msra.mxu0 %v49
    %1753 = vmatprep.subr.mxu0 0.0
    %1754 = vmatpush1.msra.mxu0 %v50
    %1755 = vmatprep.subr.mxu0 0.0
    %1756 = vmatpush1.msra.mxu0 %v51
    %1757 = vmatprep.subr.mxu0 0.0
    %1758 = vmatpush1.msra.mxu0 %v52
    %1759 = vmatprep.subr.mxu0 0.0
    %1760 = vmatpush1.msra.mxu0 %v53
    %1761 = vmatprep.subr.mxu0 0.0
    %1762 = vmatpush1.msra.mxu0 %v54
    %1763 = vmatprep.subr.mxu0 0.0
    %1764 = vmatpush1.msra.mxu0 %v55
    %1765 = vmatprep.subr.mxu0 0.0
    %1766 = vmatpush1.msra.mxu0 %v56
    %1767 = vmatprep.subr.mxu0 0.0
    %1768 = vmatpush1.msra.mxu0 0.0
    %1769 = vmatprep.subr.mxu0 0.0
    %1770 = vmatpush1.msra.mxu0 0.0
    %1771 = vmatprep.subr.mxu0 0.0
    %1772 = vmatpush1.msra.mxu0 0.0
    %1773 = vmatprep.subr.mxu0 0.0
    %1774 = vmatpush1.msra.mxu0 0.0
    %1775 = vmatprep.subr.mxu0 0.0
    %1776 = vmatpush1.msra.mxu0 0.0
    %1777 = vmatprep.subr.mxu0 0.0
    %1778 = vmatpush1.msra.mxu0 0.0
    %1779 = vmatprep.subr.mxu0 0.0
    %1780 = vmatpush1.msra.mxu0 0.0
    %1781 = vmatprep.subr.mxu0 0.0
    %1782 = vmatpush1.msra.mxu0 0.0
    %1783 = vmatprep.subr.mxu0 0.0
    %1784 = vmatpush1.msra.mxu0 0.0
    %1785 = vmatprep.subr.mxu0 0.0
    %1786 = vmatpush1.msra.mxu0 0.0
    %1787 = vmatprep.subr.mxu0 0.0
    %1788 = vmatpush1.msra.mxu0 0.0
    %1789 = vmatprep.subr.mxu0 0.0
    %1790 = vmatpush1.msra.mxu0 0.0
    %1791 = vmatprep.subr.mxu0 0.0
    %1792 = vmatpush1.msra.mxu0 0.0
    %1793 = vmatprep.subr.mxu0 0.0
    %1794 = vmatpush1.msra.mxu0 0.0
    %1795 = vmatprep.subr.mxu0 0.0
    %1796 = vmatpush1.msra.mxu0 0.0
    %1797 = vmatprep.subr.mxu0 0.0
    %1798 = vmatpush1.msra.mxu0 0.0
    %1799 = vmatprep.mubr.f32.mxu0 0.0
    %1800 = vmatmul.mubr.f32.gmra.mrb[0].mxu0 %v1734
    %v1801 = vpop.f32.mrb[0].mxu0
    %v1802 = vadd.f32 %v62, %v1801
    %v1803 = vpop.f32.mrb[0].mxu0
    %1804 = vdwg.mxu0
    %v1805 = vtanh.pop %v1802
    %v1806 = vsub.f32 %v1656, %v1730
    %v1807 = vadd.f32 %v1806, %v1805
    %v1808 = vmul.f32 %v1807, 0.06666667
    %v1809 = vadd.f32 %v1583, %v1808
    %1810 = vmatprep.subr.mxu0 0.0
    %1811 = vmatpush1.msra.mxu0 %v41
    %1812 = vmatprep.subr.mxu0 0.0
    %1813 = vmatpush1.msra.mxu0 %v42
    %1814 = vmatprep.subr.mxu0 0.0
    %1815 = vmatpush1.msra.mxu0 %v43
    %1816 = vmatprep.subr.mxu0 0.0
    %1817 = vmatpush1.msra.mxu0 %v44
    %1818 = vmatprep.subr.mxu0 0.0
    %1819 = vmatpush1.msra.mxu0 %v45
    %1820 = vmatprep.subr.mxu0 0.0
    %1821 = vmatpush1.msra.mxu0 %v46
    %1822 = vmatprep.subr.mxu0 0.0
    %1823 = vmatpush1.msra.mxu0 %v47
    %1824 = vmatprep.subr.mxu0 0.0
    %1825 = vmatpush1.msra.mxu0 %v48
    %1826 = vmatprep.subr.mxu0 0.0
    %1827 = vmatpush1.msra.mxu0 %v49
    %1828 = vmatprep.subr.mxu0 0.0
    %1829 = vmatpush1.msra.mxu0 %v50
    %1830 = vmatprep.subr.mxu0 0.0
    %1831 = vmatpush1.msra.mxu0 %v51
    %1832 = vmatprep.subr.mxu0 0.0
    %1833 = vmatpush1.msra.mxu0 %v52
    %1834 = vmatprep.subr.mxu0 0.0
    %1835 = vmatpush1.msra.mxu0 %v53
    %1836 = vmatprep.subr.mxu0 0.0
    %1837 = vmatpush1.msra.mxu0 %v54
    %1838 = vmatprep.subr.mxu0 0.0
    %1839 = vmatpush1.msra.mxu0 %v55
    %1840 = vmatprep.subr.mxu0 0.0
    %1841 = vmatpush1.msra.mxu0 %v56
    %1842 = vmatprep.subr.mxu0 0.0
    %1843 = vmatpush1.msra.mxu0 0.0
    %1844 = vmatprep.subr.mxu0 0.0
    %1845 = vmatpush1.msra.mxu0 0.0
    %1846 = vmatprep.subr.mxu0 0.0
    %1847 = vmatpush1.msra.mxu0 0.0
    %1848 = vmatprep.subr.mxu0 0.0
    %1849 = vmatpush1.msra.mxu0 0.0
    %1850 = vmatprep.subr.mxu0 0.0
    %1851 = vmatpush1.msra.mxu0 0.0
    %1852 = vmatprep.subr.mxu0 0.0
    %1853 = vmatpush1.msra.mxu0 0.0
    %1854 = vmatprep.subr.mxu0 0.0
    %1855 = vmatpush1.msra.mxu0 0.0
    %1856 = vmatprep.subr.mxu0 0.0
    %1857 = vmatpush1.msra.mxu0 0.0
    %1858 = vmatprep.subr.mxu0 0.0
    %1859 = vmatpush1.msra.mxu0 0.0
    %1860 = vmatprep.subr.mxu0 0.0
    %1861 = vmatpush1.msra.mxu0 0.0
    %1862 = vmatprep.subr.mxu0 0.0
    %1863 = vmatpush1.msra.mxu0 0.0
    %1864 = vmatprep.subr.mxu0 0.0
    %1865 = vmatpush1.msra.mxu0 0.0
    %1866 = vmatprep.subr.mxu0 0.0
    %1867 = vmatpush1.msra.mxu0 0.0
    %1868 = vmatprep.subr.mxu0 0.0
    %1869 = vmatpush1.msra.mxu0 0.0
    %1870 = vmatprep.subr.mxu0 0.0
    %1871 = vmatpush1.msra.mxu0 0.0
    %1872 = vmatprep.subr.mxu0 0.0
    %1873 = vmatpush1.msra.mxu0 0.0
    %1874 = vmatprep.mubr.f32.mxu0 0.0
    %1875 = vmatmul.mubr.f32.gmra.mrb[0].mxu0 %v1809
    %v1876 = vpop.f32.mrb[0].mxu0
    %v1877 = vadd.f32 %v62, %v1876
    %v1878 = vpop.f32.mrb[0].mxu0
    %1879 = vdwg.mxu0
    %v1880 = vtanh.pop %v1877
    %v1881 = vadd.f32 %v1730, %v1805
    %v1882 = vmul.f32 %v1881, 3.0
    %v1883 = vadd.f32 %v1656, %v1882
    %v1884 = vadd.f32 %v1883, %v1880
    %v1885 = vmul.f32 %v1884, 0.06666667
    %v1886 = vmul.f32 %v1885, 0.125
    %v1887 = vadd.f32 %v1583, %v1886
    %s1888 = scalar_lea.vmem [#allocation7], 48
    %1889 = vst [vmem:[%s1888] sm:$0xff] %v1887
    %1890 = vmatprep.subr.mxu0 0.0
    %1891 = vmatpush1.msra.mxu0 %v41
    %1892 = vmatprep.subr.mxu0 0.0
    %1893 = vmatpush1.msra.mxu0 %v42
    %1894 = vmatprep.subr.mxu0 0.0
    %1895 = vmatpush1.msra.mxu0 %v43
    %1896 = vmatprep.subr.mxu0 0.0
    %1897 = vmatpush1.msra.mxu0 %v44
    %1898 = vmatprep.subr.mxu0 0.0
    %1899 = vmatpush1.msra.mxu0 %v45
    %1900 = vmatprep.subr.mxu0 0.0
    %1901 = vmatpush1.msra.mxu0 %v46
    %1902 = vmatprep.subr.mxu0 0.0
    %1903 = vmatpush1.msra.mxu0 %v47
    %1904 = vmatprep.subr.mxu0 0.0
    %1905 = vmatpush1.msra.mxu0 %v48
    %1906 = vmatprep.subr.mxu0 0.0
    %1907 = vmatpush1.msra.mxu0 %v49
    %1908 = vmatprep.subr.mxu0 0.0
    %1909 = vmatpush1.msra.mxu0 %v50
    %1910 = vmatprep.subr.mxu0 0.0
    %1911 = vmatpush1.msra.mxu0 %v51
    %1912 = vmatprep.subr.mxu0 0.0
    %1913 = vmatpush1.msra.mxu0 %v52
    %1914 = vmatprep.subr.mxu0 0.0
    %1915 = vmatpush1.msra.mxu0 %v53
    %1916 = vmatprep.subr.mxu0 0.0
    %1917 = vmatpush1.msra.mxu0 %v54
    %1918 = vmatprep.subr.mxu0 0.0
    %1919 = vmatpush1.msra.mxu0 %v55
    %1920 = vmatprep.subr.mxu0 0.0
    %1921 = vmatpush1.msra.mxu0 %v56
    %1922 = vmatprep.subr.mxu0 0.0
    %1923 = vmatpush1.msra.mxu0 0.0
    %1924 = vmatprep.subr.mxu0 0.0
    %1925 = vmatpush1.msra.mxu0 0.0
    %1926 = vmatprep.subr.mxu0 0.0
    %1927 = vmatpush1.msra.mxu0 0.0
    %1928 = vmatprep.subr.mxu0 0.0
    %1929 = vmatpush1.msra.mxu0 0.0
    %1930 = vmatprep.subr.mxu0 0.0
    %1931 = vmatpush1.msra.mxu0 0.0
    %1932 = vmatprep.subr.mxu0 0.0
    %1933 = vmatpush1.msra.mxu0 0.0
    %1934 = vmatprep.subr.mxu0 0.0
    %1935 = vmatpush1.msra.mxu0 0.0
    %1936 = vmatprep.subr.mxu0 0.0
    %1937 = vmatpush1.msra.mxu0 0.0
    %1938 = vmatprep.subr.mxu0 0.0
    %1939 = vmatpush1.msra.mxu0 0.0
    %1940 = vmatprep.subr.mxu0 0.0
    %1941 = vmatpush1.msra.mxu0 0.0
    %1942 = vmatprep.subr.mxu0 0.0
    %1943 = vmatpush1.msra.mxu0 0.0
    %1944 = vmatprep.subr.mxu0 0.0
    %1945 = vmatpush1.msra.mxu0 0.0
    %1946 = vmatprep.subr.mxu0 0.0
    %1947 = vmatpush1.msra.mxu0 0.0
    %1948 = vmatprep.subr.mxu0 0.0
    %1949 = vmatpush1.msra.mxu0 0.0
    %1950 = vmatprep.subr.mxu0 0.0
    %1951 = vmatpush1.msra.mxu0 0.0
    %1952 = vmatprep.subr.mxu0 0.0
    %1953 = vmatpush1.msra.mxu0 0.0
    %1954 = vmatprep.mubr.f32.mxu0 0.0
    %1955 = vmatmul.mubr.f32.gmra.mrb[0].mxu0 %v1887
    %v1956 = vpop.f32.mrb[0].mxu0
    %v1957 = vadd.f32 %v62, %v1956
    %v1958 = vpop.f32.mrb[0].mxu0
    %1959 = vdwg.mxu0
    %v1960 = vtanh.pop %v1957
    %v1961 = vmul.f32 %v1960, 0.06666667
    %v1962 = vmul.f32 %v1961, 0.33333334
    %v1963 = vadd.f32 %v1887, %v1962
    %1964 = vmatprep.subr.mxu0 0.0
    %1965 = vmatpush1.msra.mxu0 %v41
    %1966 = vmatprep.subr.mxu0 0.0
    %1967 = vmatpush1.msra.mxu0 %v42
    %1968 = vmatprep.subr.mxu0 0.0
    %1969 = vmatpush1.msra.mxu0 %v43
    %1970 = vmatprep.subr.mxu0 0.0
    %1971 = vmatpush1.msra.mxu0 %v44
    %1972 = vmatprep.subr.mxu0 0.0
    %1973 = vmatpush1.msra.mxu0 %v45
    %1974 = vmatprep.subr.mxu0 0.0
    %1975 = vmatpush1.msra.mxu0 %v46
    %1976 = vmatprep.subr.mxu0 0.0
    %1977 = vmatpush1.msra.mxu0 %v47
    %1978 = vmatprep.subr.mxu0 0.0
    %1979 = vmatpush1.msra.mxu0 %v48
    %1980 = vmatprep.subr.mxu0 0.0
    %1981 = vmatpush1.msra.mxu0 %v49
    %1982 = vmatprep.subr.mxu0 0.0
    %1983 = vmatpush1.msra.mxu0 %v50
    %1984 = vmatprep.subr.mxu0 0.0
    %1985 = vmatpush1.msra.mxu0 %v51
    %1986 = vmatprep.subr.mxu0 0.0
    %1987 = vmatpush1.msra.mxu0 %v52
    %1988 = vmatprep.subr.mxu0 0.0
    %1989 = vmatpush1.msra.mxu0 %v53
    %1990 = vmatprep.subr.mxu0 0.0
    %1991 = vmatpush1.msra.mxu0 %v54
    %1992 = vmatprep.subr.mxu0 0.0
    %1993 = vmatpush1.msra.mxu0 %v55
    %1994 = vmatprep.subr.mxu0 0.0
    %1995 = vmatpush1.msra.mxu0 %v56
    %1996 = vmatprep.subr.mxu0 0.0
    %1997 = vmatpush1.msra.mxu0 0.0
    %1998 = vmatprep.subr.mxu0 0.0
    %1999 = vmatpush1.msra.mxu0 0.0
    %2000 = vmatprep.subr.mxu0 0.0
    %2001 = vmatpush1.msra.mxu0 0.0
    %2002 = vmatprep.subr.mxu0 0.0
    %2003 = vmatpush1.msra.mxu0 0.0
    %2004 = vmatprep.subr.mxu0 0.0
    %2005 = vmatpush1.msra.mxu0 0.0
    %2006 = vmatprep.subr.mxu0 0.0
    %2007 = vmatpush1.msra.mxu0 0.0
    %2008 = vmatprep.subr.mxu0 0.0
    %2009 = vmatpush1.msra.mxu0 0.0
    %2010 = vmatprep.subr.mxu0 0.0
    %2011 = vmatpush1.msra.mxu0 0.0
    %2012 = vmatprep.subr.mxu0 0.0
    %2013 = vmatpush1.msra.mxu0 0.0
    %2014 = vmatprep.subr.mxu0 0.0
    %2015 = vmatpush1.msra.mxu0 0.0
    %2016 = vmatprep.subr.mxu0 0.0
    %2017 = vmatpush1.msra.mxu0 0.0
    %2018 = vmatprep.subr.mxu0 0.0
    %2019 = vmatpush1.msra.mxu0 0.0
    %2020 = vmatprep.subr.mxu0 0.0
    %2021 = vmatpush1.msra.mxu0 0.0
    %2022 = vmatprep.subr.mxu0 0.0
    %2023 = vmatpush1.msra.mxu0 0.0
    %2024 = vmatprep.subr.mxu0 0.0
    %2025 = vmatpush1.msra.mxu0 0.0
    %2026 = vmatprep.subr.mxu0 0.0
    %2027 = vmatpush1.msra.mxu0 0.0
    %2028 = vmatprep.mubr.f32.mxu0 0.0
    %2029 = vmatmul.mubr.f32.gmra.mrb[0].mxu0 %v1963
    %v2030 = vpop.f32.mrb[0].mxu0
    %v2031 = vadd.f32 %v62, %v2030
    %v2032 = vpop.f32.mrb[0].mxu0
    %2033 = vdwg.mxu0
    %v2034 = vtanh.pop %v2031
    %v2035 = vmul.f32 %v1960, 0.33333334
    %v2036 = vsub.f32 %v2034, %v2035
    %v2037 = vmul.f32 %v2036, 0.06666667
    %v2038 = vadd.f32 %v1887, %v2037
    %2039 = vmatprep.subr.mxu0 0.0
    %2040 = vmatpush1.msra.mxu0 %v41
    %2041 = vmatprep.subr.mxu0 0.0
    %2042 = vmatpush1.msra.mxu0 %v42
    %2043 = vmatprep.subr.mxu0 0.0
    %2044 = vmatpush1.msra.mxu0 %v43
    %2045 = vmatprep.subr.mxu0 0.0
    %2046 = vmatpush1.msra.mxu0 %v44
    %2047 = vmatprep.subr.mxu0 0.0
    %2048 = vmatpush1.msra.mxu0 %v45
    %2049 = vmatprep.subr.mxu0 0.0
    %2050 = vmatpush1.msra.mxu0 %v46
    %2051 = vmatprep.subr.mxu0 0.0
    %2052 = vmatpush1.msra.mxu0 %v47
    %2053 = vmatprep.subr.mxu0 0.0
    %2054 = vmatpush1.msra.mxu0 %v48
    %2055 = vmatprep.subr.mxu0 0.0
    %2056 = vmatpush1.msra.mxu0 %v49
    %2057 = vmatprep.subr.mxu0 0.0
    %2058 = vmatpush1.msra.mxu0 %v50
    %2059 = vmatprep.subr.mxu0 0.0
    %2060 = vmatpush1.msra.mxu0 %v51
    %2061 = vmatprep.subr.mxu0 0.0
    %2062 = vmatpush1.msra.mxu0 %v52
    %2063 = vmatprep.subr.mxu0 0.0
    %2064 = vmatpush1.msra.mxu0 %v53
    %2065 = vmatprep.subr.mxu0 0.0
    %2066 = vmatpush1.msra.mxu0 %v54
    %2067 = vmatprep.subr.mxu0 0.0
    %2068 = vmatpush1.msra.mxu0 %v55
    %2069 = vmatprep.subr.mxu0 0.0
    %2070 = vmatpush1.msra.mxu0 %v56
    %2071 = vmatprep.subr.mxu0 0.0
    %2072 = vmatpush1.msra.mxu0 0.0
    %2073 = vmatprep.subr.mxu0 0.0
    %2074 = vmatpush1.msra.mxu0 0.0
    %2075 = vmatprep.subr.mxu0 0.0
    %2076 = vmatpush1.msra.mxu0 0.0
    %2077 = vmatprep.subr.mxu0 0.0
    %2078 = vmatpush1.msra.mxu0 0.0
    %2079 = vmatprep.subr.mxu0 0.0
    %2080 = vmatpush1.msra.mxu0 0.0
    %2081 = vmatprep.subr.mxu0 0.0
    %2082 = vmatpush1.msra.mxu0 0.0
    %2083 = vmatprep.subr.mxu0 0.0
    %2084 = vmatpush1.msra.mxu0 0.0
    %2085 = vmatprep.subr.mxu0 0.0
    %2086 = vmatpush1.msra.mxu0 0.0
    %2087 = vmatprep.subr.mxu0 0.0
    %2088 = vmatpush1.msra.mxu0 0.0
    %2089 = vmatprep.subr.mxu0 0.0
    %2090 = vmatpush1.msra.mxu0 0.0
    %2091 = vmatprep.subr.mxu0 0.0
    %2092 = vmatpush1.msra.mxu0 0.0
    %2093 = vmatprep.subr.mxu0 0.0
    %2094 = vmatpush1.msra.mxu0 0.0
    %2095 = vmatprep.subr.mxu0 0.0
    %2096 = vmatpush1.msra.mxu0 0.0
    %2097 = vmatprep.subr.mxu0 0.0
    %2098 = vmatpush1.msra.mxu0 0.0
    %2099 = vmatprep.subr.mxu0 0.0
    %2100 = vmatpush1.msra.mxu0 0.0
    %2101 = vmatprep.subr.mxu0 0.0
    %2102 = vmatpush1.msra.mxu0 0.0
    %2103 = vmatprep.mubr.f32.mxu0 0.0
    %2104 = vmatmul.mubr.f32.gmra.mrb[0].mxu0 %v2038
    %v2105 = vpop.f32.mrb[0].mxu0
    %v2106 = vadd.f32 %v62, %v2105
    %v2107 = vpop.f32.mrb[0].mxu0
    %2108 = vdwg.mxu0
    %v2109 = vtanh.pop %v2106
    %v2110 = vsub.f32 %v1960, %v2034
    %v2111 = vadd.f32 %v2110, %v2109
    %v2112 = vmul.f32 %v2111, 0.06666667
    %v2113 = vadd.f32 %v1887, %v2112
    %2114 = vmatprep.subr.mxu0 0.0
    %2115 = vmatpush1.msra.mxu0 %v41
    %2116 = vmatprep.subr.mxu0 0.0
    %2117 = vmatpush1.msra.mxu0 %v42
    %2118 = vmatprep.subr.mxu0 0.0
    %2119 = vmatpush1.msra.mxu0 %v43
    %2120 = vmatprep.subr.mxu0 0.0
    %2121 = vmatpush1.msra.mxu0 %v44
    %2122 = vmatprep.subr.mxu0 0.0
    %2123 = vmatpush1.msra.mxu0 %v45
    %2124 = vmatprep.subr.mxu0 0.0
    %2125 = vmatpush1.msra.mxu0 %v46
    %2126 = vmatprep.subr.mxu0 0.0
    %2127 = vmatpush1.msra.mxu0 %v47
    %2128 = vmatprep.subr.mxu0 0.0
    %2129 = vmatpush1.msra.mxu0 %v48
    %2130 = vmatprep.subr.mxu0 0.0
    %2131 = vmatpush1.msra.mxu0 %v49
    %2132 = vmatprep.subr.mxu0 0.0
    %2133 = vmatpush1.msra.mxu0 %v50
    %2134 = vmatprep.subr.mxu0 0.0
    %2135 = vmatpush1.msra.mxu0 %v51
    %2136 = vmatprep.subr.mxu0 0.0
    %2137 = vmatpush1.msra.mxu0 %v52
    %2138 = vmatprep.subr.mxu0 0.0
    %2139 = vmatpush1.msra.mxu0 %v53
    %2140 = vmatprep.subr.mxu0 0.0
    %2141 = vmatpush1.msra.mxu0 %v54
    %2142 = vmatprep.subr.mxu0 0.0
    %2143 = vmatpush1.msra.mxu0 %v55
    %2144 = vmatprep.subr.mxu0 0.0
    %2145 = vmatpush1.msra.mxu0 %v56
    %2146 = vmatprep.subr.mxu0 0.0
    %2147 = vmatpush1.msra.mxu0 0.0
    %2148 = vmatprep.subr.mxu0 0.0
    %2149 = vmatpush1.msra.mxu0 0.0
    %2150 = vmatprep.subr.mxu0 0.0
    %2151 = vmatpush1.msra.mxu0 0.0
    %2152 = vmatprep.subr.mxu0 0.0
    %2153 = vmatpush1.msra.mxu0 0.0
    %2154 = vmatprep.subr.mxu0 0.0
    %2155 = vmatpush1.msra.mxu0 0.0
    %2156 = vmatprep.subr.mxu0 0.0
    %2157 = vmatpush1.msra.mxu0 0.0
    %2158 = vmatprep.subr.mxu0 0.0
    %2159 = vmatpush1.msra.mxu0 0.0
    %2160 = vmatprep.subr.mxu0 0.0
    %2161 = vmatpush1.msra.mxu0 0.0
    %2162 = vmatprep.subr.mxu0 0.0
    %2163 = vmatpush1.msra.mxu0 0.0
    %2164 = vmatprep.subr.mxu0 0.0
    %2165 = vmatpush1.msra.mxu0 0.0
    %2166 = vmatprep.subr.mxu0 0.0
    %2167 = vmatpush1.msra.mxu0 0.0
    %2168 = vmatprep.subr.mxu0 0.0
    %2169 = vmatpush1.msra.mxu0 0.0
    %2170 = vmatprep.subr.mxu0 0.0
    %2171 = vmatpush1.msra.mxu0 0.0
    %2172 = vmatprep.subr.mxu0 0.0
    %2173 = vmatpush1.msra.mxu0 0.0
    %2174 = vmatprep.subr.mxu0 0.0
    %2175 = vmatpush1.msra.mxu0 0.0
    %2176 = vmatprep.subr.mxu0 0.0
    %2177 = vmatpush1.msra.mxu0 0.0
    %2178 = vmatprep.mubr.f32.mxu0 0.0
    %2179 = vmatmul.mubr.f32.gmra.mrb[0].mxu0 %v2113
    %v2180 = vpop.f32.mrb[0].mxu0
    %v2181 = vadd.f32 %v62, %v2180
    %v2182 = vpop.f32.mrb[0].mxu0
    %2183 = vdwg.mxu0
    %v2184 = vtanh.pop %v2181
    %v2185 = vadd.f32 %v2034, %v2109
    %v2186 = vmul.f32 %v2185, 3.0
    %v2187 = vadd.f32 %v1960, %v2186
    %v2188 = vadd.f32 %v2187, %v2184
    %v2189 = vmul.f32 %v2188, 0.06666667
    %v2190 = vmul.f32 %v2189, 0.125
    %v2191 = vadd.f32 %v1887, %v2190
    %s2192 = scalar_lea.vmem [#allocation7], 56
    %2193 = vst [vmem:[%s2192] sm:$0xff] %v2191
    %2194 = vmatprep.subr.mxu0 0.0
    %2195 = vmatpush1.msra.mxu0 %v41
    %2196 = vmatprep.subr.mxu0 0.0
    %2197 = vmatpush1.msra.mxu0 %v42
    %2198 = vmatprep.subr.mxu0 0.0
    %2199 = vmatpush1.msra.mxu0 %v43
    %2200 = vmatprep.subr.mxu0 0.0
    %2201 = vmatpush1.msra.mxu0 %v44
    %2202 = vmatprep.subr.mxu0 0.0
    %2203 = vmatpush1.msra.mxu0 %v45
    %2204 = vmatprep.subr.mxu0 0.0
    %2205 = vmatpush1.msra.mxu0 %v46
    %2206 = vmatprep.subr.mxu0 0.0
    %2207 = vmatpush1.msra.mxu0 %v47
    %2208 = vmatprep.subr.mxu0 0.0
    %2209 = vmatpush1.msra.mxu0 %v48
    %2210 = vmatprep.subr.mxu0 0.0
    %2211 = vmatpush1.msra.mxu0 %v49
    %2212 = vmatprep.subr.mxu0 0.0
    %2213 = vmatpush1.msra.mxu0 %v50
    %2214 = vmatprep.subr.mxu0 0.0
    %2215 = vmatpush1.msra.mxu0 %v51
    %2216 = vmatprep.subr.mxu0 0.0
    %2217 = vmatpush1.msra.mxu0 %v52
    %2218 = vmatprep.subr.mxu0 0.0
    %2219 = vmatpush1.msra.mxu0 %v53
    %2220 = vmatprep.subr.mxu0 0.0
    %2221 = vmatpush1.msra.mxu0 %v54
    %2222 = vmatprep.subr.mxu0 0.0
    %2223 = vmatpush1.msra.mxu0 %v55
    %2224 = vmatprep.subr.mxu0 0.0
    %2225 = vmatpush1.msra.mxu0 %v56
    %2226 = vmatprep.subr.mxu0 0.0
    %2227 = vmatpush1.msra.mxu0 0.0
    %2228 = vmatprep.subr.mxu0 0.0
    %2229 = vmatpush1.msra.mxu0 0.0
    %2230 = vmatprep.subr.mxu0 0.0
    %2231 = vmatpush1.msra.mxu0 0.0
    %2232 = vmatprep.subr.mxu0 0.0
    %2233 = vmatpush1.msra.mxu0 0.0
    %2234 = vmatprep.subr.mxu0 0.0
    %2235 = vmatpush1.msra.mxu0 0.0
    %2236 = vmatprep.subr.mxu0 0.0
    %2237 = vmatpush1.msra.mxu0 0.0
    %2238 = vmatprep.subr.mxu0 0.0
    %2239 = vmatpush1.msra.mxu0 0.0
    %2240 = vmatprep.subr.mxu0 0.0
    %2241 = vmatpush1.msra.mxu0 0.0
    %2242 = vmatprep.subr.mxu0 0.0
    %2243 = vmatpush1.msra.mxu0 0.0
    %2244 = vmatprep.subr.mxu0 0.0
    %2245 = vmatpush1.msra.mxu0 0.0
    %2246 = vmatprep.subr.mxu0 0.0
    %2247 = vmatpush1.msra.mxu0 0.0
    %2248 = vmatprep.subr.mxu0 0.0
    %2249 = vmatpush1.msra.mxu0 0.0
    %2250 = vmatprep.subr.mxu0 0.0
    %2251 = vmatpush1.msra.mxu0 0.0
    %2252 = vmatprep.subr.mxu0 0.0
    %2253 = vmatpush1.msra.mxu0 0.0
    %2254 = vmatprep.subr.mxu0 0.0
    %2255 = vmatpush1.msra.mxu0 0.0
    %2256 = vmatprep.subr.mxu0 0.0
    %2257 = vmatpush1.msra.mxu0 0.0
    %2258 = vmatprep.mubr.f32.mxu0 0.0
    %2259 = vmatmul.mubr.f32.gmra.mrb[0].mxu0 %v2191
    %v2260 = vpop.f32.mrb[0].mxu0
    %v2261 = vadd.f32 %v62, %v2260
    %v2262 = vpop.f32.mrb[0].mxu0
    %2263 = vdwg.mxu0
    %v2264 = vtanh.pop %v2261
    %v2265 = vmul.f32 %v2264, 0.06666667
    %v2266 = vmul.f32 %v2265, 0.33333334
    %v2267 = vadd.f32 %v2191, %v2266
    %2268 = vmatprep.subr.mxu0 0.0
    %2269 = vmatpush1.msra.mxu0 %v41
    %2270 = vmatprep.subr.mxu0 0.0
    %2271 = vmatpush1.msra.mxu0 %v42
    %2272 = vmatprep.subr.mxu0 0.0
    %2273 = vmatpush1.msra.mxu0 %v43
    %2274 = vmatprep.subr.mxu0 0.0
    %2275 = vmatpush1.msra.mxu0 %v44
    %2276 = vmatprep.subr.mxu0 0.0
    %2277 = vmatpush1.msra.mxu0 %v45
    %2278 = vmatprep.subr.mxu0 0.0
    %2279 = vmatpush1.msra.mxu0 %v46
    %2280 = vmatprep.subr.mxu0 0.0
    %2281 = vmatpush1.msra.mxu0 %v47
    %2282 = vmatprep.subr.mxu0 0.0
    %2283 = vmatpush1.msra.mxu0 %v48
    %2284 = vmatprep.subr.mxu0 0.0
    %2285 = vmatpush1.msra.mxu0 %v49
    %2286 = vmatprep.subr.mxu0 0.0
    %2287 = vmatpush1.msra.mxu0 %v50
    %2288 = vmatprep.subr.mxu0 0.0
    %2289 = vmatpush1.msra.mxu0 %v51
    %2290 = vmatprep.subr.mxu0 0.0
    %2291 = vmatpush1.msra.mxu0 %v52
    %2292 = vmatprep.subr.mxu0 0.0
    %2293 = vmatpush1.msra.mxu0 %v53
    %2294 = vmatprep.subr.mxu0 0.0
    %2295 = vmatpush1.msra.mxu0 %v54
    %2296 = vmatprep.subr.mxu0 0.0
    %2297 = vmatpush1.msra.mxu0 %v55
    %2298 = vmatprep.subr.mxu0 0.0
    %2299 = vmatpush1.msra.mxu0 %v56
    %2300 = vmatprep.subr.mxu0 0.0
    %2301 = vmatpush1.msra.mxu0 0.0
    %2302 = vmatprep.subr.mxu0 0.0
    %2303 = vmatpush1.msra.mxu0 0.0
    %2304 = vmatprep.subr.mxu0 0.0
    %2305 = vmatpush1.msra.mxu0 0.0
    %2306 = vmatprep.subr.mxu0 0.0
    %2307 = vmatpush1.msra.mxu0 0.0
    %2308 = vmatprep.subr.mxu0 0.0
    %2309 = vmatpush1.msra.mxu0 0.0
    %2310 = vmatprep.subr.mxu0 0.0
    %2311 = vmatpush1.msra.mxu0 0.0
    %2312 = vmatprep.subr.mxu0 0.0
    %2313 = vmatpush1.msra.mxu0 0.0
    %2314 = vmatprep.subr.mxu0 0.0
    %2315 = vmatpush1.msra.mxu0 0.0
    %2316 = vmatprep.subr.mxu0 0.0
    %2317 = vmatpush1.msra.mxu0 0.0
    %2318 = vmatprep.subr.mxu0 0.0
    %2319 = vmatpush1.msra.mxu0 0.0
    %2320 = vmatprep.subr.mxu0 0.0
    %2321 = vmatpush1.msra.mxu0 0.0
    %2322 = vmatprep.subr.mxu0 0.0
    %2323 = vmatpush1.msra.mxu0 0.0
    %2324 = vmatprep.subr.mxu0 0.0
    %2325 = vmatpush1.msra.mxu0 0.0
    %2326 = vmatprep.subr.mxu0 0.0
    %2327 = vmatpush1.msra.mxu0 0.0
    %2328 = vmatprep.subr.mxu0 0.0
    %2329 = vmatpush1.msra.mxu0 0.0
    %2330 = vmatprep.subr.mxu0 0.0
    %2331 = vmatpush1.msra.mxu0 0.0
    %2332 = vmatprep.mubr.f32.mxu0 0.0
    %2333 = vmatmul.mubr.f32.gmra.mrb[0].mxu0 %v2267
    %v2334 = vpop.f32.mrb[0].mxu0
    %v2335 = vadd.f32 %v62, %v2334
    %v2336 = vpop.f32.mrb[0].mxu0
    %2337 = vdwg.mxu0
    %v2338 = vtanh.pop %v2335
    %v2339 = vmul.f32 %v2264, 0.33333334
    %v2340 = vsub.f32 %v2338, %v2339
    %v2341 = vmul.f32 %v2340, 0.06666667
    %v2342 = vadd.f32 %v2191, %v2341
    %2343 = vmatprep.subr.mxu0 0.0
    %2344 = vmatpush1.msra.mxu0 %v41
    %2345 = vmatprep.subr.mxu0 0.0
    %2346 = vmatpush1.msra.mxu0 %v42
    %2347 = vmatprep.subr.mxu0 0.0
    %2348 = vmatpush1.msra.mxu0 %v43
    %2349 = vmatprep.subr.mxu0 0.0
    %2350 = vmatpush1.msra.mxu0 %v44
    %2351 = vmatprep.subr.mxu0 0.0
    %2352 = vmatpush1.msra.mxu0 %v45
    %2353 = vmatprep.subr.mxu0 0.0
    %2354 = vmatpush1.msra.mxu0 %v46
    %2355 = vmatprep.subr.mxu0 0.0
    %2356 = vmatpush1.msra.mxu0 %v47
    %2357 = vmatprep.subr.mxu0 0.0
    %2358 = vmatpush1.msra.mxu0 %v48
    %2359 = vmatprep.subr.mxu0 0.0
    %2360 = vmatpush1.msra.mxu0 %v49
    %2361 = vmatprep.subr.mxu0 0.0
    %2362 = vmatpush1.msra.mxu0 %v50
    %2363 = vmatprep.subr.mxu0 0.0
    %2364 = vmatpush1.msra.mxu0 %v51
    %2365 = vmatprep.subr.mxu0 0.0
    %2366 = vmatpush1.msra.mxu0 %v52
    %2367 = vmatprep.subr.mxu0 0.0
    %2368 = vmatpush1.msra.mxu0 %v53
    %2369 = vmatprep.subr.mxu0 0.0
    %2370 = vmatpush1.msra.mxu0 %v54
    %2371 = vmatprep.subr.mxu0 0.0
    %2372 = vmatpush1.msra.mxu0 %v55
    %2373 = vmatprep.subr.mxu0 0.0
    %2374 = vmatpush1.msra.mxu0 %v56
    %2375 = vmatprep.subr.mxu0 0.0
    %2376 = vmatpush1.msra.mxu0 0.0
    %2377 = vmatprep.subr.mxu0 0.0
    %2378 = vmatpush1.msra.mxu0 0.0
    %2379 = vmatprep.subr.mxu0 0.0
    %2380 = vmatpush1.msra.mxu0 0.0
    %2381 = vmatprep.subr.mxu0 0.0
    %2382 = vmatpush1.msra.mxu0 0.0
    %2383 = vmatprep.subr.mxu0 0.0
    %2384 = vmatpush1.msra.mxu0 0.0
    %2385 = vmatprep.subr.mxu0 0.0
    %2386 = vmatpush1.msra.mxu0 0.0
    %2387 = vmatprep.subr.mxu0 0.0
    %2388 = vmatpush1.msra.mxu0 0.0
    %2389 = vmatprep.subr.mxu0 0.0
    %2390 = vmatpush1.msra.mxu0 0.0
    %2391 = vmatprep.subr.mxu0 0.0
    %2392 = vmatpush1.msra.mxu0 0.0
    %2393 = vmatprep.subr.mxu0 0.0
    %2394 = vmatpush1.msra.mxu0 0.0
    %2395 = vmatprep.subr.mxu0 0.0
    %2396 = vmatpush1.msra.mxu0 0.0
    %2397 = vmatprep.subr.mxu0 0.0
    %2398 = vmatpush1.msra.mxu0 0.0
    %2399 = vmatprep.subr.mxu0 0.0
    %2400 = vmatpush1.msra.mxu0 0.0
    %2401 = vmatprep.subr.mxu0 0.0
    %2402 = vmatpush1.msra.mxu0 0.0
    %2403 = vmatprep.subr.mxu0 0.0
    %2404 = vmatpush1.msra.mxu0 0.0
    %2405 = vmatprep.subr.mxu0 0.0
    %2406 = vmatpush1.msra.mxu0 0.0
    %2407 = vmatprep.mubr.f32.mxu0 0.0
    %2408 = vmatmul.mubr.f32.gmra.mrb[0].mxu0 %v2342
    %v2409 = vpop.f32.mrb[0].mxu0
    %v2410 = vadd.f32 %v62, %v2409
    %v2411 = vpop.f32.mrb[0].mxu0
    %2412 = vdwg.mxu0
    %v2413 = vtanh.pop %v2410
    %v2414 = vsub.f32 %v2264, %v2338
    %v2415 = vadd.f32 %v2414, %v2413
    %v2416 = vmul.f32 %v2415, 0.06666667
    %v2417 = vadd.f32 %v2191, %v2416
    %2418 = vmatprep.subr.mxu0 0.0
    %2419 = vmatpush1.msra.mxu0 %v41
    %2420 = vmatprep.subr.mxu0 0.0
    %2421 = vmatpush1.msra.mxu0 %v42
    %2422 = vmatprep.subr.mxu0 0.0
    %2423 = vmatpush1.msra.mxu0 %v43
    %2424 = vmatprep.subr.mxu0 0.0
    %2425 = vmatpush1.msra.mxu0 %v44
    %2426 = vmatprep.subr.mxu0 0.0
    %2427 = vmatpush1.msra.mxu0 %v45
    %2428 = vmatprep.subr.mxu0 0.0
    %2429 = vmatpush1.msra.mxu0 %v46
    %2430 = vmatprep.subr.mxu0 0.0
    %2431 = vmatpush1.msra.mxu0 %v47
    %2432 = vmatprep.subr.mxu0 0.0
    %2433 = vmatpush1.msra.mxu0 %v48
    %2434 = vmatprep.subr.mxu0 0.0
    %2435 = vmatpush1.msra.mxu0 %v49
    %2436 = vmatprep.subr.mxu0 0.0
    %2437 = vmatpush1.msra.mxu0 %v50
    %2438 = vmatprep.subr.mxu0 0.0
    %2439 = vmatpush1.msra.mxu0 %v51
    %2440 = vmatprep.subr.mxu0 0.0
    %2441 = vmatpush1.msra.mxu0 %v52
    %2442 = vmatprep.subr.mxu0 0.0
    %2443 = vmatpush1.msra.mxu0 %v53
    %2444 = vmatprep.subr.mxu0 0.0
    %2445 = vmatpush1.msra.mxu0 %v54
    %2446 = vmatprep.subr.mxu0 0.0
    %2447 = vmatpush1.msra.mxu0 %v55
    %2448 = vmatprep.subr.mxu0 0.0
    %2449 = vmatpush1.msra.mxu0 %v56
    %2450 = vmatprep.subr.mxu0 0.0
    %2451 = vmatpush1.msra.mxu0 0.0
    %2452 = vmatprep.subr.mxu0 0.0
    %2453 = vmatpush1.msra.mxu0 0.0
    %2454 = vmatprep.subr.mxu0 0.0
    %2455 = vmatpush1.msra.mxu0 0.0
    %2456 = vmatprep.subr.mxu0 0.0
    %2457 = vmatpush1.msra.mxu0 0.0
    %2458 = vmatprep.subr.mxu0 0.0
    %2459 = vmatpush1.msra.mxu0 0.0
    %2460 = vmatprep.subr.mxu0 0.0
    %2461 = vmatpush1.msra.mxu0 0.0
    %2462 = vmatprep.subr.mxu0 0.0
    %2463 = vmatpush1.msra.mxu0 0.0
    %2464 = vmatprep.subr.mxu0 0.0
    %2465 = vmatpush1.msra.mxu0 0.0
    %2466 = vmatprep.subr.mxu0 0.0
    %2467 = vmatpush1.msra.mxu0 0.0
    %2468 = vmatprep.subr.mxu0 0.0
    %2469 = vmatpush1.msra.mxu0 0.0
    %2470 = vmatprep.subr.mxu0 0.0
    %2471 = vmatpush1.msra.mxu0 0.0
    %2472 = vmatprep.subr.mxu0 0.0
    %2473 = vmatpush1.msra.mxu0 0.0
    %2474 = vmatprep.subr.mxu0 0.0
    %2475 = vmatpush1.msra.mxu0 0.0
    %2476 = vmatprep.subr.mxu0 0.0
    %2477 = vmatpush1.msra.mxu0 0.0
    %2478 = vmatprep.subr.mxu0 0.0
    %2479 = vmatpush1.msra.mxu0 0.0
    %2480 = vmatprep.subr.mxu0 0.0
    %2481 = vmatpush1.msra.mxu0 0.0
    %2482 = vmatprep.mubr.f32.mxu0 0.0
    %2483 = vmatmul.mubr.f32.gmra.mrb[0].mxu0 %v2417
    %v2484 = vpop.f32.mrb[0].mxu0
    %v2485 = vadd.f32 %v62, %v2484
    %v2486 = vpop.f32.mrb[0].mxu0
    %2487 = vdwg.mxu0
    %v2488 = vtanh.pop %v2485
    %v2489 = vadd.f32 %v2338, %v2413
    %v2490 = vmul.f32 %v2489, 3.0
    %v2491 = vadd.f32 %v2264, %v2490
    %v2492 = vadd.f32 %v2491, %v2488
    %v2493 = vmul.f32 %v2492, 0.06666667
    %v2494 = vmul.f32 %v2493, 0.125
    %v2495 = vadd.f32 %v2191, %v2494
    %s2496 = scalar_lea.vmem [#allocation7], 64
    %2497 = vst [vmem:[%s2496] sm:$0xff] %v2495
    %2498 = vmatprep.subr.mxu0 0.0
    %2499 = vmatpush1.msra.mxu0 %v41
    %2500 = vmatprep.subr.mxu0 0.0
    %2501 = vmatpush1.msra.mxu0 %v42
    %2502 = vmatprep.subr.mxu0 0.0
    %2503 = vmatpush1.msra.mxu0 %v43
    %2504 = vmatprep.subr.mxu0 0.0
    %2505 = vmatpush1.msra.mxu0 %v44
    %2506 = vmatprep.subr.mxu0 0.0
    %2507 = vmatpush1.msra.mxu0 %v45
    %2508 = vmatprep.subr.mxu0 0.0
    %2509 = vmatpush1.msra.mxu0 %v46
    %2510 = vmatprep.subr.mxu0 0.0
    %2511 = vmatpush1.msra.mxu0 %v47
    %2512 = vmatprep.subr.mxu0 0.0
    %2513 = vmatpush1.msra.mxu0 %v48
    %2514 = vmatprep.subr.mxu0 0.0
    %2515 = vmatpush1.msra.mxu0 %v49
    %2516 = vmatprep.subr.mxu0 0.0
    %2517 = vmatpush1.msra.mxu0 %v50
    %2518 = vmatprep.subr.mxu0 0.0
    %2519 = vmatpush1.msra.mxu0 %v51
    %2520 = vmatprep.subr.mxu0 0.0
    %2521 = vmatpush1.msra.mxu0 %v52
    %2522 = vmatprep.subr.mxu0 0.0
    %2523 = vmatpush1.msra.mxu0 %v53
    %2524 = vmatprep.subr.mxu0 0.0
    %2525 = vmatpush1.msra.mxu0 %v54
    %2526 = vmatprep.subr.mxu0 0.0
    %2527 = vmatpush1.msra.mxu0 %v55
    %2528 = vmatprep.subr.mxu0 0.0
    %2529 = vmatpush1.msra.mxu0 %v56
    %2530 = vmatprep.subr.mxu0 0.0
    %2531 = vmatpush1.msra.mxu0 0.0
    %2532 = vmatprep.subr.mxu0 0.0
    %2533 = vmatpush1.msra.mxu0 0.0
    %2534 = vmatprep.subr.mxu0 0.0
    %2535 = vmatpush1.msra.mxu0 0.0
    %2536 = vmatprep.subr.mxu0 0.0
    %2537 = vmatpush1.msra.mxu0 0.0
    %2538 = vmatprep.subr.mxu0 0.0
    %2539 = vmatpush1.msra.mxu0 0.0
    %2540 = vmatprep.subr.mxu0 0.0
    %2541 = vmatpush1.msra.mxu0 0.0
    %2542 = vmatprep.subr.mxu0 0.0
    %2543 = vmatpush1.msra.mxu0 0.0
    %2544 = vmatprep.subr.mxu0 0.0
    %2545 = vmatpush1.msra.mxu0 0.0
    %2546 = vmatprep.subr.mxu0 0.0
    %2547 = vmatpush1.msra.mxu0 0.0
    %2548 = vmatprep.subr.mxu0 0.0
    %2549 = vmatpush1.msra.mxu0 0.0
    %2550 = vmatprep.subr.mxu0 0.0
    %2551 = vmatpush1.msra.mxu0 0.0
    %2552 = vmatprep.subr.mxu0 0.0
    %2553 = vmatpush1.msra.mxu0 0.0
    %2554 = vmatprep.subr.mxu0 0.0
    %2555 = vmatpush1.msra.mxu0 0.0
    %2556 = vmatprep.subr.mxu0 0.0
    %2557 = vmatpush1.msra.mxu0 0.0
    %2558 = vmatprep.subr.mxu0 0.0
    %2559 = vmatpush1.msra.mxu0 0.0
    %2560 = vmatprep.subr.mxu0 0.0
    %2561 = vmatpush1.msra.mxu0 0.0
    %2562 = vmatprep.mubr.f32.mxu0 0.0
    %2563 = vmatmul.mubr.f32.gmra.mrb[0].mxu0 %v2495
    %v2564 = vpop.f32.mrb[0].mxu0
    %v2565 = vadd.f32 %v62, %v2564
    %v2566 = vpop.f32.mrb[0].mxu0
    %2567 = vdwg.mxu0
    %v2568 = vtanh.pop %v2565
    %v2569 = vmul.f32 %v2568, 0.06666667
    %v2570 = vmul.f32 %v2569, 0.33333334
    %v2571 = vadd.f32 %v2495, %v2570
    %2572 = vmatprep.subr.mxu0 0.0
    %2573 = vmatpush1.msra.mxu0 %v41
    %2574 = vmatprep.subr.mxu0 0.0
    %2575 = vmatpush1.msra.mxu0 %v42
    %2576 = vmatprep.subr.mxu0 0.0
    %2577 = vmatpush1.msra.mxu0 %v43
    %2578 = vmatprep.subr.mxu0 0.0
    %2579 = vmatpush1.msra.mxu0 %v44
    %2580 = vmatprep.subr.mxu0 0.0
    %2581 = vmatpush1.msra.mxu0 %v45
    %2582 = vmatprep.subr.mxu0 0.0
    %2583 = vmatpush1.msra.mxu0 %v46
    %2584 = vmatprep.subr.mxu0 0.0
    %2585 = vmatpush1.msra.mxu0 %v47
    %2586 = vmatprep.subr.mxu0 0.0
    %2587 = vmatpush1.msra.mxu0 %v48
    %2588 = vmatprep.subr.mxu0 0.0
    %2589 = vmatpush1.msra.mxu0 %v49
    %2590 = vmatprep.subr.mxu0 0.0
    %2591 = vmatpush1.msra.mxu0 %v50
    %2592 = vmatprep.subr.mxu0 0.0
    %2593 = vmatpush1.msra.mxu0 %v51
    %2594 = vmatprep.subr.mxu0 0.0
    %2595 = vmatpush1.msra.mxu0 %v52
    %2596 = vmatprep.subr.mxu0 0.0
    %2597 = vmatpush1.msra.mxu0 %v53
    %2598 = vmatprep.subr.mxu0 0.0
    %2599 = vmatpush1.msra.mxu0 %v54
    %2600 = vmatprep.subr.mxu0 0.0
    %2601 = vmatpush1.msra.mxu0 %v55
    %2602 = vmatprep.subr.mxu0 0.0
    %2603 = vmatpush1.msra.mxu0 %v56
    %2604 = vmatprep.subr.mxu0 0.0
    %2605 = vmatpush1.msra.mxu0 0.0
    %2606 = vmatprep.subr.mxu0 0.0
    %2607 = vmatpush1.msra.mxu0 0.0
    %2608 = vmatprep.subr.mxu0 0.0
    %2609 = vmatpush1.msra.mxu0 0.0
    %2610 = vmatprep.subr.mxu0 0.0
    %2611 = vmatpush1.msra.mxu0 0.0
    %2612 = vmatprep.subr.mxu0 0.0
    %2613 = vmatpush1.msra.mxu0 0.0
    %2614 = vmatprep.subr.mxu0 0.0
    %2615 = vmatpush1.msra.mxu0 0.0
    %2616 = vmatprep.subr.mxu0 0.0
    %2617 = vmatpush1.msra.mxu0 0.0
    %2618 = vmatprep.subr.mxu0 0.0
    %2619 = vmatpush1.msra.mxu0 0.0
    %2620 = vmatprep.subr.mxu0 0.0
    %2621 = vmatpush1.msra.mxu0 0.0
    %2622 = vmatprep.subr.mxu0 0.0
    %2623 = vmatpush1.msra.mxu0 0.0
    %2624 = vmatprep.subr.mxu0 0.0
    %2625 = vmatpush1.msra.mxu0 0.0
    %2626 = vmatprep.subr.mxu0 0.0
    %2627 = vmatpush1.msra.mxu0 0.0
    %2628 = vmatprep.subr.mxu0 0.0
    %2629 = vmatpush1.msra.mxu0 0.0
    %2630 = vmatprep.subr.mxu0 0.0
    %2631 = vmatpush1.msra.mxu0 0.0
    %2632 = vmatprep.subr.mxu0 0.0
    %2633 = vmatpush1.msra.mxu0 0.0
    %2634 = vmatprep.subr.mxu0 0.0
    %2635 = vmatpush1.msra.mxu0 0.0
    %2636 = vmatprep.mubr.f32.mxu0 0.0
    %2637 = vmatmul.mubr.f32.gmra.mrb[0].mxu0 %v2571
    %v2638 = vpop.f32.mrb[0].mxu0
    %v2639 = vadd.f32 %v62, %v2638
    %v2640 = vpop.f32.mrb[0].mxu0
    %2641 = vdwg.mxu0
    %v2642 = vtanh.pop %v2639
    %v2643 = vmul.f32 %v2568, 0.33333334
    %v2644 = vsub.f32 %v2642, %v2643
    %v2645 = vmul.f32 %v2644, 0.06666667
    %v2646 = vadd.f32 %v2495, %v2645
    %2647 = vmatprep.subr.mxu0 0.0
    %2648 = vmatpush1.msra.mxu0 %v41
    %2649 = vmatprep.subr.mxu0 0.0
    %2650 = vmatpush1.msra.mxu0 %v42
    %2651 = vmatprep.subr.mxu0 0.0
    %2652 = vmatpush1.msra.mxu0 %v43
    %2653 = vmatprep.subr.mxu0 0.0
    %2654 = vmatpush1.msra.mxu0 %v44
    %2655 = vmatprep.subr.mxu0 0.0
    %2656 = vmatpush1.msra.mxu0 %v45
    %2657 = vmatprep.subr.mxu0 0.0
    %2658 = vmatpush1.msra.mxu0 %v46
    %2659 = vmatprep.subr.mxu0 0.0
    %2660 = vmatpush1.msra.mxu0 %v47
    %2661 = vmatprep.subr.mxu0 0.0
    %2662 = vmatpush1.msra.mxu0 %v48
    %2663 = vmatprep.subr.mxu0 0.0
    %2664 = vmatpush1.msra.mxu0 %v49
    %2665 = vmatprep.subr.mxu0 0.0
    %2666 = vmatpush1.msra.mxu0 %v50
    %2667 = vmatprep.subr.mxu0 0.0
    %2668 = vmatpush1.msra.mxu0 %v51
    %2669 = vmatprep.subr.mxu0 0.0
    %2670 = vmatpush1.msra.mxu0 %v52
    %2671 = vmatprep.subr.mxu0 0.0
    %2672 = vmatpush1.msra.mxu0 %v53
    %2673 = vmatprep.subr.mxu0 0.0
    %2674 = vmatpush1.msra.mxu0 %v54
    %2675 = vmatprep.subr.mxu0 0.0
    %2676 = vmatpush1.msra.mxu0 %v55
    %2677 = vmatprep.subr.mxu0 0.0
    %2678 = vmatpush1.msra.mxu0 %v56
    %2679 = vmatprep.subr.mxu0 0.0
    %2680 = vmatpush1.msra.mxu0 0.0
    %2681 = vmatprep.subr.mxu0 0.0
    %2682 = vmatpush1.msra.mxu0 0.0
    %2683 = vmatprep.subr.mxu0 0.0
    %2684 = vmatpush1.msra.mxu0 0.0
    %2685 = vmatprep.subr.mxu0 0.0
    %2686 = vmatpush1.msra.mxu0 0.0
    %2687 = vmatprep.subr.mxu0 0.0
    %2688 = vmatpush1.msra.mxu0 0.0
    %2689 = vmatprep.subr.mxu0 0.0
    %2690 = vmatpush1.msra.mxu0 0.0
    %2691 = vmatprep.subr.mxu0 0.0
    %2692 = vmatpush1.msra.mxu0 0.0
    %2693 = vmatprep.subr.mxu0 0.0
    %2694 = vmatpush1.msra.mxu0 0.0
    %2695 = vmatprep.subr.mxu0 0.0
    %2696 = vmatpush1.msra.mxu0 0.0
    %2697 = vmatprep.subr.mxu0 0.0
    %2698 = vmatpush1.msra.mxu0 0.0
    %2699 = vmatprep.subr.mxu0 0.0
    %2700 = vmatpush1.msra.mxu0 0.0
    %2701 = vmatprep.subr.mxu0 0.0
    %2702 = vmatpush1.msra.mxu0 0.0
    %2703 = vmatprep.subr.mxu0 0.0
    %2704 = vmatpush1.msra.mxu0 0.0
    %2705 = vmatprep.subr.mxu0 0.0
    %2706 = vmatpush1.msra.mxu0 0.0
    %2707 = vmatprep.subr.mxu0 0.0
    %2708 = vmatpush1.msra.mxu0 0.0
    %2709 = vmatprep.subr.mxu0 0.0
    %2710 = vmatpush1.msra.mxu0 0.0
    %2711 = vmatprep.mubr.f32.mxu0 0.0
    %2712 = vmatmul.mubr.f32.gmra.mrb[0].mxu0 %v2646
    %v2713 = vpop.f32.mrb[0].mxu0
    %v2714 = vadd.f32 %v62, %v2713
    %v2715 = vpop.f32.mrb[0].mxu0
    %2716 = vdwg.mxu0
    %v2717 = vtanh.pop %v2714
    %v2718 = vsub.f32 %v2568, %v2642
    %v2719 = vadd.f32 %v2718, %v2717
    %v2720 = vmul.f32 %v2719, 0.06666667
    %v2721 = vadd.f32 %v2495, %v2720
    %2722 = vmatprep.subr.mxu0 0.0
    %2723 = vmatpush1.msra.mxu0 %v41
    %2724 = vmatprep.subr.mxu0 0.0
    %2725 = vmatpush1.msra.mxu0 %v42
    %2726 = vmatprep.subr.mxu0 0.0
    %2727 = vmatpush1.msra.mxu0 %v43
    %2728 = vmatprep.subr.mxu0 0.0
    %2729 = vmatpush1.msra.mxu0 %v44
    %2730 = vmatprep.subr.mxu0 0.0
    %2731 = vmatpush1.msra.mxu0 %v45
    %2732 = vmatprep.subr.mxu0 0.0
    %2733 = vmatpush1.msra.mxu0 %v46
    %2734 = vmatprep.subr.mxu0 0.0
    %2735 = vmatpush1.msra.mxu0 %v47
    %2736 = vmatprep.subr.mxu0 0.0
    %2737 = vmatpush1.msra.mxu0 %v48
    %2738 = vmatprep.subr.mxu0 0.0
    %2739 = vmatpush1.msra.mxu0 %v49
    %2740 = vmatprep.subr.mxu0 0.0
    %2741 = vmatpush1.msra.mxu0 %v50
    %2742 = vmatprep.subr.mxu0 0.0
    %2743 = vmatpush1.msra.mxu0 %v51
    %2744 = vmatprep.subr.mxu0 0.0
    %2745 = vmatpush1.msra.mxu0 %v52
    %2746 = vmatprep.subr.mxu0 0.0
    %2747 = vmatpush1.msra.mxu0 %v53
    %2748 = vmatprep.subr.mxu0 0.0
    %2749 = vmatpush1.msra.mxu0 %v54
    %2750 = vmatprep.subr.mxu0 0.0
    %2751 = vmatpush1.msra.mxu0 %v55
    %2752 = vmatprep.subr.mxu0 0.0
    %2753 = vmatpush1.msra.mxu0 %v56
    %2754 = vmatprep.subr.mxu0 0.0
    %2755 = vmatpush1.msra.mxu0 0.0
    %2756 = vmatprep.subr.mxu0 0.0
    %2757 = vmatpush1.msra.mxu0 0.0
    %2758 = vmatprep.subr.mxu0 0.0
    %2759 = vmatpush1.msra.mxu0 0.0
    %2760 = vmatprep.subr.mxu0 0.0
    %2761 = vmatpush1.msra.mxu0 0.0
    %2762 = vmatprep.subr.mxu0 0.0
    %2763 = vmatpush1.msra.mxu0 0.0
    %2764 = vmatprep.subr.mxu0 0.0
    %2765 = vmatpush1.msra.mxu0 0.0
    %2766 = vmatprep.subr.mxu0 0.0
    %2767 = vmatpush1.msra.mxu0 0.0
    %2768 = vmatprep.subr.mxu0 0.0
    %2769 = vmatpush1.msra.mxu0 0.0
    %2770 = vmatprep.subr.mxu0 0.0
    %2771 = vmatpush1.msra.mxu0 0.0
    %2772 = vmatprep.subr.mxu0 0.0
    %2773 = vmatpush1.msra.mxu0 0.0
    %2774 = vmatprep.subr.mxu0 0.0
    %2775 = vmatpush1.msra.mxu0 0.0
    %2776 = vmatprep.subr.mxu0 0.0
    %2777 = vmatpush1.msra.mxu0 0.0
    %2778 = vmatprep.subr.mxu0 0.0
    %2779 = vmatpush1.msra.mxu0 0.0
    %2780 = vmatprep.subr.mxu0 0.0
    %2781 = vmatpush1.msra.mxu0 0.0
    %2782 = vmatprep.subr.mxu0 0.0
    %2783 = vmatpush1.msra.mxu0 0.0
    %2784 = vmatprep.subr.mxu0 0.0
    %2785 = vmatpush1.msra.mxu0 0.0
    %2786 = vmatprep.mubr.f32.mxu0 0.0
    %2787 = vmatmul.mubr.f32.gmra.mrb[0].mxu0 %v2721
    %v2788 = vpop.f32.mrb[0].mxu0
    %v2789 = vadd.f32 %v62, %v2788
    %v2790 = vpop.f32.mrb[0].mxu0
    %2791 = vdwg.mxu0
    %v2792 = vtanh.pop %v2789
    %v2793 = vadd.f32 %v2642, %v2717
    %v2794 = vmul.f32 %v2793, 3.0
    %v2795 = vadd.f32 %v2568, %v2794
    %v2796 = vadd.f32 %v2795, %v2792
    %v2797 = vmul.f32 %v2796, 0.06666667
    %v2798 = vmul.f32 %v2797, 0.125
    %v2799 = vadd.f32 %v2495, %v2798
    %s2800 = scalar_lea.vmem [#allocation7], 72
    %2801 = vst [vmem:[%s2800] sm:$0xff] %v2799
    %2802 = vmatprep.subr.mxu0 0.0
    %2803 = vmatpush1.msra.mxu0 %v41
    %2804 = vmatprep.subr.mxu0 0.0
    %2805 = vmatpush1.msra.mxu0 %v42
    %2806 = vmatprep.subr.mxu0 0.0
    %2807 = vmatpush1.msra.mxu0 %v43
    %2808 = vmatprep.subr.mxu0 0.0
    %2809 = vmatpush1.msra.mxu0 %v44
    %2810 = vmatprep.subr.mxu0 0.0
    %2811 = vmatpush1.msra.mxu0 %v45
    %2812 = vmatprep.subr.mxu0 0.0
    %2813 = vmatpush1.msra.mxu0 %v46
    %2814 = vmatprep.subr.mxu0 0.0
    %2815 = vmatpush1.msra.mxu0 %v47
    %2816 = vmatprep.subr.mxu0 0.0
    %2817 = vmatpush1.msra.mxu0 %v48
    %2818 = vmatprep.subr.mxu0 0.0
    %2819 = vmatpush1.msra.mxu0 %v49
    %2820 = vmatprep.subr.mxu0 0.0
    %2821 = vmatpush1.msra.mxu0 %v50
    %2822 = vmatprep.subr.mxu0 0.0
    %2823 = vmatpush1.msra.mxu0 %v51
    %2824 = vmatprep.subr.mxu0 0.0
    %2825 = vmatpush1.msra.mxu0 %v52
    %2826 = vmatprep.subr.mxu0 0.0
    %2827 = vmatpush1.msra.mxu0 %v53
    %2828 = vmatprep.subr.mxu0 0.0
    %2829 = vmatpush1.msra.mxu0 %v54
    %2830 = vmatprep.subr.mxu0 0.0
    %2831 = vmatpush1.msra.mxu0 %v55
    %2832 = vmatprep.subr.mxu0 0.0
    %2833 = vmatpush1.msra.mxu0 %v56
    %2834 = vmatprep.subr.mxu0 0.0
    %2835 = vmatpush1.msra.mxu0 0.0
    %2836 = vmatprep.subr.mxu0 0.0
    %2837 = vmatpush1.msra.mxu0 0.0
    %2838 = vmatprep.subr.mxu0 0.0
    %2839 = vmatpush1.msra.mxu0 0.0
    %2840 = vmatprep.subr.mxu0 0.0
    %2841 = vmatpush1.msra.mxu0 0.0
    %2842 = vmatprep.subr.mxu0 0.0
    %2843 = vmatpush1.msra.mxu0 0.0
    %2844 = vmatprep.subr.mxu0 0.0
    %2845 = vmatpush1.msra.mxu0 0.0
    %2846 = vmatprep.subr.mxu0 0.0
    %2847 = vmatpush1.msra.mxu0 0.0
    %2848 = vmatprep.subr.mxu0 0.0
    %2849 = vmatpush1.msra.mxu0 0.0
    %2850 = vmatprep.subr.mxu0 0.0
    %2851 = vmatpush1.msra.mxu0 0.0
    %2852 = vmatprep.subr.mxu0 0.0
    %2853 = vmatpush1.msra.mxu0 0.0
    %2854 = vmatprep.subr.mxu0 0.0
    %2855 = vmatpush1.msra.mxu0 0.0
    %2856 = vmatprep.subr.mxu0 0.0
    %2857 = vmatpush1.msra.mxu0 0.0
    %2858 = vmatprep.subr.mxu0 0.0
    %2859 = vmatpush1.msra.mxu0 0.0
    %2860 = vmatprep.subr.mxu0 0.0
    %2861 = vmatpush1.msra.mxu0 0.0
    %2862 = vmatprep.subr.mxu0 0.0
    %2863 = vmatpush1.msra.mxu0 0.0
    %2864 = vmatprep.subr.mxu0 0.0
    %2865 = vmatpush1.msra.mxu0 0.0
    %2866 = vmatprep.mubr.f32.mxu0 0.0
    %2867 = vmatmul.mubr.f32.gmra.mrb[0].mxu0 %v2799
    %v2868 = vpop.f32.mrb[0].mxu0
    %v2869 = vadd.f32 %v62, %v2868
    %v2870 = vpop.f32.mrb[0].mxu0
    %2871 = vdwg.mxu0
    %v2872 = vtanh.pop %v2869
    %v2873 = vmul.f32 %v2872, 0.06666667
    %v2874 = vmul.f32 %v2873, 0.33333334
    %v2875 = vadd.f32 %v2799, %v2874
    %2876 = vmatprep.subr.mxu0 0.0
    %2877 = vmatpush1.msra.mxu0 %v41
    %2878 = vmatprep.subr.mxu0 0.0
    %2879 = vmatpush1.msra.mxu0 %v42
    %2880 = vmatprep.subr.mxu0 0.0
    %2881 = vmatpush1.msra.mxu0 %v43
    %2882 = vmatprep.subr.mxu0 0.0
    %2883 = vmatpush1.msra.mxu0 %v44
    %2884 = vmatprep.subr.mxu0 0.0
    %2885 = vmatpush1.msra.mxu0 %v45
    %2886 = vmatprep.subr.mxu0 0.0
    %2887 = vmatpush1.msra.mxu0 %v46
    %2888 = vmatprep.subr.mxu0 0.0
    %2889 = vmatpush1.msra.mxu0 %v47
    %2890 = vmatprep.subr.mxu0 0.0
    %2891 = vmatpush1.msra.mxu0 %v48
    %2892 = vmatprep.subr.mxu0 0.0
    %2893 = vmatpush1.msra.mxu0 %v49
    %2894 = vmatprep.subr.mxu0 0.0
    %2895 = vmatpush1.msra.mxu0 %v50
    %2896 = vmatprep.subr.mxu0 0.0
    %2897 = vmatpush1.msra.mxu0 %v51
    %2898 = vmatprep.subr.mxu0 0.0
    %2899 = vmatpush1.msra.mxu0 %v52
    %2900 = vmatprep.subr.mxu0 0.0
    %2901 = vmatpush1.msra.mxu0 %v53
    %2902 = vmatprep.subr.mxu0 0.0
    %2903 = vmatpush1.msra.mxu0 %v54
    %2904 = vmatprep.subr.mxu0 0.0
    %2905 = vmatpush1.msra.mxu0 %v55
    %2906 = vmatprep.subr.mxu0 0.0
    %2907 = vmatpush1.msra.mxu0 %v56
    %2908 = vmatprep.subr.mxu0 0.0
    %2909 = vmatpush1.msra.mxu0 0.0
    %2910 = vmatprep.subr.mxu0 0.0
    %2911 = vmatpush1.msra.mxu0 0.0
    %2912 = vmatprep.subr.mxu0 0.0
    %2913 = vmatpush1.msra.mxu0 0.0
    %2914 = vmatprep.subr.mxu0 0.0
    %2915 = vmatpush1.msra.mxu0 0.0
    %2916 = vmatprep.subr.mxu0 0.0
    %2917 = vmatpush1.msra.mxu0 0.0
    %2918 = vmatprep.subr.mxu0 0.0
    %2919 = vmatpush1.msra.mxu0 0.0
    %2920 = vmatprep.subr.mxu0 0.0
    %2921 = vmatpush1.msra.mxu0 0.0
    %2922 = vmatprep.subr.mxu0 0.0
    %2923 = vmatpush1.msra.mxu0 0.0
    %2924 = vmatprep.subr.mxu0 0.0
    %2925 = vmatpush1.msra.mxu0 0.0
    %2926 = vmatprep.subr.mxu0 0.0
    %2927 = vmatpush1.msra.mxu0 0.0
    %2928 = vmatprep.subr.mxu0 0.0
    %2929 = vmatpush1.msra.mxu0 0.0
    %2930 = vmatprep.subr.mxu0 0.0
    %2931 = vmatpush1.msra.mxu0 0.0
    %2932 = vmatprep.subr.mxu0 0.0
    %2933 = vmatpush1.msra.mxu0 0.0
    %2934 = vmatprep.subr.mxu0 0.0
    %2935 = vmatpush1.msra.mxu0 0.0
    %2936 = vmatprep.subr.mxu0 0.0
    %2937 = vmatpush1.msra.mxu0 0.0
    %2938 = vmatprep.subr.mxu0 0.0
    %2939 = vmatpush1.msra.mxu0 0.0
    %2940 = vmatprep.mubr.f32.mxu0 0.0
    %2941 = vmatmul.mubr.f32.gmra.mrb[0].mxu0 %v2875
    %v2942 = vpop.f32.mrb[0].mxu0
    %v2943 = vadd.f32 %v62, %v2942
    %v2944 = vpop.f32.mrb[0].mxu0
    %2945 = vdwg.mxu0
    %v2946 = vtanh.pop %v2943
    %v2947 = vmul.f32 %v2872, 0.33333334
    %v2948 = vsub.f32 %v2946, %v2947
    %v2949 = vmul.f32 %v2948, 0.06666667
    %v2950 = vadd.f32 %v2799, %v2949
    %2951 = vmatprep.subr.mxu0 0.0
    %2952 = vmatpush1.msra.mxu0 %v41
    %2953 = vmatprep.subr.mxu0 0.0
    %2954 = vmatpush1.msra.mxu0 %v42
    %2955 = vmatprep.subr.mxu0 0.0
    %2956 = vmatpush1.msra.mxu0 %v43
    %2957 = vmatprep.subr.mxu0 0.0
    %2958 = vmatpush1.msra.mxu0 %v44
    %2959 = vmatprep.subr.mxu0 0.0
    %2960 = vmatpush1.msra.mxu0 %v45
    %2961 = vmatprep.subr.mxu0 0.0
    %2962 = vmatpush1.msra.mxu0 %v46
    %2963 = vmatprep.subr.mxu0 0.0
    %2964 = vmatpush1.msra.mxu0 %v47
    %2965 = vmatprep.subr.mxu0 0.0
    %2966 = vmatpush1.msra.mxu0 %v48
    %2967 = vmatprep.subr.mxu0 0.0
    %2968 = vmatpush1.msra.mxu0 %v49
    %2969 = vmatprep.subr.mxu0 0.0
    %2970 = vmatpush1.msra.mxu0 %v50
    %2971 = vmatprep.subr.mxu0 0.0
    %2972 = vmatpush1.msra.mxu0 %v51
    %2973 = vmatprep.subr.mxu0 0.0
    %2974 = vmatpush1.msra.mxu0 %v52
    %2975 = vmatprep.subr.mxu0 0.0
    %2976 = vmatpush1.msra.mxu0 %v53
    %2977 = vmatprep.subr.mxu0 0.0
    %2978 = vmatpush1.msra.mxu0 %v54
    %2979 = vmatprep.subr.mxu0 0.0
    %2980 = vmatpush1.msra.mxu0 %v55
    %2981 = vmatprep.subr.mxu0 0.0
    %2982 = vmatpush1.msra.mxu0 %v56
    %2983 = vmatprep.subr.mxu0 0.0
    %2984 = vmatpush1.msra.mxu0 0.0
    %2985 = vmatprep.subr.mxu0 0.0
    %2986 = vmatpush1.msra.mxu0 0.0
    %2987 = vmatprep.subr.mxu0 0.0
    %2988 = vmatpush1.msra.mxu0 0.0
    %2989 = vmatprep.subr.mxu0 0.0
    %2990 = vmatpush1.msra.mxu0 0.0
    %2991 = vmatprep.subr.mxu0 0.0
    %2992 = vmatpush1.msra.mxu0 0.0
    %2993 = vmatprep.subr.mxu0 0.0
    %2994 = vmatpush1.msra.mxu0 0.0
    %2995 = vmatprep.subr.mxu0 0.0
    %2996 = vmatpush1.msra.mxu0 0.0
    %2997 = vmatprep.subr.mxu0 0.0
    %2998 = vmatpush1.msra.mxu0 0.0
    %2999 = vmatprep.subr.mxu0 0.0
    %3000 = vmatpush1.msra.mxu0 0.0
    %3001 = vmatprep.subr.mxu0 0.0
    %3002 = vmatpush1.msra.mxu0 0.0
    %3003 = vmatprep.subr.mxu0 0.0
    %3004 = vmatpush1.msra.mxu0 0.0
    %3005 = vmatprep.subr.mxu0 0.0
    %3006 = vmatpush1.msra.mxu0 0.0
    %3007 = vmatprep.subr.mxu0 0.0
    %3008 = vmatpush1.msra.mxu0 0.0
    %3009 = vmatprep.subr.mxu0 0.0
    %3010 = vmatpush1.msra.mxu0 0.0
    %3011 = vmatprep.subr.mxu0 0.0
    %3012 = vmatpush1.msra.mxu0 0.0
    %3013 = vmatprep.subr.mxu0 0.0
    %3014 = vmatpush1.msra.mxu0 0.0
    %3015 = vmatprep.mubr.f32.mxu0 0.0
    %3016 = vmatmul.mubr.f32.gmra.mrb[0].mxu0 %v2950
    %v3017 = vpop.f32.mrb[0].mxu0
    %v3018 = vadd.f32 %v62, %v3017
    %v3019 = vpop.f32.mrb[0].mxu0
    %3020 = vdwg.mxu0
    %v3021 = vtanh.pop %v3018
    %v3022 = vsub.f32 %v2872, %v2946
    %v3023 = vadd.f32 %v3022, %v3021
    %v3024 = vmul.f32 %v3023, 0.06666667
    %v3025 = vadd.f32 %v2799, %v3024
    %3026 = vmatprep.subr.mxu0 0.0
    %3027 = vmatpush1.msra.mxu0 %v41
    %3028 = vmatprep.subr.mxu0 0.0
    %3029 = vmatpush1.msra.mxu0 %v42
    %3030 = vmatprep.subr.mxu0 0.0
    %3031 = vmatpush1.msra.mxu0 %v43
    %3032 = vmatprep.subr.mxu0 0.0
    %3033 = vmatpush1.msra.mxu0 %v44
    %3034 = vmatprep.subr.mxu0 0.0
    %3035 = vmatpush1.msra.mxu0 %v45
    %3036 = vmatprep.subr.mxu0 0.0
    %3037 = vmatpush1.msra.mxu0 %v46
    %3038 = vmatprep.subr.mxu0 0.0
    %3039 = vmatpush1.msra.mxu0 %v47
    %3040 = vmatprep.subr.mxu0 0.0
    %3041 = vmatpush1.msra.mxu0 %v48
    %3042 = vmatprep.subr.mxu0 0.0
    %3043 = vmatpush1.msra.mxu0 %v49
    %3044 = vmatprep.subr.mxu0 0.0
    %3045 = vmatpush1.msra.mxu0 %v50
    %3046 = vmatprep.subr.mxu0 0.0
    %3047 = vmatpush1.msra.mxu0 %v51
    %3048 = vmatprep.subr.mxu0 0.0
    %3049 = vmatpush1.msra.mxu0 %v52
    %3050 = vmatprep.subr.mxu0 0.0
    %3051 = vmatpush1.msra.mxu0 %v53
    %3052 = vmatprep.subr.mxu0 0.0
    %3053 = vmatpush1.msra.mxu0 %v54
    %3054 = vmatprep.subr.mxu0 0.0
    %3055 = vmatpush1.msra.mxu0 %v55
    %3056 = vmatprep.subr.mxu0 0.0
    %3057 = vmatpush1.msra.mxu0 %v56
    %3058 = vmatprep.subr.mxu0 0.0
    %3059 = vmatpush1.msra.mxu0 0.0
    %3060 = vmatprep.subr.mxu0 0.0
    %3061 = vmatpush1.msra.mxu0 0.0
    %3062 = vmatprep.subr.mxu0 0.0
    %3063 = vmatpush1.msra.mxu0 0.0
    %3064 = vmatprep.subr.mxu0 0.0
    %3065 = vmatpush1.msra.mxu0 0.0
    %3066 = vmatprep.subr.mxu0 0.0
    %3067 = vmatpush1.msra.mxu0 0.0
    %3068 = vmatprep.subr.mxu0 0.0
    %3069 = vmatpush1.msra.mxu0 0.0
    %3070 = vmatprep.subr.mxu0 0.0
    %3071 = vmatpush1.msra.mxu0 0.0
    %3072 = vmatprep.subr.mxu0 0.0
    %3073 = vmatpush1.msra.mxu0 0.0
    %3074 = vmatprep.subr.mxu0 0.0
    %3075 = vmatpush1.msra.mxu0 0.0
    %3076 = vmatprep.subr.mxu0 0.0
    %3077 = vmatpush1.msra.mxu0 0.0
    %3078 = vmatprep.subr.mxu0 0.0
    %3079 = vmatpush1.msra.mxu0 0.0
    %3080 = vmatprep.subr.mxu0 0.0
    %3081 = vmatpush1.msra.mxu0 0.0
    %3082 = vmatprep.subr.mxu0 0.0
    %3083 = vmatpush1.msra.mxu0 0.0
    %3084 = vmatprep.subr.mxu0 0.0
    %3085 = vmatpush1.msra.mxu0 0.0
    %3086 = vmatprep.subr.mxu0 0.0
    %3087 = vmatpush1.msra.mxu0 0.0
    %3088 = vmatprep.subr.mxu0 0.0
    %3089 = vmatpush1.msra.mxu0 0.0
    %3090 = vmatprep.mubr.f32.mxu0 0.0
    %3091 = vmatmul.mubr.f32.gmra.mrb[0].mxu0 %v3025
    %v3092 = vpop.f32.mrb[0].mxu0
    %v3093 = vadd.f32 %v62, %v3092
    %v3094 = vpop.f32.mrb[0].mxu0
    %3095 = vdwg.mxu0
    %v3096 = vtanh.pop %v3093
    %v3097 = vadd.f32 %v2946, %v3021
    %v3098 = vmul.f32 %v3097, 3.0
    %v3099 = vadd.f32 %v2872, %v3098
    %v3100 = vadd.f32 %v3099, %v3096
    %v3101 = vmul.f32 %v3100, 0.06666667
    %v3102 = vmul.f32 %v3101, 0.125
    %v3103 = vadd.f32 %v2799, %v3102
    %s3104 = scalar_lea.vmem [#allocation7], 80
    %3105 = vst [vmem:[%s3104] sm:$0xff] %v3103
    %3106 = vmatprep.subr.mxu0 0.0
    %3107 = vmatpush1.msra.mxu0 %v41
    %3108 = vmatprep.subr.mxu0 0.0
    %3109 = vmatpush1.msra.mxu0 %v42
    %3110 = vmatprep.subr.mxu0 0.0
    %3111 = vmatpush1.msra.mxu0 %v43
    %3112 = vmatprep.subr.mxu0 0.0
    %3113 = vmatpush1.msra.mxu0 %v44
    %3114 = vmatprep.subr.mxu0 0.0
    %3115 = vmatpush1.msra.mxu0 %v45
    %3116 = vmatprep.subr.mxu0 0.0
    %3117 = vmatpush1.msra.mxu0 %v46
    %3118 = vmatprep.subr.mxu0 0.0
    %3119 = vmatpush1.msra.mxu0 %v47
    %3120 = vmatprep.subr.mxu0 0.0
    %3121 = vmatpush1.msra.mxu0 %v48
    %3122 = vmatprep.subr.mxu0 0.0
    %3123 = vmatpush1.msra.mxu0 %v49
    %3124 = vmatprep.subr.mxu0 0.0
    %3125 = vmatpush1.msra.mxu0 %v50
    %3126 = vmatprep.subr.mxu0 0.0
    %3127 = vmatpush1.msra.mxu0 %v51
    %3128 = vmatprep.subr.mxu0 0.0
    %3129 = vmatpush1.msra.mxu0 %v52
    %3130 = vmatprep.subr.mxu0 0.0
    %3131 = vmatpush1.msra.mxu0 %v53
    %3132 = vmatprep.subr.mxu0 0.0
    %3133 = vmatpush1.msra.mxu0 %v54
    %3134 = vmatprep.subr.mxu0 0.0
    %3135 = vmatpush1.msra.mxu0 %v55
    %3136 = vmatprep.subr.mxu0 0.0
    %3137 = vmatpush1.msra.mxu0 %v56
    %3138 = vmatprep.subr.mxu0 0.0
    %3139 = vmatpush1.msra.mxu0 0.0
    %3140 = vmatprep.subr.mxu0 0.0
    %3141 = vmatpush1.msra.mxu0 0.0
    %3142 = vmatprep.subr.mxu0 0.0
    %3143 = vmatpush1.msra.mxu0 0.0
    %3144 = vmatprep.subr.mxu0 0.0
    %3145 = vmatpush1.msra.mxu0 0.0
    %3146 = vmatprep.subr.mxu0 0.0
    %3147 = vmatpush1.msra.mxu0 0.0
    %3148 = vmatprep.subr.mxu0 0.0
    %3149 = vmatpush1.msra.mxu0 0.0
    %3150 = vmatprep.subr.mxu0 0.0
    %3151 = vmatpush1.msra.mxu0 0.0
    %3152 = vmatprep.subr.mxu0 0.0
    %3153 = vmatpush1.msra.mxu0 0.0
    %3154 = vmatprep.subr.mxu0 0.0
    %3155 = vmatpush1.msra.mxu0 0.0
    %3156 = vmatprep.subr.mxu0 0.0
    %3157 = vmatpush1.msra.mxu0 0.0
    %3158 = vmatprep.subr.mxu0 0.0
    %3159 = vmatpush1.msra.mxu0 0.0
    %3160 = vmatprep.subr.mxu0 0.0
    %3161 = vmatpush1.msra.mxu0 0.0
    %3162 = vmatprep.subr.mxu0 0.0
    %3163 = vmatpush1.msra.mxu0 0.0
    %3164 = vmatprep.subr.mxu0 0.0
    %3165 = vmatpush1.msra.mxu0 0.0
    %3166 = vmatprep.subr.mxu0 0.0
    %3167 = vmatpush1.msra.mxu0 0.0
    %3168 = vmatprep.subr.mxu0 0.0
    %3169 = vmatpush1.msra.mxu0 0.0
    %3170 = vmatprep.mubr.f32.mxu0 0.0
    %3171 = vmatmul.mubr.f32.gmra.mrb[0].mxu0 %v3103
    %v3172 = vpop.f32.mrb[0].mxu0
    %v3173 = vadd.f32 %v62, %v3172
    %v3174 = vpop.f32.mrb[0].mxu0
    %3175 = vdwg.mxu0
    %v3176 = vtanh.pop %v3173
    %v3177 = vmul.f32 %v3176, 0.06666667
    %v3178 = vmul.f32 %v3177, 0.33333334
    %v3179 = vadd.f32 %v3103, %v3178
    %3180 = vmatprep.subr.mxu0 0.0
    %3181 = vmatpush1.msra.mxu0 %v41
    %3182 = vmatprep.subr.mxu0 0.0
    %3183 = vmatpush1.msra.mxu0 %v42
    %3184 = vmatprep.subr.mxu0 0.0
    %3185 = vmatpush1.msra.mxu0 %v43
    %3186 = vmatprep.subr.mxu0 0.0
    %3187 = vmatpush1.msra.mxu0 %v44
    %3188 = vmatprep.subr.mxu0 0.0
    %3189 = vmatpush1.msra.mxu0 %v45
    %3190 = vmatprep.subr.mxu0 0.0
    %3191 = vmatpush1.msra.mxu0 %v46
    %3192 = vmatprep.subr.mxu0 0.0
    %3193 = vmatpush1.msra.mxu0 %v47
    %3194 = vmatprep.subr.mxu0 0.0
    %3195 = vmatpush1.msra.mxu0 %v48
    %3196 = vmatprep.subr.mxu0 0.0
    %3197 = vmatpush1.msra.mxu0 %v49
    %3198 = vmatprep.subr.mxu0 0.0
    %3199 = vmatpush1.msra.mxu0 %v50
    %3200 = vmatprep.subr.mxu0 0.0
    %3201 = vmatpush1.msra.mxu0 %v51
    %3202 = vmatprep.subr.mxu0 0.0
    %3203 = vmatpush1.msra.mxu0 %v52
    %3204 = vmatprep.subr.mxu0 0.0
    %3205 = vmatpush1.msra.mxu0 %v53
    %3206 = vmatprep.subr.mxu0 0.0
    %3207 = vmatpush1.msra.mxu0 %v54
    %3208 = vmatprep.subr.mxu0 0.0
    %3209 = vmatpush1.msra.mxu0 %v55
    %3210 = vmatprep.subr.mxu0 0.0
    %3211 = vmatpush1.msra.mxu0 %v56
    %3212 = vmatprep.subr.mxu0 0.0
    %3213 = vmatpush1.msra.mxu0 0.0
    %3214 = vmatprep.subr.mxu0 0.0
    %3215 = vmatpush1.msra.mxu0 0.0
    %3216 = vmatprep.subr.mxu0 0.0
    %3217 = vmatpush1.msra.mxu0 0.0
    %3218 = vmatprep.subr.mxu0 0.0
    %3219 = vmatpush1.msra.mxu0 0.0
    %3220 = vmatprep.subr.mxu0 0.0
    %3221 = vmatpush1.msra.mxu0 0.0
    %3222 = vmatprep.subr.mxu0 0.0
    %3223 = vmatpush1.msra.mxu0 0.0
    %3224 = vmatprep.subr.mxu0 0.0
    %3225 = vmatpush1.msra.mxu0 0.0
    %3226 = vmatprep.subr.mxu0 0.0
    %3227 = vmatpush1.msra.mxu0 0.0
    %3228 = vmatprep.subr.mxu0 0.0
    %3229 = vmatpush1.msra.mxu0 0.0
    %3230 = vmatprep.subr.mxu0 0.0
    %3231 = vmatpush1.msra.mxu0 0.0
    %3232 = vmatprep.subr.mxu0 0.0
    %3233 = vmatpush1.msra.mxu0 0.0
    %3234 = vmatprep.subr.mxu0 0.0
    %3235 = vmatpush1.msra.mxu0 0.0
    %3236 = vmatprep.subr.mxu0 0.0
    %3237 = vmatpush1.msra.mxu0 0.0
    %3238 = vmatprep.subr.mxu0 0.0
    %3239 = vmatpush1.msra.mxu0 0.0
    %3240 = vmatprep.subr.mxu0 0.0
    %3241 = vmatpush1.msra.mxu0 0.0
    %3242 = vmatprep.subr.mxu0 0.0
    %3243 = vmatpush1.msra.mxu0 0.0
    %3244 = vmatprep.mubr.f32.mxu0 0.0
    %3245 = vmatmul.mubr.f32.gmra.mrb[0].mxu0 %v3179
    %v3246 = vpop.f32.mrb[0].mxu0
    %v3247 = vadd.f32 %v62, %v3246
    %v3248 = vpop.f32.mrb[0].mxu0
    %3249 = vdwg.mxu0
    %v3250 = vtanh.pop %v3247
    %v3251 = vmul.f32 %v3176, 0.33333334
    %v3252 = vsub.f32 %v3250, %v3251
    %v3253 = vmul.f32 %v3252, 0.06666667
    %v3254 = vadd.f32 %v3103, %v3253
    %3255 = vmatprep.subr.mxu0 0.0
    %3256 = vmatpush1.msra.mxu0 %v41
    %3257 = vmatprep.subr.mxu0 0.0
    %3258 = vmatpush1.msra.mxu0 %v42
    %3259 = vmatprep.subr.mxu0 0.0
    %3260 = vmatpush1.msra.mxu0 %v43
    %3261 = vmatprep.subr.mxu0 0.0
    %3262 = vmatpush1.msra.mxu0 %v44
    %3263 = vmatprep.subr.mxu0 0.0
    %3264 = vmatpush1.msra.mxu0 %v45
    %3265 = vmatprep.subr.mxu0 0.0
    %3266 = vmatpush1.msra.mxu0 %v46
    %3267 = vmatprep.subr.mxu0 0.0
    %3268 = vmatpush1.msra.mxu0 %v47
    %3269 = vmatprep.subr.mxu0 0.0
    %3270 = vmatpush1.msra.mxu0 %v48
    %3271 = vmatprep.subr.mxu0 0.0
    %3272 = vmatpush1.msra.mxu0 %v49
    %3273 = vmatprep.subr.mxu0 0.0
    %3274 = vmatpush1.msra.mxu0 %v50
    %3275 = vmatprep.subr.mxu0 0.0
    %3276 = vmatpush1.msra.mxu0 %v51
    %3277 = vmatprep.subr.mxu0 0.0
    %3278 = vmatpush1.msra.mxu0 %v52
    %3279 = vmatprep.subr.mxu0 0.0
    %3280 = vmatpush1.msra.mxu0 %v53
    %3281 = vmatprep.subr.mxu0 0.0
    %3282 = vmatpush1.msra.mxu0 %v54
    %3283 = vmatprep.subr.mxu0 0.0
    %3284 = vmatpush1.msra.mxu0 %v55
    %3285 = vmatprep.subr.mxu0 0.0
    %3286 = vmatpush1.msra.mxu0 %v56
    %3287 = vmatprep.subr.mxu0 0.0
    %3288 = vmatpush1.msra.mxu0 0.0
    %3289 = vmatprep.subr.mxu0 0.0
    %3290 = vmatpush1.msra.mxu0 0.0
    %3291 = vmatprep.subr.mxu0 0.0
    %3292 = vmatpush1.msra.mxu0 0.0
    %3293 = vmatprep.subr.mxu0 0.0
    %3294 = vmatpush1.msra.mxu0 0.0
    %3295 = vmatprep.subr.mxu0 0.0
    %3296 = vmatpush1.msra.mxu0 0.0
    %3297 = vmatprep.subr.mxu0 0.0
    %3298 = vmatpush1.msra.mxu0 0.0
    %3299 = vmatprep.subr.mxu0 0.0
    %3300 = vmatpush1.msra.mxu0 0.0
    %3301 = vmatprep.subr.mxu0 0.0
    %3302 = vmatpush1.msra.mxu0 0.0
    %3303 = vmatprep.subr.mxu0 0.0
    %3304 = vmatpush1.msra.mxu0 0.0
    %3305 = vmatprep.subr.mxu0 0.0
    %3306 = vmatpush1.msra.mxu0 0.0
    %3307 = vmatprep.subr.mxu0 0.0
    %3308 = vmatpush1.msra.mxu0 0.0
    %3309 = vmatprep.subr.mxu0 0.0
    %3310 = vmatpush1.msra.mxu0 0.0
    %3311 = vmatprep.subr.mxu0 0.0
    %3312 = vmatpush1.msra.mxu0 0.0
    %3313 = vmatprep.subr.mxu0 0.0
    %3314 = vmatpush1.msra.mxu0 0.0
    %3315 = vmatprep.subr.mxu0 0.0
    %3316 = vmatpush1.msra.mxu0 0.0
    %3317 = vmatprep.subr.mxu0 0.0
    %3318 = vmatpush1.msra.mxu0 0.0
    %3319 = vmatprep.mubr.f32.mxu0 0.0
    %3320 = vmatmul.mubr.f32.gmra.mrb[0].mxu0 %v3254
    %v3321 = vpop.f32.mrb[0].mxu0
    %v3322 = vadd.f32 %v62, %v3321
    %v3323 = vpop.f32.mrb[0].mxu0
    %3324 = vdwg.mxu0
    %v3325 = vtanh.pop %v3322
    %v3326 = vsub.f32 %v3176, %v3250
    %v3327 = vadd.f32 %v3326, %v3325
    %v3328 = vmul.f32 %v3327, 0.06666667
    %v3329 = vadd.f32 %v3103, %v3328
    %3330 = vmatprep.subr.mxu0 0.0
    %3331 = vmatpush1.msra.mxu0 %v41
    %3332 = vmatprep.subr.mxu0 0.0
    %3333 = vmatpush1.msra.mxu0 %v42
    %3334 = vmatprep.subr.mxu0 0.0
    %3335 = vmatpush1.msra.mxu0 %v43
    %3336 = vmatprep.subr.mxu0 0.0
    %3337 = vmatpush1.msra.mxu0 %v44
    %3338 = vmatprep.subr.mxu0 0.0
    %3339 = vmatpush1.msra.mxu0 %v45
    %3340 = vmatprep.subr.mxu0 0.0
    %3341 = vmatpush1.msra.mxu0 %v46
    %3342 = vmatprep.subr.mxu0 0.0
    %3343 = vmatpush1.msra.mxu0 %v47
    %3344 = vmatprep.subr.mxu0 0.0
    %3345 = vmatpush1.msra.mxu0 %v48
    %3346 = vmatprep.subr.mxu0 0.0
    %3347 = vmatpush1.msra.mxu0 %v49
    %3348 = vmatprep.subr.mxu0 0.0
    %3349 = vmatpush1.msra.mxu0 %v50
    %3350 = vmatprep.subr.mxu0 0.0
    %3351 = vmatpush1.msra.mxu0 %v51
    %3352 = vmatprep.subr.mxu0 0.0
    %3353 = vmatpush1.msra.mxu0 %v52
    %3354 = vmatprep.subr.mxu0 0.0
    %3355 = vmatpush1.msra.mxu0 %v53
    %3356 = vmatprep.subr.mxu0 0.0
    %3357 = vmatpush1.msra.mxu0 %v54
    %3358 = vmatprep.subr.mxu0 0.0
    %3359 = vmatpush1.msra.mxu0 %v55
    %3360 = vmatprep.subr.mxu0 0.0
    %3361 = vmatpush1.msra.mxu0 %v56
    %3362 = vmatprep.subr.mxu0 0.0
    %3363 = vmatpush1.msra.mxu0 0.0
    %3364 = vmatprep.subr.mxu0 0.0
    %3365 = vmatpush1.msra.mxu0 0.0
    %3366 = vmatprep.subr.mxu0 0.0
    %3367 = vmatpush1.msra.mxu0 0.0
    %3368 = vmatprep.subr.mxu0 0.0
    %3369 = vmatpush1.msra.mxu0 0.0
    %3370 = vmatprep.subr.mxu0 0.0
    %3371 = vmatpush1.msra.mxu0 0.0
    %3372 = vmatprep.subr.mxu0 0.0
    %3373 = vmatpush1.msra.mxu0 0.0
    %3374 = vmatprep.subr.mxu0 0.0
    %3375 = vmatpush1.msra.mxu0 0.0
    %3376 = vmatprep.subr.mxu0 0.0
    %3377 = vmatpush1.msra.mxu0 0.0
    %3378 = vmatprep.subr.mxu0 0.0
    %3379 = vmatpush1.msra.mxu0 0.0
    %3380 = vmatprep.subr.mxu0 0.0
    %3381 = vmatpush1.msra.mxu0 0.0
    %3382 = vmatprep.subr.mxu0 0.0
    %3383 = vmatpush1.msra.mxu0 0.0
    %3384 = vmatprep.subr.mxu0 0.0
    %3385 = vmatpush1.msra.mxu0 0.0
    %3386 = vmatprep.subr.mxu0 0.0
    %3387 = vmatpush1.msra.mxu0 0.0
    %3388 = vmatprep.subr.mxu0 0.0
    %3389 = vmatpush1.msra.mxu0 0.0
    %3390 = vmatprep.subr.mxu0 0.0
    %3391 = vmatpush1.msra.mxu0 0.0
    %3392 = vmatprep.subr.mxu0 0.0
    %3393 = vmatpush1.msra.mxu0 0.0
    %3394 = vmatprep.mubr.f32.mxu0 0.0
    %3395 = vmatmul.mubr.f32.gmra.mrb[0].mxu0 %v3329
    %v3396 = vpop.f32.mrb[0].mxu0
    %v3397 = vadd.f32 %v62, %v3396
    %v3398 = vpop.f32.mrb[0].mxu0
    %3399 = vdwg.mxu0
    %v3400 = vtanh.pop %v3397
    %v3401 = vadd.f32 %v3250, %v3325
    %v3402 = vmul.f32 %v3401, 3.0
    %v3403 = vadd.f32 %v3176, %v3402
    %v3404 = vadd.f32 %v3403, %v3400
    %v3405 = vmul.f32 %v3404, 0.06666667
    %v3406 = vmul.f32 %v3405, 0.125
    %v3407 = vadd.f32 %v3103, %v3406
    %s3408 = scalar_lea.vmem [#allocation7], 88
    %3409 = vst [vmem:[%s3408] sm:$0xff] %v3407
    %3410 = vmatprep.subr.mxu0 0.0
    %3411 = vmatpush1.msra.mxu0 %v41
    %3412 = vmatprep.subr.mxu0 0.0
    %3413 = vmatpush1.msra.mxu0 %v42
    %3414 = vmatprep.subr.mxu0 0.0
    %3415 = vmatpush1.msra.mxu0 %v43
    %3416 = vmatprep.subr.mxu0 0.0
    %3417 = vmatpush1.msra.mxu0 %v44
    %3418 = vmatprep.subr.mxu0 0.0
    %3419 = vmatpush1.msra.mxu0 %v45
    %3420 = vmatprep.subr.mxu0 0.0
    %3421 = vmatpush1.msra.mxu0 %v46
    %3422 = vmatprep.subr.mxu0 0.0
    %3423 = vmatpush1.msra.mxu0 %v47
    %3424 = vmatprep.subr.mxu0 0.0
    %3425 = vmatpush1.msra.mxu0 %v48
    %3426 = vmatprep.subr.mxu0 0.0
    %3427 = vmatpush1.msra.mxu0 %v49
    %3428 = vmatprep.subr.mxu0 0.0
    %3429 = vmatpush1.msra.mxu0 %v50
    %3430 = vmatprep.subr.mxu0 0.0
    %3431 = vmatpush1.msra.mxu0 %v51
    %3432 = vmatprep.subr.mxu0 0.0
    %3433 = vmatpush1.msra.mxu0 %v52
    %3434 = vmatprep.subr.mxu0 0.0
    %3435 = vmatpush1.msra.mxu0 %v53
    %3436 = vmatprep.subr.mxu0 0.0
    %3437 = vmatpush1.msra.mxu0 %v54
    %3438 = vmatprep.subr.mxu0 0.0
    %3439 = vmatpush1.msra.mxu0 %v55
    %3440 = vmatprep.subr.mxu0 0.0
    %3441 = vmatpush1.msra.mxu0 %v56
    %3442 = vmatprep.subr.mxu0 0.0
    %3443 = vmatpush1.msra.mxu0 0.0
    %3444 = vmatprep.subr.mxu0 0.0
    %3445 = vmatpush1.msra.mxu0 0.0
    %3446 = vmatprep.subr.mxu0 0.0
    %3447 = vmatpush1.msra.mxu0 0.0
    %3448 = vmatprep.subr.mxu0 0.0
    %3449 = vmatpush1.msra.mxu0 0.0
    %3450 = vmatprep.subr.mxu0 0.0
    %3451 = vmatpush1.msra.mxu0 0.0
    %3452 = vmatprep.subr.mxu0 0.0
    %3453 = vmatpush1.msra.mxu0 0.0
    %3454 = vmatprep.subr.mxu0 0.0
    %3455 = vmatpush1.msra.mxu0 0.0
    %3456 = vmatprep.subr.mxu0 0.0
    %3457 = vmatpush1.msra.mxu0 0.0
    %3458 = vmatprep.subr.mxu0 0.0
    %3459 = vmatpush1.msra.mxu0 0.0
    %3460 = vmatprep.subr.mxu0 0.0
    %3461 = vmatpush1.msra.mxu0 0.0
    %3462 = vmatprep.subr.mxu0 0.0
    %3463 = vmatpush1.msra.mxu0 0.0
    %3464 = vmatprep.subr.mxu0 0.0
    %3465 = vmatpush1.msra.mxu0 0.0
    %3466 = vmatprep.subr.mxu0 0.0
    %3467 = vmatpush1.msra.mxu0 0.0
    %3468 = vmatprep.subr.mxu0 0.0
    %3469 = vmatpush1.msra.mxu0 0.0
    %3470 = vmatprep.subr.mxu0 0.0
    %3471 = vmatpush1.msra.mxu0 0.0
    %3472 = vmatprep.subr.mxu0 0.0
    %3473 = vmatpush1.msra.mxu0 0.0
    %3474 = vmatprep.mubr.f32.mxu0 0.0
    %3475 = vmatmul.mubr.f32.gmra.mrb[0].mxu0 %v3407
    %v3476 = vpop.f32.mrb[0].mxu0
    %v3477 = vadd.f32 %v62, %v3476
    %v3478 = vpop.f32.mrb[0].mxu0
    %3479 = vdwg.mxu0
    %v3480 = vtanh.pop %v3477
    %v3481 = vmul.f32 %v3480, 0.06666667
    %v3482 = vmul.f32 %v3481, 0.33333334
    %v3483 = vadd.f32 %v3407, %v3482
    %3484 = vmatprep.subr.mxu0 0.0
    %3485 = vmatpush1.msra.mxu0 %v41
    %3486 = vmatprep.subr.mxu0 0.0
    %3487 = vmatpush1.msra.mxu0 %v42
    %3488 = vmatprep.subr.mxu0 0.0
    %3489 = vmatpush1.msra.mxu0 %v43
    %3490 = vmatprep.subr.mxu0 0.0
    %3491 = vmatpush1.msra.mxu0 %v44
    %3492 = vmatprep.subr.mxu0 0.0
    %3493 = vmatpush1.msra.mxu0 %v45
    %3494 = vmatprep.subr.mxu0 0.0
    %3495 = vmatpush1.msra.mxu0 %v46
    %3496 = vmatprep.subr.mxu0 0.0
    %3497 = vmatpush1.msra.mxu0 %v47
    %3498 = vmatprep.subr.mxu0 0.0
    %3499 = vmatpush1.msra.mxu0 %v48
    %3500 = vmatprep.subr.mxu0 0.0
    %3501 = vmatpush1.msra.mxu0 %v49
    %3502 = vmatprep.subr.mxu0 0.0
    %3503 = vmatpush1.msra.mxu0 %v50
    %3504 = vmatprep.subr.mxu0 0.0
    %3505 = vmatpush1.msra.mxu0 %v51
    %3506 = vmatprep.subr.mxu0 0.0
    %3507 = vmatpush1.msra.mxu0 %v52
    %3508 = vmatprep.subr.mxu0 0.0
    %3509 = vmatpush1.msra.mxu0 %v53
    %3510 = vmatprep.subr.mxu0 0.0
    %3511 = vmatpush1.msra.mxu0 %v54
    %3512 = vmatprep.subr.mxu0 0.0
    %3513 = vmatpush1.msra.mxu0 %v55
    %3514 = vmatprep.subr.mxu0 0.0
    %3515 = vmatpush1.msra.mxu0 %v56
    %3516 = vmatprep.subr.mxu0 0.0
    %3517 = vmatpush1.msra.mxu0 0.0
    %3518 = vmatprep.subr.mxu0 0.0
    %3519 = vmatpush1.msra.mxu0 0.0
    %3520 = vmatprep.subr.mxu0 0.0
    %3521 = vmatpush1.msra.mxu0 0.0
    %3522 = vmatprep.subr.mxu0 0.0
    %3523 = vmatpush1.msra.mxu0 0.0
    %3524 = vmatprep.subr.mxu0 0.0
    %3525 = vmatpush1.msra.mxu0 0.0
    %3526 = vmatprep.subr.mxu0 0.0
    %3527 = vmatpush1.msra.mxu0 0.0
    %3528 = vmatprep.subr.mxu0 0.0
    %3529 = vmatpush1.msra.mxu0 0.0
    %3530 = vmatprep.subr.mxu0 0.0
    %3531 = vmatpush1.msra.mxu0 0.0
    %3532 = vmatprep.subr.mxu0 0.0
    %3533 = vmatpush1.msra.mxu0 0.0
    %3534 = vmatprep.subr.mxu0 0.0
    %3535 = vmatpush1.msra.mxu0 0.0
    %3536 = vmatprep.subr.mxu0 0.0
    %3537 = vmatpush1.msra.mxu0 0.0
    %3538 = vmatprep.subr.mxu0 0.0
    %3539 = vmatpush1.msra.mxu0 0.0
    %3540 = vmatprep.subr.mxu0 0.0
    %3541 = vmatpush1.msra.mxu0 0.0
    %3542 = vmatprep.subr.mxu0 0.0
    %3543 = vmatpush1.msra.mxu0 0.0
    %3544 = vmatprep.subr.mxu0 0.0
    %3545 = vmatpush1.msra.mxu0 0.0
    %3546 = vmatprep.subr.mxu0 0.0
    %3547 = vmatpush1.msra.mxu0 0.0
    %3548 = vmatprep.mubr.f32.mxu0 0.0
    %3549 = vmatmul.mubr.f32.gmra.mrb[0].mxu0 %v3483
    %v3550 = vpop.f32.mrb[0].mxu0
    %v3551 = vadd.f32 %v62, %v3550
    %v3552 = vpop.f32.mrb[0].mxu0
    %3553 = vdwg.mxu0
    %v3554 = vtanh.pop %v3551
    %v3555 = vmul.f32 %v3480, 0.33333334
    %v3556 = vsub.f32 %v3554, %v3555
    %v3557 = vmul.f32 %v3556, 0.06666667
    %v3558 = vadd.f32 %v3407, %v3557
    %3559 = vmatprep.subr.mxu0 0.0
    %3560 = vmatpush1.msra.mxu0 %v41
    %3561 = vmatprep.subr.mxu0 0.0
    %3562 = vmatpush1.msra.mxu0 %v42
    %3563 = vmatprep.subr.mxu0 0.0
    %3564 = vmatpush1.msra.mxu0 %v43
    %3565 = vmatprep.subr.mxu0 0.0
    %3566 = vmatpush1.msra.mxu0 %v44
    %3567 = vmatprep.subr.mxu0 0.0
    %3568 = vmatpush1.msra.mxu0 %v45
    %3569 = vmatprep.subr.mxu0 0.0
    %3570 = vmatpush1.msra.mxu0 %v46
    %3571 = vmatprep.subr.mxu0 0.0
    %3572 = vmatpush1.msra.mxu0 %v47
    %3573 = vmatprep.subr.mxu0 0.0
    %3574 = vmatpush1.msra.mxu0 %v48
    %3575 = vmatprep.subr.mxu0 0.0
    %3576 = vmatpush1.msra.mxu0 %v49
    %3577 = vmatprep.subr.mxu0 0.0
    %3578 = vmatpush1.msra.mxu0 %v50
    %3579 = vmatprep.subr.mxu0 0.0
    %3580 = vmatpush1.msra.mxu0 %v51
    %3581 = vmatprep.subr.mxu0 0.0
    %3582 = vmatpush1.msra.mxu0 %v52
    %3583 = vmatprep.subr.mxu0 0.0
    %3584 = vmatpush1.msra.mxu0 %v53
    %3585 = vmatprep.subr.mxu0 0.0
    %3586 = vmatpush1.msra.mxu0 %v54
    %3587 = vmatprep.subr.mxu0 0.0
    %3588 = vmatpush1.msra.mxu0 %v55
    %3589 = vmatprep.subr.mxu0 0.0
    %3590 = vmatpush1.msra.mxu0 %v56
    %3591 = vmatprep.subr.mxu0 0.0
    %3592 = vmatpush1.msra.mxu0 0.0
    %3593 = vmatprep.subr.mxu0 0.0
    %3594 = vmatpush1.msra.mxu0 0.0
    %3595 = vmatprep.subr.mxu0 0.0
    %3596 = vmatpush1.msra.mxu0 0.0
    %3597 = vmatprep.subr.mxu0 0.0
    %3598 = vmatpush1.msra.mxu0 0.0
    %3599 = vmatprep.subr.mxu0 0.0
    %3600 = vmatpush1.msra.mxu0 0.0
    %3601 = vmatprep.subr.mxu0 0.0
    %3602 = vmatpush1.msra.mxu0 0.0
    %3603 = vmatprep.subr.mxu0 0.0
    %3604 = vmatpush1.msra.mxu0 0.0
    %3605 = vmatprep.subr.mxu0 0.0
    %3606 = vmatpush1.msra.mxu0 0.0
    %3607 = vmatprep.subr.mxu0 0.0
    %3608 = vmatpush1.msra.mxu0 0.0
    %3609 = vmatprep.subr.mxu0 0.0
    %3610 = vmatpush1.msra.mxu0 0.0
    %3611 = vmatprep.subr.mxu0 0.0
    %3612 = vmatpush1.msra.mxu0 0.0
    %3613 = vmatprep.subr.mxu0 0.0
    %3614 = vmatpush1.msra.mxu0 0.0
    %3615 = vmatprep.subr.mxu0 0.0
    %3616 = vmatpush1.msra.mxu0 0.0
    %3617 = vmatprep.subr.mxu0 0.0
    %3618 = vmatpush1.msra.mxu0 0.0
    %3619 = vmatprep.subr.mxu0 0.0
    %3620 = vmatpush1.msra.mxu0 0.0
    %3621 = vmatprep.subr.mxu0 0.0
    %3622 = vmatpush1.msra.mxu0 0.0
    %3623 = vmatprep.mubr.f32.mxu0 0.0
    %3624 = vmatmul.mubr.f32.gmra.mrb[0].mxu0 %v3558
    %v3625 = vpop.f32.mrb[0].mxu0
    %v3626 = vadd.f32 %v62, %v3625
    %v3627 = vpop.f32.mrb[0].mxu0
    %3628 = vdwg.mxu0
    %v3629 = vtanh.pop %v3626
    %v3630 = vsub.f32 %v3480, %v3554
    %v3631 = vadd.f32 %v3630, %v3629
    %v3632 = vmul.f32 %v3631, 0.06666667
    %v3633 = vadd.f32 %v3407, %v3632
    %3634 = vmatprep.subr.mxu0 0.0
    %3635 = vmatpush1.msra.mxu0 %v41
    %3636 = vmatprep.subr.mxu0 0.0
    %3637 = vmatpush1.msra.mxu0 %v42
    %3638 = vmatprep.subr.mxu0 0.0
    %3639 = vmatpush1.msra.mxu0 %v43
    %3640 = vmatprep.subr.mxu0 0.0
    %3641 = vmatpush1.msra.mxu0 %v44
    %3642 = vmatprep.subr.mxu0 0.0
    %3643 = vmatpush1.msra.mxu0 %v45
    %3644 = vmatprep.subr.mxu0 0.0
    %3645 = vmatpush1.msra.mxu0 %v46
    %3646 = vmatprep.subr.mxu0 0.0
    %3647 = vmatpush1.msra.mxu0 %v47
    %3648 = vmatprep.subr.mxu0 0.0
    %3649 = vmatpush1.msra.mxu0 %v48
    %3650 = vmatprep.subr.mxu0 0.0
    %3651 = vmatpush1.msra.mxu0 %v49
    %3652 = vmatprep.subr.mxu0 0.0
    %3653 = vmatpush1.msra.mxu0 %v50
    %3654 = vmatprep.subr.mxu0 0.0
    %3655 = vmatpush1.msra.mxu0 %v51
    %3656 = vmatprep.subr.mxu0 0.0
    %3657 = vmatpush1.msra.mxu0 %v52
    %3658 = vmatprep.subr.mxu0 0.0
    %3659 = vmatpush1.msra.mxu0 %v53
    %3660 = vmatprep.subr.mxu0 0.0
    %3661 = vmatpush1.msra.mxu0 %v54
    %3662 = vmatprep.subr.mxu0 0.0
    %3663 = vmatpush1.msra.mxu0 %v55
    %3664 = vmatprep.subr.mxu0 0.0
    %3665 = vmatpush1.msra.mxu0 %v56
    %3666 = vmatprep.subr.mxu0 0.0
    %3667 = vmatpush1.msra.mxu0 0.0
    %3668 = vmatprep.subr.mxu0 0.0
    %3669 = vmatpush1.msra.mxu0 0.0
    %3670 = vmatprep.subr.mxu0 0.0
    %3671 = vmatpush1.msra.mxu0 0.0
    %3672 = vmatprep.subr.mxu0 0.0
    %3673 = vmatpush1.msra.mxu0 0.0
    %3674 = vmatprep.subr.mxu0 0.0
    %3675 = vmatpush1.msra.mxu0 0.0
    %3676 = vmatprep.subr.mxu0 0.0
    %3677 = vmatpush1.msra.mxu0 0.0
    %3678 = vmatprep.subr.mxu0 0.0
    %3679 = vmatpush1.msra.mxu0 0.0
    %3680 = vmatprep.subr.mxu0 0.0
    %3681 = vmatpush1.msra.mxu0 0.0
    %3682 = vmatprep.subr.mxu0 0.0
    %3683 = vmatpush1.msra.mxu0 0.0
    %3684 = vmatprep.subr.mxu0 0.0
    %3685 = vmatpush1.msra.mxu0 0.0
    %3686 = vmatprep.subr.mxu0 0.0
    %3687 = vmatpush1.msra.mxu0 0.0
    %3688 = vmatprep.subr.mxu0 0.0
    %3689 = vmatpush1.msra.mxu0 0.0
    %3690 = vmatprep.subr.mxu0 0.0
    %3691 = vmatpush1.msra.mxu0 0.0
    %3692 = vmatprep.subr.mxu0 0.0
    %3693 = vmatpush1.msra.mxu0 0.0
    %3694 = vmatprep.subr.mxu0 0.0
    %3695 = vmatpush1.msra.mxu0 0.0
    %3696 = vmatprep.subr.mxu0 0.0
    %3697 = vmatpush1.msra.mxu0 0.0
    %3698 = vmatprep.mubr.f32.mxu0 0.0
    %3699 = vmatmul.mubr.f32.gmra.mrb[0].mxu0 %v3633
    %v3700 = vpop.f32.mrb[0].mxu0
    %v3701 = vadd.f32 %v62, %v3700
    %v3702 = vpop.f32.mrb[0].mxu0
    %3703 = vdwg.mxu0
    %v3704 = vtanh.pop %v3701
    %v3705 = vadd.f32 %v3554, %v3629
    %v3706 = vmul.f32 %v3705, 3.0
    %v3707 = vadd.f32 %v3480, %v3706
    %v3708 = vadd.f32 %v3707, %v3704
    %v3709 = vmul.f32 %v3708, 0.06666667
    %v3710 = vmul.f32 %v3709, 0.125
    %v3711 = vadd.f32 %v3407, %v3710
    %s3712 = scalar_lea.vmem [#allocation7], 96
    %3713 = vst [vmem:[%s3712] sm:$0xff] %v3711
    %3714 = vmatprep.subr.mxu0 0.0
    %3715 = vmatpush1.msra.mxu0 %v41
    %3716 = vmatprep.subr.mxu0 0.0
    %3717 = vmatpush1.msra.mxu0 %v42
    %3718 = vmatprep.subr.mxu0 0.0
    %3719 = vmatpush1.msra.mxu0 %v43
    %3720 = vmatprep.subr.mxu0 0.0
    %3721 = vmatpush1.msra.mxu0 %v44
    %3722 = vmatprep.subr.mxu0 0.0
    %3723 = vmatpush1.msra.mxu0 %v45
    %3724 = vmatprep.subr.mxu0 0.0
    %3725 = vmatpush1.msra.mxu0 %v46
    %3726 = vmatprep.subr.mxu0 0.0
    %3727 = vmatpush1.msra.mxu0 %v47
    %3728 = vmatprep.subr.mxu0 0.0
    %3729 = vmatpush1.msra.mxu0 %v48
    %3730 = vmatprep.subr.mxu0 0.0
    %3731 = vmatpush1.msra.mxu0 %v49
    %3732 = vmatprep.subr.mxu0 0.0
    %3733 = vmatpush1.msra.mxu0 %v50
    %3734 = vmatprep.subr.mxu0 0.0
    %3735 = vmatpush1.msra.mxu0 %v51
    %3736 = vmatprep.subr.mxu0 0.0
    %3737 = vmatpush1.msra.mxu0 %v52
    %3738 = vmatprep.subr.mxu0 0.0
    %3739 = vmatpush1.msra.mxu0 %v53
    %3740 = vmatprep.subr.mxu0 0.0
    %3741 = vmatpush1.msra.mxu0 %v54
    %3742 = vmatprep.subr.mxu0 0.0
    %3743 = vmatpush1.msra.mxu0 %v55
    %3744 = vmatprep.subr.mxu0 0.0
    %3745 = vmatpush1.msra.mxu0 %v56
    %3746 = vmatprep.subr.mxu0 0.0
    %3747 = vmatpush1.msra.mxu0 0.0
    %3748 = vmatprep.subr.mxu0 0.0
    %3749 = vmatpush1.msra.mxu0 0.0
    %3750 = vmatprep.subr.mxu0 0.0
    %3751 = vmatpush1.msra.mxu0 0.0
    %3752 = vmatprep.subr.mxu0 0.0
    %3753 = vmatpush1.msra.mxu0 0.0
    %3754 = vmatprep.subr.mxu0 0.0
    %3755 = vmatpush1.msra.mxu0 0.0
    %3756 = vmatprep.subr.mxu0 0.0
    %3757 = vmatpush1.msra.mxu0 0.0
    %3758 = vmatprep.subr.mxu0 0.0
    %3759 = vmatpush1.msra.mxu0 0.0
    %3760 = vmatprep.subr.mxu0 0.0
    %3761 = vmatpush1.msra.mxu0 0.0
    %3762 = vmatprep.subr.mxu0 0.0
    %3763 = vmatpush1.msra.mxu0 0.0
    %3764 = vmatprep.subr.mxu0 0.0
    %3765 = vmatpush1.msra.mxu0 0.0
    %3766 = vmatprep.subr.mxu0 0.0
    %3767 = vmatpush1.msra.mxu0 0.0
    %3768 = vmatprep.subr.mxu0 0.0
    %3769 = vmatpush1.msra.mxu0 0.0
    %3770 = vmatprep.subr.mxu0 0.0
    %3771 = vmatpush1.msra.mxu0 0.0
    %3772 = vmatprep.subr.mxu0 0.0
    %3773 = vmatpush1.msra.mxu0 0.0
    %3774 = vmatprep.subr.mxu0 0.0
    %3775 = vmatpush1.msra.mxu0 0.0
    %3776 = vmatprep.subr.mxu0 0.0
    %3777 = vmatpush1.msra.mxu0 0.0
    %3778 = vmatprep.mubr.f32.mxu0 0.0
    %3779 = vmatmul.mubr.f32.gmra.mrb[0].mxu0 %v3711
    %v3780 = vpop.f32.mrb[0].mxu0
    %v3781 = vadd.f32 %v62, %v3780
    %v3782 = vpop.f32.mrb[0].mxu0
    %3783 = vdwg.mxu0
    %v3784 = vtanh.pop %v3781
    %v3785 = vmul.f32 %v3784, 0.06666667
    %v3786 = vmul.f32 %v3785, 0.33333334
    %v3787 = vadd.f32 %v3711, %v3786
    %3788 = vmatprep.subr.mxu0 0.0
    %3789 = vmatpush1.msra.mxu0 %v41
    %3790 = vmatprep.subr.mxu0 0.0
    %3791 = vmatpush1.msra.mxu0 %v42
    %3792 = vmatprep.subr.mxu0 0.0
    %3793 = vmatpush1.msra.mxu0 %v43
    %3794 = vmatprep.subr.mxu0 0.0
    %3795 = vmatpush1.msra.mxu0 %v44
    %3796 = vmatprep.subr.mxu0 0.0
    %3797 = vmatpush1.msra.mxu0 %v45
    %3798 = vmatprep.subr.mxu0 0.0
    %3799 = vmatpush1.msra.mxu0 %v46
    %3800 = vmatprep.subr.mxu0 0.0
    %3801 = vmatpush1.msra.mxu0 %v47
    %3802 = vmatprep.subr.mxu0 0.0
    %3803 = vmatpush1.msra.mxu0 %v48
    %3804 = vmatprep.subr.mxu0 0.0
    %3805 = vmatpush1.msra.mxu0 %v49
    %3806 = vmatprep.subr.mxu0 0.0
    %3807 = vmatpush1.msra.mxu0 %v50
    %3808 = vmatprep.subr.mxu0 0.0
    %3809 = vmatpush1.msra.mxu0 %v51
    %3810 = vmatprep.subr.mxu0 0.0
    %3811 = vmatpush1.msra.mxu0 %v52
    %3812 = vmatprep.subr.mxu0 0.0
    %3813 = vmatpush1.msra.mxu0 %v53
    %3814 = vmatprep.subr.mxu0 0.0
    %3815 = vmatpush1.msra.mxu0 %v54
    %3816 = vmatprep.subr.mxu0 0.0
    %3817 = vmatpush1.msra.mxu0 %v55
    %3818 = vmatprep.subr.mxu0 0.0
    %3819 = vmatpush1.msra.mxu0 %v56
    %3820 = vmatprep.subr.mxu0 0.0
    %3821 = vmatpush1.msra.mxu0 0.0
    %3822 = vmatprep.subr.mxu0 0.0
    %3823 = vmatpush1.msra.mxu0 0.0
    %3824 = vmatprep.subr.mxu0 0.0
    %3825 = vmatpush1.msra.mxu0 0.0
    %3826 = vmatprep.subr.mxu0 0.0
    %3827 = vmatpush1.msra.mxu0 0.0
    %3828 = vmatprep.subr.mxu0 0.0
    %3829 = vmatpush1.msra.mxu0 0.0
    %3830 = vmatprep.subr.mxu0 0.0
    %3831 = vmatpush1.msra.mxu0 0.0
    %3832 = vmatprep.subr.mxu0 0.0
    %3833 = vmatpush1.msra.mxu0 0.0
    %3834 = vmatprep.subr.mxu0 0.0
    %3835 = vmatpush1.msra.mxu0 0.0
    %3836 = vmatprep.subr.mxu0 0.0
    %3837 = vmatpush1.msra.mxu0 0.0
    %3838 = vmatprep.subr.mxu0 0.0
    %3839 = vmatpush1.msra.mxu0 0.0
    %3840 = vmatprep.subr.mxu0 0.0
    %3841 = vmatpush1.msra.mxu0 0.0
    %3842 = vmatprep.subr.mxu0 0.0
    %3843 = vmatpush1.msra.mxu0 0.0
    %3844 = vmatprep.subr.mxu0 0.0
    %3845 = vmatpush1.msra.mxu0 0.0
    %3846 = vmatprep.subr.mxu0 0.0
    %3847 = vmatpush1.msra.mxu0 0.0
    %3848 = vmatprep.subr.mxu0 0.0
    %3849 = vmatpush1.msra.mxu0 0.0
    %3850 = vmatprep.subr.mxu0 0.0
    %3851 = vmatpush1.msra.mxu0 0.0
    %3852 = vmatprep.mubr.f32.mxu0 0.0
    %3853 = vmatmul.mubr.f32.gmra.mrb[0].mxu0 %v3787
    %v3854 = vpop.f32.mrb[0].mxu0
    %v3855 = vadd.f32 %v62, %v3854
    %v3856 = vpop.f32.mrb[0].mxu0
    %3857 = vdwg.mxu0
    %v3858 = vtanh.pop %v3855
    %v3859 = vmul.f32 %v3784, 0.33333334
    %v3860 = vsub.f32 %v3858, %v3859
    %v3861 = vmul.f32 %v3860, 0.06666667
    %v3862 = vadd.f32 %v3711, %v3861
    %3863 = vmatprep.subr.mxu0 0.0
    %3864 = vmatpush1.msra.mxu0 %v41
    %3865 = vmatprep.subr.mxu0 0.0
    %3866 = vmatpush1.msra.mxu0 %v42
    %3867 = vmatprep.subr.mxu0 0.0
    %3868 = vmatpush1.msra.mxu0 %v43
    %3869 = vmatprep.subr.mxu0 0.0
    %3870 = vmatpush1.msra.mxu0 %v44
    %3871 = vmatprep.subr.mxu0 0.0
    %3872 = vmatpush1.msra.mxu0 %v45
    %3873 = vmatprep.subr.mxu0 0.0
    %3874 = vmatpush1.msra.mxu0 %v46
    %3875 = vmatprep.subr.mxu0 0.0
    %3876 = vmatpush1.msra.mxu0 %v47
    %3877 = vmatprep.subr.mxu0 0.0
    %3878 = vmatpush1.msra.mxu0 %v48
    %3879 = vmatprep.subr.mxu0 0.0
    %3880 = vmatpush1.msra.mxu0 %v49
    %3881 = vmatprep.subr.mxu0 0.0
    %3882 = vmatpush1.msra.mxu0 %v50
    %3883 = vmatprep.subr.mxu0 0.0
    %3884 = vmatpush1.msra.mxu0 %v51
    %3885 = vmatprep.subr.mxu0 0.0
    %3886 = vmatpush1.msra.mxu0 %v52
    %3887 = vmatprep.subr.mxu0 0.0
    %3888 = vmatpush1.msra.mxu0 %v53
    %3889 = vmatprep.subr.mxu0 0.0
    %3890 = vmatpush1.msra.mxu0 %v54
    %3891 = vmatprep.subr.mxu0 0.0
    %3892 = vmatpush1.msra.mxu0 %v55
    %3893 = vmatprep.subr.mxu0 0.0
    %3894 = vmatpush1.msra.mxu0 %v56
    %3895 = vmatprep.subr.mxu0 0.0
    %3896 = vmatpush1.msra.mxu0 0.0
    %3897 = vmatprep.subr.mxu0 0.0
    %3898 = vmatpush1.msra.mxu0 0.0
    %3899 = vmatprep.subr.mxu0 0.0
    %3900 = vmatpush1.msra.mxu0 0.0
    %3901 = vmatprep.subr.mxu0 0.0
    %3902 = vmatpush1.msra.mxu0 0.0
    %3903 = vmatprep.subr.mxu0 0.0
    %3904 = vmatpush1.msra.mxu0 0.0
    %3905 = vmatprep.subr.mxu0 0.0
    %3906 = vmatpush1.msra.mxu0 0.0
    %3907 = vmatprep.subr.mxu0 0.0
    %3908 = vmatpush1.msra.mxu0 0.0
    %3909 = vmatprep.subr.mxu0 0.0
    %3910 = vmatpush1.msra.mxu0 0.0
    %3911 = vmatprep.subr.mxu0 0.0
    %3912 = vmatpush1.msra.mxu0 0.0
    %3913 = vmatprep.subr.mxu0 0.0
    %3914 = vmatpush1.msra.mxu0 0.0
    %3915 = vmatprep.subr.mxu0 0.0
    %3916 = vmatpush1.msra.mxu0 0.0
    %3917 = vmatprep.subr.mxu0 0.0
    %3918 = vmatpush1.msra.mxu0 0.0
    %3919 = vmatprep.subr.mxu0 0.0
    %3920 = vmatpush1.msra.mxu0 0.0
    %3921 = vmatprep.subr.mxu0 0.0
    %3922 = vmatpush1.msra.mxu0 0.0
    %3923 = vmatprep.subr.mxu0 0.0
    %3924 = vmatpush1.msra.mxu0 0.0
    %3925 = vmatprep.subr.mxu0 0.0
    %3926 = vmatpush1.msra.mxu0 0.0
    %3927 = vmatprep.mubr.f32.mxu0 0.0
    %3928 = vmatmul.mubr.f32.gmra.mrb[0].mxu0 %v3862
    %v3929 = vpop.f32.mrb[0].mxu0
    %v3930 = vadd.f32 %v62, %v3929
    %v3931 = vpop.f32.mrb[0].mxu0
    %3932 = vdwg.mxu0
    %v3933 = vtanh.pop %v3930
    %v3934 = vsub.f32 %v3784, %v3858
    %v3935 = vadd.f32 %v3934, %v3933
    %v3936 = vmul.f32 %v3935, 0.06666667
    %v3937 = vadd.f32 %v3711, %v3936
    %3938 = vmatprep.subr.mxu0 0.0
    %3939 = vmatpush1.msra.mxu0 %v41
    %3940 = vmatprep.subr.mxu0 0.0
    %3941 = vmatpush1.msra.mxu0 %v42
    %3942 = vmatprep.subr.mxu0 0.0
    %3943 = vmatpush1.msra.mxu0 %v43
    %3944 = vmatprep.subr.mxu0 0.0
    %3945 = vmatpush1.msra.mxu0 %v44
    %3946 = vmatprep.subr.mxu0 0.0
    %3947 = vmatpush1.msra.mxu0 %v45
    %3948 = vmatprep.subr.mxu0 0.0
    %3949 = vmatpush1.msra.mxu0 %v46
    %3950 = vmatprep.subr.mxu0 0.0
    %3951 = vmatpush1.msra.mxu0 %v47
    %3952 = vmatprep.subr.mxu0 0.0
    %3953 = vmatpush1.msra.mxu0 %v48
    %3954 = vmatprep.subr.mxu0 0.0
    %3955 = vmatpush1.msra.mxu0 %v49
    %3956 = vmatprep.subr.mxu0 0.0
    %3957 = vmatpush1.msra.mxu0 %v50
    %3958 = vmatprep.subr.mxu0 0.0
    %3959 = vmatpush1.msra.mxu0 %v51
    %3960 = vmatprep.subr.mxu0 0.0
    %3961 = vmatpush1.msra.mxu0 %v52
    %3962 = vmatprep.subr.mxu0 0.0
    %3963 = vmatpush1.msra.mxu0 %v53
    %3964 = vmatprep.subr.mxu0 0.0
    %3965 = vmatpush1.msra.mxu0 %v54
    %3966 = vmatprep.subr.mxu0 0.0
    %3967 = vmatpush1.msra.mxu0 %v55
    %3968 = vmatprep.subr.mxu0 0.0
    %3969 = vmatpush1.msra.mxu0 %v56
    %3970 = vmatprep.subr.mxu0 0.0
    %3971 = vmatpush1.msra.mxu0 0.0
    %3972 = vmatprep.subr.mxu0 0.0
    %3973 = vmatpush1.msra.mxu0 0.0
    %3974 = vmatprep.subr.mxu0 0.0
    %3975 = vmatpush1.msra.mxu0 0.0
    %3976 = vmatprep.subr.mxu0 0.0
    %3977 = vmatpush1.msra.mxu0 0.0
    %3978 = vmatprep.subr.mxu0 0.0
    %3979 = vmatpush1.msra.mxu0 0.0
    %3980 = vmatprep.subr.mxu0 0.0
    %3981 = vmatpush1.msra.mxu0 0.0
    %3982 = vmatprep.subr.mxu0 0.0
    %3983 = vmatpush1.msra.mxu0 0.0
    %3984 = vmatprep.subr.mxu0 0.0
    %3985 = vmatpush1.msra.mxu0 0.0
    %3986 = vmatprep.subr.mxu0 0.0
    %3987 = vmatpush1.msra.mxu0 0.0
    %3988 = vmatprep.subr.mxu0 0.0
    %3989 = vmatpush1.msra.mxu0 0.0
    %3990 = vmatprep.subr.mxu0 0.0
    %3991 = vmatpush1.msra.mxu0 0.0
    %3992 = vmatprep.subr.mxu0 0.0
    %3993 = vmatpush1.msra.mxu0 0.0
    %3994 = vmatprep.subr.mxu0 0.0
    %3995 = vmatpush1.msra.mxu0 0.0
    %3996 = vmatprep.subr.mxu0 0.0
    %3997 = vmatpush1.msra.mxu0 0.0
    %3998 = vmatprep.subr.mxu0 0.0
    %3999 = vmatpush1.msra.mxu0 0.0
    %4000 = vmatprep.subr.mxu0 0.0
    %4001 = vmatpush1.msra.mxu0 0.0
    %4002 = vmatprep.mubr.f32.mxu0 0.0
    %4003 = vmatmul.mubr.f32.gmra.mrb[0].mxu0 %v3937
    %v4004 = vpop.f32.mrb[0].mxu0
    %v4005 = vadd.f32 %v62, %v4004
    %v4006 = vpop.f32.mrb[0].mxu0
    %4007 = vdwg.mxu0
    %v4008 = vtanh.pop %v4005
    %v4009 = vadd.f32 %v3858, %v3933
    %v4010 = vmul.f32 %v4009, 3.0
    %v4011 = vadd.f32 %v3784, %v4010
    %v4012 = vadd.f32 %v4011, %v4008
    %v4013 = vmul.f32 %v4012, 0.06666667
    %v4014 = vmul.f32 %v4013, 0.125
    %v4015 = vadd.f32 %v3711, %v4014
    %s4016 = scalar_lea.vmem [#allocation7], 104
    %4017 = vst [vmem:[%s4016] sm:$0xff] %v4015
    %4018 = vmatprep.subr.mxu0 0.0
    %4019 = vmatpush1.msra.mxu0 %v41
    %4020 = vmatprep.subr.mxu0 0.0
    %4021 = vmatpush1.msra.mxu0 %v42
    %4022 = vmatprep.subr.mxu0 0.0
    %4023 = vmatpush1.msra.mxu0 %v43
    %4024 = vmatprep.subr.mxu0 0.0
    %4025 = vmatpush1.msra.mxu0 %v44
    %4026 = vmatprep.subr.mxu0 0.0
    %4027 = vmatpush1.msra.mxu0 %v45
    %4028 = vmatprep.subr.mxu0 0.0
    %4029 = vmatpush1.msra.mxu0 %v46
    %4030 = vmatprep.subr.mxu0 0.0
    %4031 = vmatpush1.msra.mxu0 %v47
    %4032 = vmatprep.subr.mxu0 0.0
    %4033 = vmatpush1.msra.mxu0 %v48
    %4034 = vmatprep.subr.mxu0 0.0
    %4035 = vmatpush1.msra.mxu0 %v49
    %4036 = vmatprep.subr.mxu0 0.0
    %4037 = vmatpush1.msra.mxu0 %v50
    %4038 = vmatprep.subr.mxu0 0.0
    %4039 = vmatpush1.msra.mxu0 %v51
    %4040 = vmatprep.subr.mxu0 0.0
    %4041 = vmatpush1.msra.mxu0 %v52
    %4042 = vmatprep.subr.mxu0 0.0
    %4043 = vmatpush1.msra.mxu0 %v53
    %4044 = vmatprep.subr.mxu0 0.0
    %4045 = vmatpush1.msra.mxu0 %v54
    %4046 = vmatprep.subr.mxu0 0.0
    %4047 = vmatpush1.msra.mxu0 %v55
    %4048 = vmatprep.subr.mxu0 0.0
    %4049 = vmatpush1.msra.mxu0 %v56
    %4050 = vmatprep.subr.mxu0 0.0
    %4051 = vmatpush1.msra.mxu0 0.0
    %4052 = vmatprep.subr.mxu0 0.0
    %4053 = vmatpush1.msra.mxu0 0.0
    %4054 = vmatprep.subr.mxu0 0.0
    %4055 = vmatpush1.msra.mxu0 0.0
    %4056 = vmatprep.subr.mxu0 0.0
    %4057 = vmatpush1.msra.mxu0 0.0
    %4058 = vmatprep.subr.mxu0 0.0
    %4059 = vmatpush1.msra.mxu0 0.0
    %4060 = vmatprep.subr.mxu0 0.0
    %4061 = vmatpush1.msra.mxu0 0.0
    %4062 = vmatprep.subr.mxu0 0.0
    %4063 = vmatpush1.msra.mxu0 0.0
    %4064 = vmatprep.subr.mxu0 0.0
    %4065 = vmatpush1.msra.mxu0 0.0
    %4066 = vmatprep.subr.mxu0 0.0
    %4067 = vmatpush1.msra.mxu0 0.0
    %4068 = vmatprep.subr.mxu0 0.0
    %4069 = vmatpush1.msra.mxu0 0.0
    %4070 = vmatprep.subr.mxu0 0.0
    %4071 = vmatpush1.msra.mxu0 0.0
    %4072 = vmatprep.subr.mxu0 0.0
    %4073 = vmatpush1.msra.mxu0 0.0
    %4074 = vmatprep.subr.mxu0 0.0
    %4075 = vmatpush1.msra.mxu0 0.0
    %4076 = vmatprep.subr.mxu0 0.0
    %4077 = vmatpush1.msra.mxu0 0.0
    %4078 = vmatprep.subr.mxu0 0.0
    %4079 = vmatpush1.msra.mxu0 0.0
    %4080 = vmatprep.subr.mxu0 0.0
    %4081 = vmatpush1.msra.mxu0 0.0
    %4082 = vmatprep.mubr.f32.mxu0 0.0
    %4083 = vmatmul.mubr.f32.gmra.mrb[0].mxu0 %v4015
    %v4084 = vpop.f32.mrb[0].mxu0
    %v4085 = vadd.f32 %v62, %v4084
    %v4086 = vpop.f32.mrb[0].mxu0
    %4087 = vdwg.mxu0
    %v4088 = vtanh.pop %v4085
    %v4089 = vmul.f32 %v4088, 0.06666667
    %v4090 = vmul.f32 %v4089, 0.33333334
    %v4091 = vadd.f32 %v4015, %v4090
    %4092 = vmatprep.subr.mxu0 0.0
    %4093 = vmatpush1.msra.mxu0 %v41
    %4094 = vmatprep.subr.mxu0 0.0
    %4095 = vmatpush1.msra.mxu0 %v42
    %4096 = vmatprep.subr.mxu0 0.0
    %4097 = vmatpush1.msra.mxu0 %v43
    %4098 = vmatprep.subr.mxu0 0.0
    %4099 = vmatpush1.msra.mxu0 %v44
    %4100 = vmatprep.subr.mxu0 0.0
    %4101 = vmatpush1.msra.mxu0 %v45
    %4102 = vmatprep.subr.mxu0 0.0
    %4103 = vmatpush1.msra.mxu0 %v46
    %4104 = vmatprep.subr.mxu0 0.0
    %4105 = vmatpush1.msra.mxu0 %v47
    %4106 = vmatprep.subr.mxu0 0.0
    %4107 = vmatpush1.msra.mxu0 %v48
    %4108 = vmatprep.subr.mxu0 0.0
    %4109 = vmatpush1.msra.mxu0 %v49
    %4110 = vmatprep.subr.mxu0 0.0
    %4111 = vmatpush1.msra.mxu0 %v50
    %4112 = vmatprep.subr.mxu0 0.0
    %4113 = vmatpush1.msra.mxu0 %v51
    %4114 = vmatprep.subr.mxu0 0.0
    %4115 = vmatpush1.msra.mxu0 %v52
    %4116 = vmatprep.subr.mxu0 0.0
    %4117 = vmatpush1.msra.mxu0 %v53
    %4118 = vmatprep.subr.mxu0 0.0
    %4119 = vmatpush1.msra.mxu0 %v54
    %4120 = vmatprep.subr.mxu0 0.0
    %4121 = vmatpush1.msra.mxu0 %v55
    %4122 = vmatprep.subr.mxu0 0.0
    %4123 = vmatpush1.msra.mxu0 %v56
    %4124 = vmatprep.subr.mxu0 0.0
    %4125 = vmatpush1.msra.mxu0 0.0
    %4126 = vmatprep.subr.mxu0 0.0
    %4127 = vmatpush1.msra.mxu0 0.0
    %4128 = vmatprep.subr.mxu0 0.0
    %4129 = vmatpush1.msra.mxu0 0.0
    %4130 = vmatprep.subr.mxu0 0.0
    %4131 = vmatpush1.msra.mxu0 0.0
    %4132 = vmatprep.subr.mxu0 0.0
    %4133 = vmatpush1.msra.mxu0 0.0
    %4134 = vmatprep.subr.mxu0 0.0
    %4135 = vmatpush1.msra.mxu0 0.0
    %4136 = vmatprep.subr.mxu0 0.0
    %4137 = vmatpush1.msra.mxu0 0.0
    %4138 = vmatprep.subr.mxu0 0.0
    %4139 = vmatpush1.msra.mxu0 0.0
    %4140 = vmatprep.subr.mxu0 0.0
    %4141 = vmatpush1.msra.mxu0 0.0
    %4142 = vmatprep.subr.mxu0 0.0
    %4143 = vmatpush1.msra.mxu0 0.0
    %4144 = vmatprep.subr.mxu0 0.0
    %4145 = vmatpush1.msra.mxu0 0.0
    %4146 = vmatprep.subr.mxu0 0.0
    %4147 = vmatpush1.msra.mxu0 0.0
    %4148 = vmatprep.subr.mxu0 0.0
    %4149 = vmatpush1.msra.mxu0 0.0
    %4150 = vmatprep.subr.mxu0 0.0
    %4151 = vmatpush1.msra.mxu0 0.0
    %4152 = vmatprep.subr.mxu0 0.0
    %4153 = vmatpush1.msra.mxu0 0.0
    %4154 = vmatprep.subr.mxu0 0.0
    %4155 = vmatpush1.msra.mxu0 0.0
    %4156 = vmatprep.mubr.f32.mxu0 0.0
    %4157 = vmatmul.mubr.f32.gmra.mrb[0].mxu0 %v4091
    %v4158 = vpop.f32.mrb[0].mxu0
    %v4159 = vadd.f32 %v62, %v4158
    %v4160 = vpop.f32.mrb[0].mxu0
    %4161 = vdwg.mxu0
    %v4162 = vtanh.pop %v4159
    %v4163 = vmul.f32 %v4088, 0.33333334
    %v4164 = vsub.f32 %v4162, %v4163
    %v4165 = vmul.f32 %v4164, 0.06666667
    %v4166 = vadd.f32 %v4015, %v4165
    %4167 = vmatprep.subr.mxu0 0.0
    %4168 = vmatpush1.msra.mxu0 %v41
    %4169 = vmatprep.subr.mxu0 0.0
    %4170 = vmatpush1.msra.mxu0 %v42
    %4171 = vmatprep.subr.mxu0 0.0
    %4172 = vmatpush1.msra.mxu0 %v43
    %4173 = vmatprep.subr.mxu0 0.0
    %4174 = vmatpush1.msra.mxu0 %v44
    %4175 = vmatprep.subr.mxu0 0.0
    %4176 = vmatpush1.msra.mxu0 %v45
    %4177 = vmatprep.subr.mxu0 0.0
    %4178 = vmatpush1.msra.mxu0 %v46
    %4179 = vmatprep.subr.mxu0 0.0
    %4180 = vmatpush1.msra.mxu0 %v47
    %4181 = vmatprep.subr.mxu0 0.0
    %4182 = vmatpush1.msra.mxu0 %v48
    %4183 = vmatprep.subr.mxu0 0.0
    %4184 = vmatpush1.msra.mxu0 %v49
    %4185 = vmatprep.subr.mxu0 0.0
    %4186 = vmatpush1.msra.mxu0 %v50
    %4187 = vmatprep.subr.mxu0 0.0
    %4188 = vmatpush1.msra.mxu0 %v51
    %4189 = vmatprep.subr.mxu0 0.0
    %4190 = vmatpush1.msra.mxu0 %v52
    %4191 = vmatprep.subr.mxu0 0.0
    %4192 = vmatpush1.msra.mxu0 %v53
    %4193 = vmatprep.subr.mxu0 0.0
    %4194 = vmatpush1.msra.mxu0 %v54
    %4195 = vmatprep.subr.mxu0 0.0
    %4196 = vmatpush1.msra.mxu0 %v55
    %4197 = vmatprep.subr.mxu0 0.0
    %4198 = vmatpush1.msra.mxu0 %v56
    %4199 = vmatprep.subr.mxu0 0.0
    %4200 = vmatpush1.msra.mxu0 0.0
    %4201 = vmatprep.subr.mxu0 0.0
    %4202 = vmatpush1.msra.mxu0 0.0
    %4203 = vmatprep.subr.mxu0 0.0
    %4204 = vmatpush1.msra.mxu0 0.0
    %4205 = vmatprep.subr.mxu0 0.0
    %4206 = vmatpush1.msra.mxu0 0.0
    %4207 = vmatprep.subr.mxu0 0.0
    %4208 = vmatpush1.msra.mxu0 0.0
    %4209 = vmatprep.subr.mxu0 0.0
    %4210 = vmatpush1.msra.mxu0 0.0
    %4211 = vmatprep.subr.mxu0 0.0
    %4212 = vmatpush1.msra.mxu0 0.0
    %4213 = vmatprep.subr.mxu0 0.0
    %4214 = vmatpush1.msra.mxu0 0.0
    %4215 = vmatprep.subr.mxu0 0.0
    %4216 = vmatpush1.msra.mxu0 0.0
    %4217 = vmatprep.subr.mxu0 0.0
    %4218 = vmatpush1.msra.mxu0 0.0
    %4219 = vmatprep.subr.mxu0 0.0
    %4220 = vmatpush1.msra.mxu0 0.0
    %4221 = vmatprep.subr.mxu0 0.0
    %4222 = vmatpush1.msra.mxu0 0.0
    %4223 = vmatprep.subr.mxu0 0.0
    %4224 = vmatpush1.msra.mxu0 0.0
    %4225 = vmatprep.subr.mxu0 0.0
    %4226 = vmatpush1.msra.mxu0 0.0
    %4227 = vmatprep.subr.mxu0 0.0
    %4228 = vmatpush1.msra.mxu0 0.0
    %4229 = vmatprep.subr.mxu0 0.0
    %4230 = vmatpush1.msra.mxu0 0.0
    %4231 = vmatprep.mubr.f32.mxu0 0.0
    %4232 = vmatmul.mubr.f32.gmra.mrb[0].mxu0 %v4166
    %v4233 = vpop.f32.mrb[0].mxu0
    %v4234 = vadd.f32 %v62, %v4233
    %v4235 = vpop.f32.mrb[0].mxu0
    %4236 = vdwg.mxu0
    %v4237 = vtanh.pop %v4234
    %v4238 = vsub.f32 %v4088, %v4162
    %v4239 = vadd.f32 %v4238, %v4237
    %v4240 = vmul.f32 %v4239, 0.06666667
    %v4241 = vadd.f32 %v4015, %v4240
    %4242 = vmatprep.subr.mxu0 0.0
    %4243 = vmatpush1.msra.mxu0 %v41
    %4244 = vmatprep.subr.mxu0 0.0
    %4245 = vmatpush1.msra.mxu0 %v42
    %4246 = vmatprep.subr.mxu0 0.0
    %4247 = vmatpush1.msra.mxu0 %v43
    %4248 = vmatprep.subr.mxu0 0.0
    %4249 = vmatpush1.msra.mxu0 %v44
    %4250 = vmatprep.subr.mxu0 0.0
    %4251 = vmatpush1.msra.mxu0 %v45
    %4252 = vmatprep.subr.mxu0 0.0
    %4253 = vmatpush1.msra.mxu0 %v46
    %4254 = vmatprep.subr.mxu0 0.0
    %4255 = vmatpush1.msra.mxu0 %v47
    %4256 = vmatprep.subr.mxu0 0.0
    %4257 = vmatpush1.msra.mxu0 %v48
    %4258 = vmatprep.subr.mxu0 0.0
    %4259 = vmatpush1.msra.mxu0 %v49
    %4260 = vmatprep.subr.mxu0 0.0
    %4261 = vmatpush1.msra.mxu0 %v50
    %4262 = vmatprep.subr.mxu0 0.0
    %4263 = vmatpush1.msra.mxu0 %v51
    %4264 = vmatprep.subr.mxu0 0.0
    %4265 = vmatpush1.msra.mxu0 %v52
    %4266 = vmatprep.subr.mxu0 0.0
    %4267 = vmatpush1.msra.mxu0 %v53
    %4268 = vmatprep.subr.mxu0 0.0
    %4269 = vmatpush1.msra.mxu0 %v54
    %4270 = vmatprep.subr.mxu0 0.0
    %4271 = vmatpush1.msra.mxu0 %v55
    %4272 = vmatprep.subr.mxu0 0.0
    %4273 = vmatpush1.msra.mxu0 %v56
    %4274 = vmatprep.subr.mxu0 0.0
    %4275 = vmatpush1.msra.mxu0 0.0
    %4276 = vmatprep.subr.mxu0 0.0
    %4277 = vmatpush1.msra.mxu0 0.0
    %4278 = vmatprep.subr.mxu0 0.0
    %4279 = vmatpush1.msra.mxu0 0.0
    %4280 = vmatprep.subr.mxu0 0.0
    %4281 = vmatpush1.msra.mxu0 0.0
    %4282 = vmatprep.subr.mxu0 0.0
    %4283 = vmatpush1.msra.mxu0 0.0
    %4284 = vmatprep.subr.mxu0 0.0
    %4285 = vmatpush1.msra.mxu0 0.0
    %4286 = vmatprep.subr.mxu0 0.0
    %4287 = vmatpush1.msra.mxu0 0.0
    %4288 = vmatprep.subr.mxu0 0.0
    %4289 = vmatpush1.msra.mxu0 0.0
    %4290 = vmatprep.subr.mxu0 0.0
    %4291 = vmatpush1.msra.mxu0 0.0
    %4292 = vmatprep.subr.mxu0 0.0
    %4293 = vmatpush1.msra.mxu0 0.0
    %4294 = vmatprep.subr.mxu0 0.0
    %4295 = vmatpush1.msra.mxu0 0.0
    %4296 = vmatprep.subr.mxu0 0.0
    %4297 = vmatpush1.msra.mxu0 0.0
    %4298 = vmatprep.subr.mxu0 0.0
    %4299 = vmatpush1.msra.mxu0 0.0
    %4300 = vmatprep.subr.mxu0 0.0
    %4301 = vmatpush1.msra.mxu0 0.0
    %4302 = vmatprep.subr.mxu0 0.0
    %4303 = vmatpush1.msra.mxu0 0.0
    %4304 = vmatprep.subr.mxu0 0.0
    %4305 = vmatpush1.msra.mxu0 0.0
    %4306 = vmatprep.mubr.f32.mxu0 0.0
    %4307 = vmatmul.mubr.f32.gmra.mrb[0].mxu0 %v4241
    %v4308 = vpop.f32.mrb[0].mxu0
    %v4309 = vadd.f32 %v62, %v4308
    %v4310 = vpop.f32.mrb[0].mxu0
    %4311 = vdwg.mxu0
    %v4312 = vtanh.pop %v4309
    %v4313 = vadd.f32 %v4162, %v4237
    %v4314 = vmul.f32 %v4313, 3.0
    %v4315 = vadd.f32 %v4088, %v4314
    %v4316 = vadd.f32 %v4315, %v4312
    %v4317 = vmul.f32 %v4316, 0.06666667
    %v4318 = vmul.f32 %v4317, 0.125
    %v4319 = vadd.f32 %v4015, %v4318
    %s4320 = scalar_lea.vmem [#allocation7], 112
    %4321 = vst [vmem:[%s4320] sm:$0xff] %v4319
    %4322 = vmatprep.subr.mxu0 0.0
    %4323 = vmatpush1.msra.mxu0 %v41
    %4324 = vmatprep.subr.mxu0 0.0
    %4325 = vmatpush1.msra.mxu0 %v42
    %4326 = vmatprep.subr.mxu0 0.0
    %4327 = vmatpush1.msra.mxu0 %v43
    %4328 = vmatprep.subr.mxu0 0.0
    %4329 = vmatpush1.msra.mxu0 %v44
    %4330 = vmatprep.subr.mxu0 0.0
    %4331 = vmatpush1.msra.mxu0 %v45
    %4332 = vmatprep.subr.mxu0 0.0
    %4333 = vmatpush1.msra.mxu0 %v46
    %4334 = vmatprep.subr.mxu0 0.0
    %4335 = vmatpush1.msra.mxu0 %v47
    %4336 = vmatprep.subr.mxu0 0.0
    %4337 = vmatpush1.msra.mxu0 %v48
    %4338 = vmatprep.subr.mxu0 0.0
    %4339 = vmatpush1.msra.mxu0 %v49
    %4340 = vmatprep.subr.mxu0 0.0
    %4341 = vmatpush1.msra.mxu0 %v50
    %4342 = vmatprep.subr.mxu0 0.0
    %4343 = vmatpush1.msra.mxu0 %v51
    %4344 = vmatprep.subr.mxu0 0.0
    %4345 = vmatpush1.msra.mxu0 %v52
    %4346 = vmatprep.subr.mxu0 0.0
    %4347 = vmatpush1.msra.mxu0 %v53
    %4348 = vmatprep.subr.mxu0 0.0
    %4349 = vmatpush1.msra.mxu0 %v54
    %4350 = vmatprep.subr.mxu0 0.0
    %4351 = vmatpush1.msra.mxu0 %v55
    %4352 = vmatprep.subr.mxu0 0.0
    %4353 = vmatpush1.msra.mxu0 %v56
    %4354 = vmatprep.subr.mxu0 0.0
    %4355 = vmatpush1.msra.mxu0 0.0
    %4356 = vmatprep.subr.mxu0 0.0
    %4357 = vmatpush1.msra.mxu0 0.0
    %4358 = vmatprep.subr.mxu0 0.0
    %4359 = vmatpush1.msra.mxu0 0.0
    %4360 = vmatprep.subr.mxu0 0.0
    %4361 = vmatpush1.msra.mxu0 0.0
    %4362 = vmatprep.subr.mxu0 0.0
    %4363 = vmatpush1.msra.mxu0 0.0
    %4364 = vmatprep.subr.mxu0 0.0
    %4365 = vmatpush1.msra.mxu0 0.0
    %4366 = vmatprep.subr.mxu0 0.0
    %4367 = vmatpush1.msra.mxu0 0.0
    %4368 = vmatprep.subr.mxu0 0.0
    %4369 = vmatpush1.msra.mxu0 0.0
    %4370 = vmatprep.subr.mxu0 0.0
    %4371 = vmatpush1.msra.mxu0 0.0
    %4372 = vmatprep.subr.mxu0 0.0
    %4373 = vmatpush1.msra.mxu0 0.0
    %4374 = vmatprep.subr.mxu0 0.0
    %4375 = vmatpush1.msra.mxu0 0.0
    %4376 = vmatprep.subr.mxu0 0.0
    %4377 = vmatpush1.msra.mxu0 0.0
    %4378 = vmatprep.subr.mxu0 0.0
    %4379 = vmatpush1.msra.mxu0 0.0
    %4380 = vmatprep.subr.mxu0 0.0
    %4381 = vmatpush1.msra.mxu0 0.0
    %4382 = vmatprep.subr.mxu0 0.0
    %4383 = vmatpush1.msra.mxu0 0.0
    %4384 = vmatprep.subr.mxu0 0.0
    %4385 = vmatpush1.msra.mxu0 0.0
    %4386 = vmatprep.mubr.f32.mxu0 0.0
    %4387 = vmatmul.mubr.f32.gmra.mrb[0].mxu0 %v4319
    %v4388 = vpop.f32.mrb[0].mxu0
    %v4389 = vadd.f32 %v62, %v4388
    %v4390 = vpop.f32.mrb[0].mxu0
    %4391 = vdwg.mxu0
    %v4392 = vtanh.pop %v4389
    %v4393 = vmul.f32 %v4392, 0.06666667
    %v4394 = vmul.f32 %v4393, 0.33333334
    %v4395 = vadd.f32 %v4319, %v4394
    %4396 = vmatprep.subr.mxu0 0.0
    %4397 = vmatpush1.msra.mxu0 %v41
    %4398 = vmatprep.subr.mxu0 0.0
    %4399 = vmatpush1.msra.mxu0 %v42
    %4400 = vmatprep.subr.mxu0 0.0
    %4401 = vmatpush1.msra.mxu0 %v43
    %4402 = vmatprep.subr.mxu0 0.0
    %4403 = vmatpush1.msra.mxu0 %v44
    %4404 = vmatprep.subr.mxu0 0.0
    %4405 = vmatpush1.msra.mxu0 %v45
    %4406 = vmatprep.subr.mxu0 0.0
    %4407 = vmatpush1.msra.mxu0 %v46
    %4408 = vmatprep.subr.mxu0 0.0
    %4409 = vmatpush1.msra.mxu0 %v47
    %4410 = vmatprep.subr.mxu0 0.0
    %4411 = vmatpush1.msra.mxu0 %v48
    %4412 = vmatprep.subr.mxu0 0.0
    %4413 = vmatpush1.msra.mxu0 %v49
    %4414 = vmatprep.subr.mxu0 0.0
    %4415 = vmatpush1.msra.mxu0 %v50
    %4416 = vmatprep.subr.mxu0 0.0
    %4417 = vmatpush1.msra.mxu0 %v51
    %4418 = vmatprep.subr.mxu0 0.0
    %4419 = vmatpush1.msra.mxu0 %v52
    %4420 = vmatprep.subr.mxu0 0.0
    %4421 = vmatpush1.msra.mxu0 %v53
    %4422 = vmatprep.subr.mxu0 0.0
    %4423 = vmatpush1.msra.mxu0 %v54
    %4424 = vmatprep.subr.mxu0 0.0
    %4425 = vmatpush1.msra.mxu0 %v55
    %4426 = vmatprep.subr.mxu0 0.0
    %4427 = vmatpush1.msra.mxu0 %v56
    %4428 = vmatprep.subr.mxu0 0.0
    %4429 = vmatpush1.msra.mxu0 0.0
    %4430 = vmatprep.subr.mxu0 0.0
    %4431 = vmatpush1.msra.mxu0 0.0
    %4432 = vmatprep.subr.mxu0 0.0
    %4433 = vmatpush1.msra.mxu0 0.0
    %4434 = vmatprep.subr.mxu0 0.0
    %4435 = vmatpush1.msra.mxu0 0.0
    %4436 = vmatprep.subr.mxu0 0.0
    %4437 = vmatpush1.msra.mxu0 0.0
    %4438 = vmatprep.subr.mxu0 0.0
    %4439 = vmatpush1.msra.mxu0 0.0
    %4440 = vmatprep.subr.mxu0 0.0
    %4441 = vmatpush1.msra.mxu0 0.0
    %4442 = vmatprep.subr.mxu0 0.0
    %4443 = vmatpush1.msra.mxu0 0.0
    %4444 = vmatprep.subr.mxu0 0.0
    %4445 = vmatpush1.msra.mxu0 0.0
    %4446 = vmatprep.subr.mxu0 0.0
    %4447 = vmatpush1.msra.mxu0 0.0
    %4448 = vmatprep.subr.mxu0 0.0
    %4449 = vmatpush1.msra.mxu0 0.0
    %4450 = vmatprep.subr.mxu0 0.0
    %4451 = vmatpush1.msra.mxu0 0.0
    %4452 = vmatprep.subr.mxu0 0.0
    %4453 = vmatpush1.msra.mxu0 0.0
    %4454 = vmatprep.subr.mxu0 0.0
    %4455 = vmatpush1.msra.mxu0 0.0
    %4456 = vmatprep.subr.mxu0 0.0
    %4457 = vmatpush1.msra.mxu0 0.0
    %4458 = vmatprep.subr.mxu0 0.0
    %4459 = vmatpush1.msra.mxu0 0.0
    %4460 = vmatprep.mubr.f32.mxu0 0.0
    %4461 = vmatmul.mubr.f32.gmra.mrb[0].mxu0 %v4395
    %v4462 = vpop.f32.mrb[0].mxu0
    %v4463 = vadd.f32 %v62, %v4462
    %v4464 = vpop.f32.mrb[0].mxu0
    %4465 = vdwg.mxu0
    %v4466 = vtanh.pop %v4463
    %v4467 = vmul.f32 %v4392, 0.33333334
    %v4468 = vsub.f32 %v4466, %v4467
    %v4469 = vmul.f32 %v4468, 0.06666667
    %v4470 = vadd.f32 %v4319, %v4469
    %4471 = vmatprep.subr.mxu0 0.0
    %4472 = vmatpush1.msra.mxu0 %v41
    %4473 = vmatprep.subr.mxu0 0.0
    %4474 = vmatpush1.msra.mxu0 %v42
    %4475 = vmatprep.subr.mxu0 0.0
    %4476 = vmatpush1.msra.mxu0 %v43
    %4477 = vmatprep.subr.mxu0 0.0
    %4478 = vmatpush1.msra.mxu0 %v44
    %4479 = vmatprep.subr.mxu0 0.0
    %4480 = vmatpush1.msra.mxu0 %v45
    %4481 = vmatprep.subr.mxu0 0.0
    %4482 = vmatpush1.msra.mxu0 %v46
    %4483 = vmatprep.subr.mxu0 0.0
    %4484 = vmatpush1.msra.mxu0 %v47
    %4485 = vmatprep.subr.mxu0 0.0
    %4486 = vmatpush1.msra.mxu0 %v48
    %4487 = vmatprep.subr.mxu0 0.0
    %4488 = vmatpush1.msra.mxu0 %v49
    %4489 = vmatprep.subr.mxu0 0.0
    %4490 = vmatpush1.msra.mxu0 %v50
    %4491 = vmatprep.subr.mxu0 0.0
    %4492 = vmatpush1.msra.mxu0 %v51
    %4493 = vmatprep.subr.mxu0 0.0
    %4494 = vmatpush1.msra.mxu0 %v52
    %4495 = vmatprep.subr.mxu0 0.0
    %4496 = vmatpush1.msra.mxu0 %v53
    %4497 = vmatprep.subr.mxu0 0.0
    %4498 = vmatpush1.msra.mxu0 %v54
    %4499 = vmatprep.subr.mxu0 0.0
    %4500 = vmatpush1.msra.mxu0 %v55
    %4501 = vmatprep.subr.mxu0 0.0
    %4502 = vmatpush1.msra.mxu0 %v56
    %4503 = vmatprep.subr.mxu0 0.0
    %4504 = vmatpush1.msra.mxu0 0.0
    %4505 = vmatprep.subr.mxu0 0.0
    %4506 = vmatpush1.msra.mxu0 0.0
    %4507 = vmatprep.subr.mxu0 0.0
    %4508 = vmatpush1.msra.mxu0 0.0
    %4509 = vmatprep.subr.mxu0 0.0
    %4510 = vmatpush1.msra.mxu0 0.0
    %4511 = vmatprep.subr.mxu0 0.0
    %4512 = vmatpush1.msra.mxu0 0.0
    %4513 = vmatprep.subr.mxu0 0.0
    %4514 = vmatpush1.msra.mxu0 0.0
    %4515 = vmatprep.subr.mxu0 0.0
    %4516 = vmatpush1.msra.mxu0 0.0
    %4517 = vmatprep.subr.mxu0 0.0
    %4518 = vmatpush1.msra.mxu0 0.0
    %4519 = vmatprep.subr.mxu0 0.0
    %4520 = vmatpush1.msra.mxu0 0.0
    %4521 = vmatprep.subr.mxu0 0.0
    %4522 = vmatpush1.msra.mxu0 0.0
    %4523 = vmatprep.subr.mxu0 0.0
    %4524 = vmatpush1.msra.mxu0 0.0
    %4525 = vmatprep.subr.mxu0 0.0
    %4526 = vmatpush1.msra.mxu0 0.0
    %4527 = vmatprep.subr.mxu0 0.0
    %4528 = vmatpush1.msra.mxu0 0.0
    %4529 = vmatprep.subr.mxu0 0.0
    %4530 = vmatpush1.msra.mxu0 0.0
    %4531 = vmatprep.subr.mxu0 0.0
    %4532 = vmatpush1.msra.mxu0 0.0
    %4533 = vmatprep.subr.mxu0 0.0
    %4534 = vmatpush1.msra.mxu0 0.0
    %4535 = vmatprep.mubr.f32.mxu0 0.0
    %4536 = vmatmul.mubr.f32.gmra.mrb[0].mxu0 %v4470
    %v4537 = vpop.f32.mrb[0].mxu0
    %v4538 = vadd.f32 %v62, %v4537
    %v4539 = vpop.f32.mrb[0].mxu0
    %4540 = vdwg.mxu0
    %v4541 = vtanh.pop %v4538
    %v4542 = vsub.f32 %v4392, %v4466
    %v4543 = vadd.f32 %v4542, %v4541
    %v4544 = vmul.f32 %v4543, 0.06666667
    %v4545 = vadd.f32 %v4319, %v4544
    %4546 = vmatprep.subr.mxu0 0.0
    %4547 = vmatpush1.msra.mxu0 %v41
    %4548 = vmatprep.subr.mxu0 0.0
    %4549 = vmatpush1.msra.mxu0 %v42
    %4550 = vmatprep.subr.mxu0 0.0
    %4551 = vmatpush1.msra.mxu0 %v43
    %4552 = vmatprep.subr.mxu0 0.0
    %4553 = vmatpush1.msra.mxu0 %v44
    %4554 = vmatprep.subr.mxu0 0.0
    %4555 = vmatpush1.msra.mxu0 %v45
    %4556 = vmatprep.subr.mxu0 0.0
    %4557 = vmatpush1.msra.mxu0 %v46
    %4558 = vmatprep.subr.mxu0 0.0
    %4559 = vmatpush1.msra.mxu0 %v47
    %4560 = vmatprep.subr.mxu0 0.0
    %4561 = vmatpush1.msra.mxu0 %v48
    %4562 = vmatprep.subr.mxu0 0.0
    %4563 = vmatpush1.msra.mxu0 %v49
    %4564 = vmatprep.subr.mxu0 0.0
    %4565 = vmatpush1.msra.mxu0 %v50
    %4566 = vmatprep.subr.mxu0 0.0
    %4567 = vmatpush1.msra.mxu0 %v51
    %4568 = vmatprep.subr.mxu0 0.0
    %4569 = vmatpush1.msra.mxu0 %v52
    %4570 = vmatprep.subr.mxu0 0.0
    %4571 = vmatpush1.msra.mxu0 %v53
    %4572 = vmatprep.subr.mxu0 0.0
    %4573 = vmatpush1.msra.mxu0 %v54
    %4574 = vmatprep.subr.mxu0 0.0
    %4575 = vmatpush1.msra.mxu0 %v55
    %4576 = vmatprep.subr.mxu0 0.0
    %4577 = vmatpush1.msra.mxu0 %v56
    %4578 = vmatprep.subr.mxu0 0.0
    %4579 = vmatpush1.msra.mxu0 0.0
    %4580 = vmatprep.subr.mxu0 0.0
    %4581 = vmatpush1.msra.mxu0 0.0
    %4582 = vmatprep.subr.mxu0 0.0
    %4583 = vmatpush1.msra.mxu0 0.0
    %4584 = vmatprep.subr.mxu0 0.0
    %4585 = vmatpush1.msra.mxu0 0.0
    %4586 = vmatprep.subr.mxu0 0.0
    %4587 = vmatpush1.msra.mxu0 0.0
    %4588 = vmatprep.subr.mxu0 0.0
    %4589 = vmatpush1.msra.mxu0 0.0
    %4590 = vmatprep.subr.mxu0 0.0
    %4591 = vmatpush1.msra.mxu0 0.0
    %4592 = vmatprep.subr.mxu0 0.0
    %4593 = vmatpush1.msra.mxu0 0.0
    %4594 = vmatprep.subr.mxu0 0.0
    %4595 = vmatpush1.msra.mxu0 0.0
    %4596 = vmatprep.subr.mxu0 0.0
    %4597 = vmatpush1.msra.mxu0 0.0
    %4598 = vmatprep.subr.mxu0 0.0
    %4599 = vmatpush1.msra.mxu0 0.0
    %4600 = vmatprep.subr.mxu0 0.0
    %4601 = vmatpush1.msra.mxu0 0.0
    %4602 = vmatprep.subr.mxu0 0.0
    %4603 = vmatpush1.msra.mxu0 0.0
    %4604 = vmatprep.subr.mxu0 0.0
    %4605 = vmatpush1.msra.mxu0 0.0
    %4606 = vmatprep.subr.mxu0 0.0
    %4607 = vmatpush1.msra.mxu0 0.0
    %4608 = vmatprep.subr.mxu0 0.0
    %4609 = vmatpush1.msra.mxu0 0.0
    %4610 = vmatprep.mubr.f32.mxu0 0.0
    %4611 = vmatmul.mubr.f32.gmra.mrb[0].mxu0 %v4545
    %v4612 = vpop.f32.mrb[0].mxu0
    %v4613 = vadd.f32 %v62, %v4612
    %v4614 = vpop.f32.mrb[0].mxu0
    %4615 = vdwg.mxu0
    %v4616 = vtanh.pop %v4613
    %v4617 = vadd.f32 %v4466, %v4541
    %v4618 = vmul.f32 %v4617, 3.0
    %v4619 = vadd.f32 %v4392, %v4618
    %v4620 = vadd.f32 %v4619, %v4616
    %v4621 = vmul.f32 %v4620, 0.06666667
    %v4622 = vmul.f32 %v4621, 0.125
    %v4623 = vadd.f32 %v4319, %v4622
    %s4624 = scalar_lea.vmem [#allocation7], 120
    %4625 = vst [vmem:[%s4624] sm:$0xff] %v4623
    // Predicated region
    $region22: #{tpu_custom_call.1} parent=1 // pred_check
      _
    $region23: #{tpu_custom_call.1} parent=1 // pred_check_branch
      %4627 = sbr.rel (0) target = $region25
    $region24: #{tpu_custom_call.1} parent=1 // pred_region
      %s4629 = ssub.s32 2048, 2048
      %4630 = vsyncadd [#allocation4], %s4629
      %s4631 = sshll.u32 [#allocation7], 4
      %s4632 = int_to_ptr.vmem [resolvable:$true] %s4631
      %4637 = dma.vmem_to_hbm [thread:$0]  %s4632, 2048, %s3, [#allocation4], 128, 128, 8
    $region25: #{tpu_custom_call.1} parent=1 // pred_fallthru
      _
    // Predicated region
    $region26: #{tpu_custom_call.1} parent=1 // pred_check
      _
    $region27: #{tpu_custom_call.1} parent=1 // pred_check_branch
      %4639 = sbr.rel (0) target = $region29
    $region28: #{tpu_custom_call.1} parent=1 // pred_region
      %4640 = dma.done [#allocation4], 2048
    $region29: #{tpu_custom_call.1} parent=1 // pred_fallthru
      _
    %4641 = vsyncpa [#allocation3], 1
    %4642 = vsyncpa [#allocation6], 1
    %4643 = vsyncpa [#allocation4], 1

</llo_original>
